<compile_context>
chip_gen: v7x
topology: tpu7x:2x2x1
jax: 0.10.0
libtpu: 0.0.40
codegen_flags: <defaults>
</compile_context>

<pallas_src>
import math

import jax
import jax.numpy as jnp
from jax.experimental import pallas as pl
from jax.experimental.pallas import tpu as pltpu


# ----------------------------- fused MegaBlock kernel ------------------------------


def _full_spec(shape):
    # Whole-array (untiled) BlockSpec for parameters; same block for every grid step.
    n = len(shape)
    return pl.BlockSpec(shape, lambda b, _n=n: (0,) * _n)


def _make_megablock_kernel(n_convblocks, kernel_size, T):
    left = (kernel_size - 1) // 2  # "same" padding, odd K

    def depthwise(x, dw_w, dw_b):
        # x: (T, C) f32; dw_w: (K, C) f32; dw_b: (1, C) f32.
        # K-tap depthwise conv with zero "same" padding, implemented as XLU sublane
        # rotations + edge masks (no concatenate / padded scratch).
        t_idx = jax.lax.broadcasted_iota(jnp.int32, x.shape, 0)
        acc = x * dw_w[left:left + 1, :]                      # center tap: no shift
        for k in range(kernel_size):
            if k == left:
                continue
            s = left - k                                      # signed time shift
            shifted = pltpu.roll(x, shift=s % T, axis=0)      # rolled[t] = x[(t - s) mod T]
            lo, hi = max(s, 0), T + min(s, 0)                 # zero wrapped-around rows
            mask = (t_idx >= lo) & (t_idx < hi)
            acc = acc + jnp.where(mask, shifted, 0.0) * dw_w[k:k + 1, :]
        return acc + dw_b

    def pointwise(x, w_bf16, b):
        # 1x1 conv (BatchNorm folded into w, b): bf16 MXU operands, f32 accumulation.
        return jnp.dot(x.astype(jnp.bfloat16), w_bf16,
                       preferred_element_type=jnp.float32) + b

    def kernel(x_ref, *refs):
        o_ref = refs[-1]
        w = [r[...] for r in refs[:-1]]
        idx = 0

        x = x_ref[0].astype(jnp.float32)                      # (T, Cin), VMEM resident

        # ---- sub blocks: ConvBlock1d = depthwise-separable conv + BN(folded) + ReLU
        #      (dropout = identity at inference)
        y = x
        for _ in range(n_convblocks):
            dw_w, dw_b, pw_w, pw_b = w[idx:idx + 4]; idx += 4
            y = depthwise(y, dw_w, dw_b)
            y = jnp.maximum(pointwise(y, pw_w, pw_b), 0.0)

        # ---- last DepthWiseConv1d + BatchNorm1d(eps=1e-3) (folded, no activation)
        dw_w, dw_b, pw_w, pw_b = w[idx:idx + 4]; idx += 4
        y = depthwise(y, dw_w, dw_b)
        y = pointwise(y, pw_w, pw_b)

        # ---- SEModule: global time pooling -> bottleneck MLP -> sigmoid gate -> rescale
        w1, b1, w2, b2 = w[idx:idx + 4]; idx += 4
        pooled = jnp.mean(y, axis=0, keepdims=True)           # (1, C), from VMEM data
        h = jnp.maximum(
            jnp.dot(pooled.astype(jnp.bfloat16), w1,
                    preferred_element_type=jnp.float32) + b1, 0.0)
        gate = jax.nn.sigmoid(
            jnp.dot(h.astype(jnp.bfloat16), w2,
                    preferred_element_type=jnp.float32) + b2)
        y = y * gate

        # ---- skip connection: Conv1d(1x1) + BatchNorm1d(eps=1e-3) (folded)
        sw, sb = w[idx:idx + 2]; idx += 2
        skip = jnp.dot(x.astype(jnp.bfloat16), sw,
                       preferred_element_type=jnp.float32) + sb

        # ---- residual add + ReLU
        # TODO(synk): F.dropout(p=0.5) is identity at inference (training=False); no
        # RNG-dropout path implemented.
        o_ref[0] = jnp.maximum(skip + y, 0.0)

    return kernel


def mega_block(x, params, *, kernel_size):
    """TitaNet MegaBlock forward (inference). x: [B, T, Cin] (torch layout [B, Cin, T])."""
    assert kernel_size % 2 == 1, "even kernel_size changes PyTorch 'same' semantics"
    B, T, cin = x.shape

    flat = []
    for sb in params["sub_blocks"]:
        flat += list(sb)
    flat += list(params["last_ds"])
    flat += list(params["se"])
    flat += list(params["skip"])
    cout = params["skip"][0].shape[1]

    in_specs = [pl.BlockSpec((1, T, cin), lambda b: (b, 0, 0))]
    in_specs += [_full_spec(w.shape) for w in flat]

    return pl.pallas_call(
        _make_megablock_kernel(len(params["sub_blocks"]), kernel_size, T),
        out_shape=jax.ShapeDtypeStruct((B, T, cout), jnp.float32),
        grid=(B,),
        in_specs=in_specs,
        out_specs=pl.BlockSpec((1, T, cout), lambda b: (b, 0, 0)),
        compiler_params=pltpu.CompilerParams(
            dimension_semantics=("parallel",),       # B-axis shards across v7x's 2 TCs
            vmem_limit_bytes=32 * 1024 * 1024,
        ),
    )(x, *flat)


# ------------------------- deterministic parameters (BN folded) -------------------------


def _xavier(key, shape, fan_in, fan_out, dtype=jnp.float32):
    limit = math.sqrt(6.0 / (fan_in + fan_out))
    return jax.random.uniform(key, shape, jnp.float32, -limit, limit).astype(dtype)


def _bn_fold(key, c, eps):
    kg, kb, km, kv = jax.random.split(key, 4)
    gamma = 1.0 + 0.1 * jax.random.normal(kg, (c,), jnp.float32)
    beta = 0.1 * jax.random.normal(kb, (c,), jnp.float32)
    mean = 0.1 * jax.random.normal(km, (c,), jnp.float32)
    var = 1.0 + 0.1 * jnp.abs(jax.random.normal(kv, (c,), jnp.float32))
    scale = gamma / jnp.sqrt(var + eps)
    shift = beta - mean * scale
    return scale, shift


def init_dsconv_bn(key, cin, cout, k, bn_eps):
    """DepthWiseConv1d (depthwise K-tap + pointwise 1x1) with BatchNorm folded into pointwise."""
    k1, k2, k3, k4, k5 = jax.random.split(key, 5)
    dw_w = _xavier(k1, (k, cin), k, k)                         # torch (cin,1,k) -> (k,cin), f32
    dw_b = 0.05 * jax.random.normal(k2, (1, cin), jnp.float32)
    pw_w = _xavier(k3, (cin, cout), cin, cout)                 # torch (cout,cin,1) -> (cin,cout)
    pw_b = 0.05 * jax.random.normal(k4, (1, cout), jnp.float32)
    scale, shift = _bn_fold(k5, cout, bn_eps)
    fw = (pw_w * scale[None, :]).astype(jnp.bfloat16)          # bf16 MXU operand
    fb = pw_b * scale[None, :] + shift[None, :]                # f32 bias
    return dw_w, dw_b, fw, fb


def init_se(key, c, bottleneck):
    k1, k2, k3, k4 = jax.random.split(key, 4)
    w1 = _xavier(k1, (c, bottleneck), c, bottleneck, jnp.bfloat16)
    b1 = 0.05 * jax.random.normal(k2, (1, bottleneck), jnp.float32)
    w2 = _xavier(k3, (bottleneck, c), bottleneck, c, jnp.bfloat16)
    b2 = 0.05 * jax.random.normal(k4, (1, c), jnp.float32)
    return w1, b1, w2, b2


def init_skip(key, cin, cout, bn_eps):
    k1, k2, k3 = jax.random.split(key, 3)
    w = _xavier(k1, (cin, cout), cin, cout)
    b = 0.05 * jax.random.normal(k2, (1, cout), jnp.float32)
    scale, shift = _bn_fold(k3, cout, bn_eps)
    return (w * scale[None, :]).astype(jnp.bfloat16), b * scale[None, :] + shift[None, :]


def init_megablock_params(key, input_size, output_size, kernel_size, n_sub_blocks, se_reduction):
    channels = [input_size] + [output_size] * (n_sub_blocks - 1)
    params = {"sub_blocks": []}
    for cin, cout in zip(channels[:-1], channels[1:]):          # n_sub_blocks-1 ConvBlock1d's
        key, kc = jax.random.split(key)
        params["sub_blocks"].append(init_dsconv_bn(kc, cin, cout, kernel_size, 1e-3))
    key, kl, kse, ksk = jax.random.split(key, 4)
    params["last_ds"] = init_dsconv_bn(kl, channels[-2], channels[-1], kernel_size, 1e-3)
    params["se"] = init_se(kse, output_size, max(input_size // se_reduction, 1))
    params["skip"] = init_skip(ksk, input_size, output_size, 1e-3)
    return params


# ------------------------------ pure-JAX reference (f32) ------------------------------


def mega_block_reference(x, params, *, kernel_size):
    left = (kernel_size - 1) // 2
    right = kernel_size - 1 - left

    def depthwise(y, dw_w, dw_b):
        B, T, C = y.shape
        yp = jnp.pad(y, ((0, 0), (left, right), (0, 0)))
        acc = jnp.zeros_like(y)
        for k in range(kernel_size):
            acc = acc + yp[:, k:k + T, :] * dw_w[None, k:k + 1, :]
        return acc + dw_b[None]

    def pointwise(y, w, b):
        return jnp.einsum("btc,cd->btd", y, w.astype(jnp.float32)) + b[None]

    y = x
    for dw_w, dw_b, pw_w, pw_b in params["sub_blocks"]:
        y = jnp.maximum(pointwise(depthwise(y, dw_w, dw_b), pw_w, pw_b), 0.0)
    dw_w, dw_b, pw_w, pw_b = params["last_ds"]
    y = pointwise(depthwise(y, dw_w, dw_b), pw_w, pw_b)
    w1, b1, w2, b2 = params["se"]
    pooled = jnp.mean(y, axis=1, keepdims=True)
    h = jnp.maximum(jnp.einsum("btc,cd->btd", pooled, w1.astype(jnp.float32)) + b1[None], 0.0)
    gate = jax.nn.sigmoid(jnp.einsum("btd,dc->btc", h, w2.astype(jnp.float32)) + b2[None])
    y = y * gate
    sw, sb = params["skip"]
    skip = jnp.einsum("btc,cd->btd", x, sw.astype(jnp.float32)) + sb[None]
    return jnp.maximum(skip + y, 0.0)


# ------------------------------------ main ------------------------------------

if __name__ == "__main__":
    B, T = 4, 128                    # >=2 parallel grid steps (v7x has 2 TensorCores)
    INPUT_SIZE = OUTPUT_SIZE = 128   # lane-dense channel dim (multiple of 128)
    KERNEL_SIZE = 5
    N_SUB_BLOCKS = 3
    SE_REDUCTION = 8

    key = jax.random.PRNGKey(0)
    k_in, k_params = jax.random.split(key)

    # "prolog outputs" in layout [B, T, H] (torch [B, H, T]); post-ReLU so non-negative
    x = jnp.maximum(jax.random.normal(k_in, (B, T, INPUT_SIZE), jnp.float32), 0.0)

    params = init_megablock_params(
        k_params, INPUT_SIZE, OUTPUT_SIZE, KERNEL_SIZE, N_SUB_BLOCKS, SE_REDUCTION)

    out = jax.block_until_ready(mega_block(x, params, kernel_size=KERNEL_SIZE))

    assert out.shape == (B, T, OUTPUT_SIZE), out.shape
    assert bool(jnp.all(jnp.isfinite(out)))

    # correctness vs f32 reference (only difference: bf16 rounding of MXU operands)
    ref = mega_block_reference(x, params, kernel_size=KERNEL_SIZE)
    max_err = float(jnp.max(jnp.abs(out - ref)))
    assert max_err < 0.2, f"mismatch vs reference: max |diff| = {max_err}"

    print("KERNEL_OK")
</pallas_src>

<mosaic_0001>
module attributes {stable_mosaic.version = 11 : i64} {
  func.func @kernel(%arg0: i32, %arg1: memref<1x128x128xf32, #tpu.memory_space<vmem>>, %arg2: memref<5x128xf32, #tpu.memory_space<vmem>>, %arg3: memref<1x128xf32, #tpu.memory_space<vmem>>, %arg4: memref<128x128xbf16, #tpu.memory_space<vmem>>, %arg5: memref<1x128xf32, #tpu.memory_space<vmem>>, %arg6: memref<5x128xf32, #tpu.memory_space<vmem>>, %arg7: memref<1x128xf32, #tpu.memory_space<vmem>>, %arg8: memref<128x128xbf16, #tpu.memory_space<vmem>>, %arg9: memref<1x128xf32, #tpu.memory_space<vmem>>, %arg10: memref<5x128xf32, #tpu.memory_space<vmem>>, %arg11: memref<1x128xf32, #tpu.memory_space<vmem>>, %arg12: memref<128x128xbf16, #tpu.memory_space<vmem>>, %arg13: memref<1x128xf32, #tpu.memory_space<vmem>>, %arg14: memref<128x16xbf16, #tpu.memory_space<vmem>>, %arg15: memref<1x16xf32, #tpu.memory_space<vmem>>, %arg16: memref<16x128xbf16, #tpu.memory_space<vmem>>, %arg17: memref<1x128xf32, #tpu.memory_space<vmem>>, %arg18: memref<128x128xbf16, #tpu.memory_space<vmem>>, %arg19: memref<1x128xf32, #tpu.memory_space<vmem>>, %arg20: memref<1x128x128xf32, #tpu.memory_space<vmem>>) attributes {dimension_semantics = [#tpu.dimension_semantics<parallel>], iteration_bounds = array<i64: 4>, scalar_prefetch = 0 : i64, scratch_operands = 0 : i64, tpu.core_type = #tpu.core_type<tc>, window_params = [{transform_indices = @transform_0, window_bounds = array<i64: 1, 128, 128>}, {pipeline_mode = #tpu.pipeline_mode<synchronous>, transform_indices = @transform_1, window_bounds = array<i64: 5, 128>}, {pipeline_mode = #tpu.pipeline_mode<synchronous>, transform_indices = @transform_2, window_bounds = array<i64: 1, 128>}, {pipeline_mode = #tpu.pipeline_mode<synchronous>, transform_indices = @transform_3, window_bounds = array<i64: 128, 128>}, {pipeline_mode = #tpu.pipeline_mode<synchronous>, transform_indices = @transform_4, window_bounds = array<i64: 1, 128>}, {pipeline_mode = #tpu.pipeline_mode<synchronous>, transform_indices = @transform_5, window_bounds = array<i64: 5, 128>}, {pipeline_mode = #tpu.pipeline_mode<synchronous>, transform_indices = @transform_6, window_bounds = array<i64: 1, 128>}, {pipeline_mode = #tpu.pipeline_mode<synchronous>, transform_indices = @transform_7, window_bounds = array<i64: 128, 128>}, {pipeline_mode = #tpu.pipeline_mode<synchronous>, transform_indices = @transform_8, window_bounds = array<i64: 1, 128>}, {pipeline_mode = #tpu.pipeline_mode<synchronous>, transform_indices = @transform_9, window_bounds = array<i64: 5, 128>}, {pipeline_mode = #tpu.pipeline_mode<synchronous>, transform_indices = @transform_10, window_bounds = array<i64: 1, 128>}, {pipeline_mode = #tpu.pipeline_mode<synchronous>, transform_indices = @transform_11, window_bounds = array<i64: 128, 128>}, {pipeline_mode = #tpu.pipeline_mode<synchronous>, transform_indices = @transform_12, window_bounds = array<i64: 1, 128>}, {pipeline_mode = #tpu.pipeline_mode<synchronous>, transform_indices = @transform_13, window_bounds = array<i64: 128, 16>}, {pipeline_mode = #tpu.pipeline_mode<synchronous>, transform_indices = @transform_14, window_bounds = array<i64: 1, 16>}, {pipeline_mode = #tpu.pipeline_mode<synchronous>, transform_indices = @transform_15, window_bounds = array<i64: 16, 128>}, {pipeline_mode = #tpu.pipeline_mode<synchronous>, transform_indices = @transform_16, window_bounds = array<i64: 1, 128>}, {pipeline_mode = #tpu.pipeline_mode<synchronous>, transform_indices = @transform_17, window_bounds = array<i64: 128, 128>}, {pipeline_mode = #tpu.pipeline_mode<synchronous>, transform_indices = @transform_18, window_bounds = array<i64: 1, 128>}, {transform_indices = @transform_19, window_bounds = array<i64: 1, 128, 128>}]} {
    %c0 = arith.constant 0 : index
    %c0_0 = arith.constant 0 : index
    %0 = vector.load %arg2[%c0, %c0_0] : memref<5x128xf32, #tpu.memory_space<vmem>>, vector<5x128xf32>
    %c0_1 = arith.constant 0 : index
    %c0_2 = arith.constant 0 : index
    %1 = vector.load %arg3[%c0_1, %c0_2] : memref<1x128xf32, #tpu.memory_space<vmem>>, vector<1x128xf32>
    %c0_3 = arith.constant 0 : index
    %c0_4 = arith.constant 0 : index
    %2 = vector.load %arg4[%c0_3, %c0_4] : memref<128x128xbf16, #tpu.memory_space<vmem>>, vector<128x128xbf16>
    %c0_5 = arith.constant 0 : index
    %c0_6 = arith.constant 0 : index
    %3 = vector.load %arg5[%c0_5, %c0_6] : memref<1x128xf32, #tpu.memory_space<vmem>>, vector<1x128xf32>
    %c0_7 = arith.constant 0 : index
    %c0_8 = arith.constant 0 : index
    %4 = vector.load %arg6[%c0_7, %c0_8] : memref<5x128xf32, #tpu.memory_space<vmem>>, vector<5x128xf32>
    %c0_9 = arith.constant 0 : index
    %c0_10 = arith.constant 0 : index
    %5 = vector.load %arg7[%c0_9, %c0_10] : memref<1x128xf32, #tpu.memory_space<vmem>>, vector<1x128xf32>
    %c0_11 = arith.constant 0 : index
    %c0_12 = arith.constant 0 : index
    %6 = vector.load %arg8[%c0_11, %c0_12] : memref<128x128xbf16, #tpu.memory_space<vmem>>, vector<128x128xbf16>
    %c0_13 = arith.constant 0 : index
    %c0_14 = arith.constant 0 : index
    %7 = vector.load %arg9[%c0_13, %c0_14] : memref<1x128xf32, #tpu.memory_space<vmem>>, vector<1x128xf32>
    %c0_15 = arith.constant 0 : index
    %c0_16 = arith.constant 0 : index
    %8 = vector.load %arg10[%c0_15, %c0_16] : memref<5x128xf32, #tpu.memory_space<vmem>>, vector<5x128xf32>
    %c0_17 = arith.constant 0 : index
    %c0_18 = arith.constant 0 : index
    %9 = vector.load %arg11[%c0_17, %c0_18] : memref<1x128xf32, #tpu.memory_space<vmem>>, vector<1x128xf32>
    %c0_19 = arith.constant 0 : index
    %c0_20 = arith.constant 0 : index
    %10 = vector.load %arg12[%c0_19, %c0_20] : memref<128x128xbf16, #tpu.memory_space<vmem>>, vector<128x128xbf16>
    %c0_21 = arith.constant 0 : index
    %c0_22 = arith.constant 0 : index
    %11 = vector.load %arg13[%c0_21, %c0_22] : memref<1x128xf32, #tpu.memory_space<vmem>>, vector<1x128xf32>
    %c0_23 = arith.constant 0 : index
    %c0_24 = arith.constant 0 : index
    %12 = vector.load %arg14[%c0_23, %c0_24] : memref<128x16xbf16, #tpu.memory_space<vmem>>, vector<128x16xbf16>
    %c0_25 = arith.constant 0 : index
    %c0_26 = arith.constant 0 : index
    %13 = vector.load %arg15[%c0_25, %c0_26] : memref<1x16xf32, #tpu.memory_space<vmem>>, vector<1x16xf32>
    %c0_27 = arith.constant 0 : index
    %c0_28 = arith.constant 0 : index
    %14 = vector.load %arg16[%c0_27, %c0_28] : memref<16x128xbf16, #tpu.memory_space<vmem>>, vector<16x128xbf16>
    %c0_29 = arith.constant 0 : index
    %c0_30 = arith.constant 0 : index
    %15 = vector.load %arg17[%c0_29, %c0_30] : memref<1x128xf32, #tpu.memory_space<vmem>>, vector<1x128xf32>
    %c0_31 = arith.constant 0 : index
    %c0_32 = arith.constant 0 : index
    %16 = vector.load %arg18[%c0_31, %c0_32] : memref<128x128xbf16, #tpu.memory_space<vmem>>, vector<128x128xbf16>
    %c0_33 = arith.constant 0 : index
    %c0_34 = arith.constant 0 : index
    %17 = vector.load %arg19[%c0_33, %c0_34] : memref<1x128xf32, #tpu.memory_space<vmem>>, vector<1x128xf32>
    %c0_35 = arith.constant 0 : index
    %c0_36 = arith.constant 0 : index
    %c0_37 = arith.constant 0 : index
    %18 = vector.load %arg1[%c0_35, %c0_36, %c0_37] : memref<1x128x128xf32, #tpu.memory_space<vmem>>, vector<1x128x128xf32>
    %19 = vector.shape_cast %18 : vector<1x128x128xf32> to vector<128x128xf32>
    %20 = tpu.iota {dimensions = array<i32: 0>} : vector<128x128xi32>
    %21 = vector.extract_strided_slice %0 {offsets = [2, 0], sizes = [1, 128], strides = [1, 1]} : vector<5x128xf32> to vector<1x128xf32>
    %22 = vector.broadcast %21 : vector<1x128xf32> to vector<128x128xf32>
    %23 = arith.mulf %19, %22 : vector<128x128xf32>
    %c2_i32 = arith.constant 2 : i32
    %24 = tpu.dynamic_rotate %19 by %c2_i32 dim 0 : vector<128x128xf32>, i32 -> vector<128x128xf32>
    %c2_i32_38 = arith.constant 2 : i32
    %25 = vector.broadcast %c2_i32_38 : i32 to vector<128x128xi32>
    %26 = arith.cmpi sge, %20, %25 : vector<128x128xi32>
    %c128_i32 = arith.constant 128 : i32
    %27 = vector.broadcast %c128_i32 : i32 to vector<128x128xi32>
    %28 = arith.cmpi slt, %20, %27 : vector<128x128xi32>
    %29 = arith.andi %26, %28 : vector<128x128xi1>
    %cst = arith.constant 0.000000e+00 : f32
    %30 = vector.broadcast %cst : f32 to vector<128x128xf32>
    %31 = arith.select %29, %24, %30 : vector<128x128xi1>, vector<128x128xf32>
    %32 = vector.extract_strided_slice %0 {offsets = [0, 0], sizes = [1, 128], strides = [1, 1]} : vector<5x128xf32> to vector<1x128xf32>
    %33 = vector.broadcast %32 : vector<1x128xf32> to vector<128x128xf32>
    %34 = arith.mulf %31, %33 : vector<128x128xf32>
    %35 = arith.addf %23, %34 : vector<128x128xf32>
    %c1_i32 = arith.constant 1 : i32
    %36 = tpu.dynamic_rotate %19 by %c1_i32 dim 0 : vector<128x128xf32>, i32 -> vector<128x128xf32>
    %c1_i32_39 = arith.constant 1 : i32
    %37 = vector.broadcast %c1_i32_39 : i32 to vector<128x128xi32>
    %38 = arith.cmpi sge, %20, %37 : vector<128x128xi32>
    %c128_i32_40 = arith.constant 128 : i32
    %39 = vector.broadcast %c128_i32_40 : i32 to vector<128x128xi32>
    %40 = arith.cmpi slt, %20, %39 : vector<128x128xi32>
    %41 = arith.andi %38, %40 : vector<128x128xi1>
    %cst_41 = arith.constant 0.000000e+00 : f32
    %42 = vector.broadcast %cst_41 : f32 to vector<128x128xf32>
    %43 = arith.select %41, %36, %42 : vector<128x128xi1>, vector<128x128xf32>
    %44 = vector.extract_strided_slice %0 {offsets = [1, 0], sizes = [1, 128], strides = [1, 1]} : vector<5x128xf32> to vector<1x128xf32>
    %45 = vector.broadcast %44 : vector<1x128xf32> to vector<128x128xf32>
    %46 = arith.mulf %43, %45 : vector<128x128xf32>
    %47 = arith.addf %35, %46 : vector<128x128xf32>
    %c127_i32 = arith.constant 127 : i32
    %48 = tpu.dynamic_rotate %19 by %c127_i32 dim 0 : vector<128x128xf32>, i32 -> vector<128x128xf32>
    %c0_i32 = arith.constant 0 : i32
    %49 = vector.broadcast %c0_i32 : i32 to vector<128x128xi32>
    %50 = arith.cmpi sge, %20, %49 : vector<128x128xi32>
    %c127_i32_42 = arith.constant 127 : i32
    %51 = vector.broadcast %c127_i32_42 : i32 to vector<128x128xi32>
    %52 = arith.cmpi slt, %20, %51 : vector<128x128xi32>
    %53 = arith.andi %50, %52 : vector<128x128xi1>
    %cst_43 = arith.constant 0.000000e+00 : f32
    %54 = vector.broadcast %cst_43 : f32 to vector<128x128xf32>
    %55 = arith.select %53, %48, %54 : vector<128x128xi1>, vector<128x128xf32>
    %56 = vector.extract_strided_slice %0 {offsets = [3, 0], sizes = [1, 128], strides = [1, 1]} : vector<5x128xf32> to vector<1x128xf32>
    %57 = vector.broadcast %56 : vector<1x128xf32> to vector<128x128xf32>
    %58 = arith.mulf %55, %57 : vector<128x128xf32>
    %59 = arith.addf %47, %58 : vector<128x128xf32>
    %c126_i32 = arith.constant 126 : i32
    %60 = tpu.dynamic_rotate %19 by %c126_i32 dim 0 : vector<128x128xf32>, i32 -> vector<128x128xf32>
    %c0_i32_44 = arith.constant 0 : i32
    %61 = vector.broadcast %c0_i32_44 : i32 to vector<128x128xi32>
    %62 = arith.cmpi sge, %20, %61 : vector<128x128xi32>
    %c126_i32_45 = arith.constant 126 : i32
    %63 = vector.broadcast %c126_i32_45 : i32 to vector<128x128xi32>
    %64 = arith.cmpi slt, %20, %63 : vector<128x128xi32>
    %65 = arith.andi %62, %64 : vector<128x128xi1>
    %cst_46 = arith.constant 0.000000e+00 : f32
    %66 = vector.broadcast %cst_46 : f32 to vector<128x128xf32>
    %67 = arith.select %65, %60, %66 : vector<128x128xi1>, vector<128x128xf32>
    %68 = vector.extract_strided_slice %0 {offsets = [4, 0], sizes = [1, 128], strides = [1, 1]} : vector<5x128xf32> to vector<1x128xf32>
    %69 = vector.broadcast %68 : vector<1x128xf32> to vector<128x128xf32>
    %70 = arith.mulf %67, %69 : vector<128x128xf32>
    %71 = arith.addf %59, %70 : vector<128x128xf32>
    %72 = vector.broadcast %1 : vector<1x128xf32> to vector<128x128xf32>
    %73 = arith.addf %71, %72 : vector<128x128xf32>
    %74 = arith.truncf %73 : vector<128x128xf32> to vector<128x128xbf16>
    %cst_47 = arith.constant dense<0.000000e+00> : vector<128x128xf32>
    %75 = tpu.matmul %74, %2, %cst_47 {dimension_numbers = #tpu.dot_dimension_numbers<[1], [0], [0], [1], [0, 0, 1, 1], [], []>} : vector<128x128xbf16>, vector<128x128xbf16>, vector<128x128xf32> -> vector<128x128xf32>
    %76 = vector.broadcast %3 : vector<1x128xf32> to vector<128x128xf32>
    %77 = arith.addf %75, %76 : vector<128x128xf32>
    %cst_48 = arith.constant 0.000000e+00 : f32
    %78 = vector.broadcast %cst_48 : f32 to vector<128x128xf32>
    %79 = arith.maximumf %77, %78 : vector<128x128xf32>
    %80 = tpu.iota {dimensions = array<i32: 0>} : vector<128x128xi32>
    %81 = vector.extract_strided_slice %4 {offsets = [2, 0], sizes = [1, 128], strides = [1, 1]} : vector<5x128xf32> to vector<1x128xf32>
    %82 = vector.broadcast %81 : vector<1x128xf32> to vector<128x128xf32>
    %83 = arith.mulf %79, %82 : vector<128x128xf32>
    %c2_i32_49 = arith.constant 2 : i32
    %84 = tpu.dynamic_rotate %79 by %c2_i32_49 dim 0 : vector<128x128xf32>, i32 -> vector<128x128xf32>
    %c2_i32_50 = arith.constant 2 : i32
    %85 = vector.broadcast %c2_i32_50 : i32 to vector<128x128xi32>
    %86 = arith.cmpi sge, %80, %85 : vector<128x128xi32>
    %c128_i32_51 = arith.constant 128 : i32
    %87 = vector.broadcast %c128_i32_51 : i32 to vector<128x128xi32>
    %88 = arith.cmpi slt, %80, %87 : vector<128x128xi32>
    %89 = arith.andi %86, %88 : vector<128x128xi1>
    %cst_52 = arith.constant 0.000000e+00 : f32
    %90 = vector.broadcast %cst_52 : f32 to vector<128x128xf32>
    %91 = arith.select %89, %84, %90 : vector<128x128xi1>, vector<128x128xf32>
    %92 = vector.extract_strided_slice %4 {offsets = [0, 0], sizes = [1, 128], strides = [1, 1]} : vector<5x128xf32> to vector<1x128xf32>
    %93 = vector.broadcast %92 : vector<1x128xf32> to vector<128x128xf32>
    %94 = arith.mulf %91, %93 : vector<128x128xf32>
    %95 = arith.addf %83, %94 : vector<128x128xf32>
    %c1_i32_53 = arith.constant 1 : i32
    %96 = tpu.dynamic_rotate %79 by %c1_i32_53 dim 0 : vector<128x128xf32>, i32 -> vector<128x128xf32>
    %c1_i32_54 = arith.constant 1 : i32
    %97 = vector.broadcast %c1_i32_54 : i32 to vector<128x128xi32>
    %98 = arith.cmpi sge, %80, %97 : vector<128x128xi32>
    %c128_i32_55 = arith.constant 128 : i32
    %99 = vector.broadcast %c128_i32_55 : i32 to vector<128x128xi32>
    %100 = arith.cmpi slt, %80, %99 : vector<128x128xi32>
    %101 = arith.andi %98, %100 : vector<128x128xi1>
    %cst_56 = arith.constant 0.000000e+00 : f32
    %102 = vector.broadcast %cst_56 : f32 to vector<128x128xf32>
    %103 = arith.select %101, %96, %102 : vector<128x128xi1>, vector<128x128xf32>
    %104 = vector.extract_strided_slice %4 {offsets = [1, 0], sizes = [1, 128], strides = [1, 1]} : vector<5x128xf32> to vector<1x128xf32>
    %105 = vector.broadcast %104 : vector<1x128xf32> to vector<128x128xf32>
    %106 = arith.mulf %103, %105 : vector<128x128xf32>
    %107 = arith.addf %95, %106 : vector<128x128xf32>
    %c127_i32_57 = arith.constant 127 : i32
    %108 = tpu.dynamic_rotate %79 by %c127_i32_57 dim 0 : vector<128x128xf32>, i32 -> vector<128x128xf32>
    %c0_i32_58 = arith.constant 0 : i32
    %109 = vector.broadcast %c0_i32_58 : i32 to vector<128x128xi32>
    %110 = arith.cmpi sge, %80, %109 : vector<128x128xi32>
    %c127_i32_59 = arith.constant 127 : i32
    %111 = vector.broadcast %c127_i32_59 : i32 to vector<128x128xi32>
    %112 = arith.cmpi slt, %80, %111 : vector<128x128xi32>
    %113 = arith.andi %110, %112 : vector<128x128xi1>
    %cst_60 = arith.constant 0.000000e+00 : f32
    %114 = vector.broadcast %cst_60 : f32 to vector<128x128xf32>
    %115 = arith.select %113, %108, %114 : vector<128x128xi1>, vector<128x128xf32>
    %116 = vector.extract_strided_slice %4 {offsets = [3, 0], sizes = [1, 128], strides = [1, 1]} : vector<5x128xf32> to vector<1x128xf32>
    %117 = vector.broadcast %116 : vector<1x128xf32> to vector<128x128xf32>
    %118 = arith.mulf %115, %117 : vector<128x128xf32>
    %119 = arith.addf %107, %118 : vector<128x128xf32>
    %c126_i32_61 = arith.constant 126 : i32
    %120 = tpu.dynamic_rotate %79 by %c126_i32_61 dim 0 : vector<128x128xf32>, i32 -> vector<128x128xf32>
    %c0_i32_62 = arith.constant 0 : i32
    %121 = vector.broadcast %c0_i32_62 : i32 to vector<128x128xi32>
    %122 = arith.cmpi sge, %80, %121 : vector<128x128xi32>
    %c126_i32_63 = arith.constant 126 : i32
    %123 = vector.broadcast %c126_i32_63 : i32 to vector<128x128xi32>
    %124 = arith.cmpi slt, %80, %123 : vector<128x128xi32>
    %125 = arith.andi %122, %124 : vector<128x128xi1>
    %cst_64 = arith.constant 0.000000e+00 : f32
    %126 = vector.broadcast %cst_64 : f32 to vector<128x128xf32>
    %127 = arith.select %125, %120, %126 : vector<128x128xi1>, vector<128x128xf32>
    %128 = vector.extract_strided_slice %4 {offsets = [4, 0], sizes = [1, 128], strides = [1, 1]} : vector<5x128xf32> to vector<1x128xf32>
    %129 = vector.broadcast %128 : vector<1x128xf32> to vector<128x128xf32>
    %130 = arith.mulf %127, %129 : vector<128x128xf32>
    %131 = arith.addf %119, %130 : vector<128x128xf32>
    %132 = vector.broadcast %5 : vector<1x128xf32> to vector<128x128xf32>
    %133 = arith.addf %131, %132 : vector<128x128xf32>
    %134 = arith.truncf %133 : vector<128x128xf32> to vector<128x128xbf16>
    %cst_65 = arith.constant dense<0.000000e+00> : vector<128x128xf32>
    %135 = tpu.matmul %134, %6, %cst_65 {dimension_numbers = #tpu.dot_dimension_numbers<[1], [0], [0], [1], [0, 0, 1, 1], [], []>} : vector<128x128xbf16>, vector<128x128xbf16>, vector<128x128xf32> -> vector<128x128xf32>
    %136 = vector.broadcast %7 : vector<1x128xf32> to vector<128x128xf32>
    %137 = arith.addf %135, %136 : vector<128x128xf32>
    %cst_66 = arith.constant 0.000000e+00 : f32
    %138 = vector.broadcast %cst_66 : f32 to vector<128x128xf32>
    %139 = arith.maximumf %137, %138 : vector<128x128xf32>
    %140 = tpu.iota {dimensions = array<i32: 0>} : vector<128x128xi32>
    %141 = vector.extract_strided_slice %8 {offsets = [2, 0], sizes = [1, 128], strides = [1, 1]} : vector<5x128xf32> to vector<1x128xf32>
    %142 = vector.broadcast %141 : vector<1x128xf32> to vector<128x128xf32>
    %143 = arith.mulf %139, %142 : vector<128x128xf32>
    %c2_i32_67 = arith.constant 2 : i32
    %144 = tpu.dynamic_rotate %139 by %c2_i32_67 dim 0 : vector<128x128xf32>, i32 -> vector<128x128xf32>
    %c2_i32_68 = arith.constant 2 : i32
    %145 = vector.broadcast %c2_i32_68 : i32 to vector<128x128xi32>
    %146 = arith.cmpi sge, %140, %145 : vector<128x128xi32>
    %c128_i32_69 = arith.constant 128 : i32
    %147 = vector.broadcast %c128_i32_69 : i32 to vector<128x128xi32>
    %148 = arith.cmpi slt, %140, %147 : vector<128x128xi32>
    %149 = arith.andi %146, %148 : vector<128x128xi1>
    %cst_70 = arith.constant 0.000000e+00 : f32
    %150 = vector.broadcast %cst_70 : f32 to vector<128x128xf32>
    %151 = arith.select %149, %144, %150 : vector<128x128xi1>, vector<128x128xf32>
    %152 = vector.extract_strided_slice %8 {offsets = [0, 0], sizes = [1, 128], strides = [1, 1]} : vector<5x128xf32> to vector<1x128xf32>
    %153 = vector.broadcast %152 : vector<1x128xf32> to vector<128x128xf32>
    %154 = arith.mulf %151, %153 : vector<128x128xf32>
    %155 = arith.addf %143, %154 : vector<128x128xf32>
    %c1_i32_71 = arith.constant 1 : i32
    %156 = tpu.dynamic_rotate %139 by %c1_i32_71 dim 0 : vector<128x128xf32>, i32 -> vector<128x128xf32>
    %c1_i32_72 = arith.constant 1 : i32
    %157 = vector.broadcast %c1_i32_72 : i32 to vector<128x128xi32>
    %158 = arith.cmpi sge, %140, %157 : vector<128x128xi32>
    %c128_i32_73 = arith.constant 128 : i32
    %159 = vector.broadcast %c128_i32_73 : i32 to vector<128x128xi32>
    %160 = arith.cmpi slt, %140, %159 : vector<128x128xi32>
    %161 = arith.andi %158, %160 : vector<128x128xi1>
    %cst_74 = arith.constant 0.000000e+00 : f32
    %162 = vector.broadcast %cst_74 : f32 to vector<128x128xf32>
    %163 = arith.select %161, %156, %162 : vector<128x128xi1>, vector<128x128xf32>
    %164 = vector.extract_strided_slice %8 {offsets = [1, 0], sizes = [1, 128], strides = [1, 1]} : vector<5x128xf32> to vector<1x128xf32>
    %165 = vector.broadcast %164 : vector<1x128xf32> to vector<128x128xf32>
    %166 = arith.mulf %163, %165 : vector<128x128xf32>
    %167 = arith.addf %155, %166 : vector<128x128xf32>
    %c127_i32_75 = arith.constant 127 : i32
    %168 = tpu.dynamic_rotate %139 by %c127_i32_75 dim 0 : vector<128x128xf32>, i32 -> vector<128x128xf32>
    %c0_i32_76 = arith.constant 0 : i32
    %169 = vector.broadcast %c0_i32_76 : i32 to vector<128x128xi32>
    %170 = arith.cmpi sge, %140, %169 : vector<128x128xi32>
    %c127_i32_77 = arith.constant 127 : i32
    %171 = vector.broadcast %c127_i32_77 : i32 to vector<128x128xi32>
    %172 = arith.cmpi slt, %140, %171 : vector<128x128xi32>
    %173 = arith.andi %170, %172 : vector<128x128xi1>
    %cst_78 = arith.constant 0.000000e+00 : f32
    %174 = vector.broadcast %cst_78 : f32 to vector<128x128xf32>
    %175 = arith.select %173, %168, %174 : vector<128x128xi1>, vector<128x128xf32>
    %176 = vector.extract_strided_slice %8 {offsets = [3, 0], sizes = [1, 128], strides = [1, 1]} : vector<5x128xf32> to vector<1x128xf32>
    %177 = vector.broadcast %176 : vector<1x128xf32> to vector<128x128xf32>
    %178 = arith.mulf %175, %177 : vector<128x128xf32>
    %179 = arith.addf %167, %178 : vector<128x128xf32>
    %c126_i32_79 = arith.constant 126 : i32
    %180 = tpu.dynamic_rotate %139 by %c126_i32_79 dim 0 : vector<128x128xf32>, i32 -> vector<128x128xf32>
    %c0_i32_80 = arith.constant 0 : i32
    %181 = vector.broadcast %c0_i32_80 : i32 to vector<128x128xi32>
    %182 = arith.cmpi sge, %140, %181 : vector<128x128xi32>
    %c126_i32_81 = arith.constant 126 : i32
    %183 = vector.broadcast %c126_i32_81 : i32 to vector<128x128xi32>
    %184 = arith.cmpi slt, %140, %183 : vector<128x128xi32>
    %185 = arith.andi %182, %184 : vector<128x128xi1>
    %cst_82 = arith.constant 0.000000e+00 : f32
    %186 = vector.broadcast %cst_82 : f32 to vector<128x128xf32>
    %187 = arith.select %185, %180, %186 : vector<128x128xi1>, vector<128x128xf32>
    %188 = vector.extract_strided_slice %8 {offsets = [4, 0], sizes = [1, 128], strides = [1, 1]} : vector<5x128xf32> to vector<1x128xf32>
    %189 = vector.broadcast %188 : vector<1x128xf32> to vector<128x128xf32>
    %190 = arith.mulf %187, %189 : vector<128x128xf32>
    %191 = arith.addf %179, %190 : vector<128x128xf32>
    %192 = vector.broadcast %9 : vector<1x128xf32> to vector<128x128xf32>
    %193 = arith.addf %191, %192 : vector<128x128xf32>
    %194 = arith.truncf %193 : vector<128x128xf32> to vector<128x128xbf16>
    %cst_83 = arith.constant dense<0.000000e+00> : vector<128x128xf32>
    %195 = tpu.matmul %194, %10, %cst_83 {dimension_numbers = #tpu.dot_dimension_numbers<[1], [0], [0], [1], [0, 0, 1, 1], [], []>} : vector<128x128xbf16>, vector<128x128xbf16>, vector<128x128xf32> -> vector<128x128xf32>
    %196 = vector.broadcast %11 : vector<1x128xf32> to vector<128x128xf32>
    %197 = arith.addf %195, %196 : vector<128x128xf32>
    %cst_84 = arith.constant dense<0.000000e+00> : vector<128xf32>
    %198 = vector.multi_reduction <add>, %197, %cst_84 [0] : vector<128x128xf32> to vector<128xf32>
    %199 = vector.shape_cast %198 : vector<128xf32> to vector<1x128xf32>
    %cst_85 = arith.constant 1.280000e+02 : f32
    %200 = vector.broadcast %cst_85 : f32 to vector<1x128xf32>
    %201 = arith.divf %199, %200 : vector<1x128xf32>
    %202 = arith.truncf %201 : vector<1x128xf32> to vector<1x128xbf16>
    %cst_86 = arith.constant dense<0.000000e+00> : vector<1x16xf32>
    %203 = tpu.matmul %202, %12, %cst_86 {dimension_numbers = #tpu.dot_dimension_numbers<[1], [0], [0], [1], [0, 0, 1, 1], [], []>} : vector<1x128xbf16>, vector<128x16xbf16>, vector<1x16xf32> -> vector<1x16xf32>
    %204 = arith.addf %203, %13 : vector<1x16xf32>
    %cst_87 = arith.constant 0.000000e+00 : f32
    %205 = vector.broadcast %cst_87 : f32 to vector<1x16xf32>
    %206 = arith.maximumf %204, %205 : vector<1x16xf32>
    %207 = arith.truncf %206 : vector<1x16xf32> to vector<1x16xbf16>
    %cst_88 = arith.constant dense<0.000000e+00> : vector<1x128xf32>
    %208 = tpu.matmul %207, %14, %cst_88 {dimension_numbers = #tpu.dot_dimension_numbers<[1], [0], [0], [1], [0, 0, 1, 1], [], []>} : vector<1x16xbf16>, vector<16x128xbf16>, vector<1x128xf32> -> vector<1x128xf32>
    %209 = arith.addf %208, %15 : vector<1x128xf32>
    %210 = arith.negf %209 : vector<1x128xf32>
    %211 = math.exp %210 : vector<1x128xf32>
    %cst_89 = arith.constant 1.000000e+00 : f32
    %212 = vector.broadcast %cst_89 : f32 to vector<1x128xf32>
    %213 = arith.addf %212, %211 : vector<1x128xf32>
    %214 = arith.divf %212, %213 : vector<1x128xf32>
    %215 = vector.broadcast %214 : vector<1x128xf32> to vector<128x128xf32>
    %216 = arith.mulf %197, %215 : vector<128x128xf32>
    %217 = arith.truncf %19 : vector<128x128xf32> to vector<128x128xbf16>
    %cst_90 = arith.constant dense<0.000000e+00> : vector<128x128xf32>
    %218 = tpu.matmul %217, %16, %cst_90 {dimension_numbers = #tpu.dot_dimension_numbers<[1], [0], [0], [1], [0, 0, 1, 1], [], []>} : vector<128x128xbf16>, vector<128x128xbf16>, vector<128x128xf32> -> vector<128x128xf32>
    %219 = vector.broadcast %17 : vector<1x128xf32> to vector<128x128xf32>
    %220 = arith.addf %218, %219 : vector<128x128xf32>
    %221 = arith.addf %220, %216 : vector<128x128xf32>
    %cst_91 = arith.constant 0.000000e+00 : f32
    %222 = vector.broadcast %cst_91 : f32 to vector<128x128xf32>
    %223 = arith.maximumf %221, %222 : vector<128x128xf32>
    %c0_92 = arith.constant 0 : index
    %c0_93 = arith.constant 0 : index
    %c0_94 = arith.constant 0 : index
    %224 = vector.load %arg20[%c0_92, %c0_93, %c0_94] : memref<1x128x128xf32, #tpu.memory_space<vmem>>, vector<1x128x128xf32>
    %225 = vector.shape_cast %224 : vector<1x128x128xf32> to vector<128x128xf32>
    %226 = vector.shape_cast %223 : vector<128x128xf32> to vector<1x128x128xf32>
    tpu.vector_store %arg20[%c0_92, %c0_93, %c0_94], %226 {strides = array<i32>} : memref<1x128x128xf32, #tpu.memory_space<vmem>>, vector<1x128x128xf32>,
    return
  }
  func.func @transform_0(%arg0: i32) -> (i32, i32, i32) {
    %c0_i32 = arith.constant 0 : i32
    %c0_i32_0 = arith.constant 0 : i32
    %c0_i32_1 = arith.constant 0 : i32
    return %arg0, %c0_i32, %c0_i32_0 : i32, i32, i32
  }
  func.func @transform_1(%arg0: i32) -> (i32, i32) {
    %c0_i32 = arith.constant 0 : i32
    %c0_i32_0 = arith.constant 0 : i32
    %c0_i32_1 = arith.constant 0 : i32
    return %c0_i32, %c0_i32_0 : i32, i32
  }
  func.func @transform_2(%arg0: i32) -> (i32, i32) {
    %c0_i32 = arith.constant 0 : i32
    %c0_i32_0 = arith.constant 0 : i32
    %c0_i32_1 = arith.constant 0 : i32
    return %c0_i32, %c0_i32_0 : i32, i32
  }
  func.func @transform_3(%arg0: i32) -> (i32, i32) {
    %c0_i32 = arith.constant 0 : i32
    %c0_i32_0 = arith.constant 0 : i32
    %c0_i32_1 = arith.constant 0 : i32
    return %c0_i32, %c0_i32_0 : i32, i32
  }
  func.func @transform_4(%arg0: i32) -> (i32, i32) {
    %c0_i32 = arith.constant 0 : i32
    %c0_i32_0 = arith.constant 0 : i32
    %c0_i32_1 = arith.constant 0 : i32
    return %c0_i32, %c0_i32_0 : i32, i32
  }
  func.func @transform_5(%arg0: i32) -> (i32, i32) {
    %c0_i32 = arith.constant 0 : i32
    %c0_i32_0 = arith.constant 0 : i32
    %c0_i32_1 = arith.constant 0 : i32
    return %c0_i32, %c0_i32_0 : i32, i32
  }
  func.func @transform_6(%arg0: i32) -> (i32, i32) {
    %c0_i32 = arith.constant 0 : i32
    %c0_i32_0 = arith.constant 0 : i32
    %c0_i32_1 = arith.constant 0 : i32
    return %c0_i32, %c0_i32_0 : i32, i32
  }
  func.func @transform_7(%arg0: i32) -> (i32, i32) {
    %c0_i32 = arith.constant 0 : i32
    %c0_i32_0 = arith.constant 0 : i32
    %c0_i32_1 = arith.constant 0 : i32
    return %c0_i32, %c0_i32_0 : i32, i32
  }
  func.func @transform_8(%arg0: i32) -> (i32, i32) {
    %c0_i32 = arith.constant 0 : i32
    %c0_i32_0 = arith.constant 0 : i32
    %c0_i32_1 = arith.constant 0 : i32
    return %c0_i32, %c0_i32_0 : i32, i32
  }
  func.func @transform_9(%arg0: i32) -> (i32, i32) {
    %c0_i32 = arith.constant 0 : i32
    %c0_i32_0 = arith.constant 0 : i32
    %c0_i32_1 = arith.constant 0 : i32
    return %c0_i32, %c0_i32_0 : i32, i32
  }
  func.func @transform_10(%arg0: i32) -> (i32, i32) {
    %c0_i32 = arith.constant 0 : i32
    %c0_i32_0 = arith.constant 0 : i32
    %c0_i32_1 = arith.constant 0 : i32
    return %c0_i32, %c0_i32_0 : i32, i32
  }
  func.func @transform_11(%arg0: i32) -> (i32, i32) {
    %c0_i32 = arith.constant 0 : i32
    %c0_i32_0 = arith.constant 0 : i32
    %c0_i32_1 = arith.constant 0 : i32
    return %c0_i32, %c0_i32_0 : i32, i32
  }
  func.func @transform_12(%arg0: i32) -> (i32, i32) {
    %c0_i32 = arith.constant 0 : i32
    %c0_i32_0 = arith.constant 0 : i32
    %c0_i32_1 = arith.constant 0 : i32
    return %c0_i32, %c0_i32_0 : i32, i32
  }
  func.func @transform_13(%arg0: i32) -> (i32, i32) {
    %c0_i32 = arith.constant 0 : i32
    %c0_i32_0 = arith.constant 0 : i32
    %c0_i32_1 = arith.constant 0 : i32
    return %c0_i32, %c0_i32_0 : i32, i32
  }
  func.func @transform_14(%arg0: i32) -> (i32, i32) {
    %c0_i32 = arith.constant 0 : i32
    %c0_i32_0 = arith.constant 0 : i32
    %c0_i32_1 = arith.constant 0 : i32
    return %c0_i32, %c0_i32_0 : i32, i32
  }
  func.func @transform_15(%arg0: i32) -> (i32, i32) {
    %c0_i32 = arith.constant 0 : i32
    %c0_i32_0 = arith.constant 0 : i32
    %c0_i32_1 = arith.constant 0 : i32
    return %c0_i32, %c0_i32_0 : i32, i32
  }
  func.func @transform_16(%arg0: i32) -> (i32, i32) {
    %c0_i32 = arith.constant 0 : i32
    %c0_i32_0 = arith.constant 0 : i32
    %c0_i32_1 = arith.constant 0 : i32
    return %c0_i32, %c0_i32_0 : i32, i32
  }
  func.func @transform_17(%arg0: i32) -> (i32, i32) {
    %c0_i32 = arith.constant 0 : i32
    %c0_i32_0 = arith.constant 0 : i32
    %c0_i32_1 = arith.constant 0 : i32
    return %c0_i32, %c0_i32_0 : i32, i32
  }
  func.func @transform_18(%arg0: i32) -> (i32, i32) {
    %c0_i32 = arith.constant 0 : i32
    %c0_i32_0 = arith.constant 0 : i32
    %c0_i32_1 = arith.constant 0 : i32
    return %c0_i32, %c0_i32_0 : i32, i32
  }
  func.func @transform_19(%arg0: i32) -> (i32, i32, i32) {
    %c0_i32 = arith.constant 0 : i32
    %c0_i32_0 = arith.constant 0 : i32
    %c0_i32_1 = arith.constant 0 : i32
    return %arg0, %c0_i32, %c0_i32_0 : i32, i32, i32
  }
}

</mosaic_0001>

<llo_original>
// kernel: tpu_custom_call.1
$region0: #{tpu_custom_call.1}
  #allocation0 [shape = 'u32[]', space=smem, size = 0x4, offset = 0x4, fixed_abs, tag = 'smem constant byte address 0x4 - core index']
  #allocation1 [shape = 'u32[144,128]{1,0:T(1,128)}', space=vmem, size = 0x12000, scoped, tag = 'internal scratch']
  %s0 = inlined_call_operand.hbm [shape: f32[4,128,128], index: 0, kind: input, shape index: {}]
  %s1 = inlined_call_operand.hbm [shape: f32[5,128], index: 1, kind: input, shape index: {}]
  %s2 = inlined_call_operand.hbm [shape: f32[1,128], index: 2, kind: input, shape index: {}]
  %s3 = inlined_call_operand.vmem [shape: bf16[128,128], index: 3, kind: input, shape index: {}]
  %s4 = inlined_call_operand.hbm [shape: f32[1,128], index: 4, kind: input, shape index: {}]
  %s5 = inlined_call_operand.hbm [shape: f32[5,128], index: 5, kind: input, shape index: {}]
  %s6 = inlined_call_operand.hbm [shape: f32[1,128], index: 6, kind: input, shape index: {}]
  %s7 = inlined_call_operand.hbm [shape: bf16[128,128], index: 7, kind: input, shape index: {}]
  %s8 = inlined_call_operand.hbm [shape: f32[1,128], index: 8, kind: input, shape index: {}]
  %s9 = inlined_call_operand.hbm [shape: f32[5,128], index: 9, kind: input, shape index: {}]
  %s10 = inlined_call_operand.hbm [shape: f32[1,128], index: 10, kind: input, shape index: {}]
  %s11 = inlined_call_operand.hbm [shape: bf16[128,128], index: 11, kind: input, shape index: {}]
  %s12 = inlined_call_operand.hbm [shape: f32[1,128], index: 12, kind: input, shape index: {}]
  %s13 = inlined_call_operand.vmem [shape: bf16[128,16], index: 13, kind: input, shape index: {}]
  %s14 = inlined_call_operand.hbm [shape: f32[1,16], index: 14, kind: input, shape index: {}]
  %s15 = inlined_call_operand.hbm [shape: bf16[16,128], index: 15, kind: input, shape index: {}]
  %s16 = inlined_call_operand.vmem [shape: f32[1,128], index: 16, kind: input, shape index: {}]
  %s17 = inlined_call_operand.vmem [shape: bf16[128,128], index: 17, kind: input, shape index: {}]
  %s18 = inlined_call_operand.vmem [shape: f32[1,128], index: 18, kind: input, shape index: {}]
  %s19 = inlined_call_operand.hbm [shape: f32[4,128,128], index: 19, kind: output, shape index: {}]
  %s20 = sld [smem:[#allocation0]]
  $region165: #{tpu_custom_call.1} parent=0
    _
  %s22 = ssub.s32 1, %s20
  %s23 = scalar_select 0, %s22, %s20
  $region1: #{tpu_custom_call.1} parent=0
    #allocation2 [shape = 'u8[131072]{0}', space=vmem, size = 0x20000, scoped, tag = 'input window, operand 0']
    #allocation3 [shape = 's32[2]{0}', space=sflag, size = 0x8, scoped, tag = 'scoped memory for tpu_custom_call.1']
    #allocation4 [shape = 's32[2]{0}', space=sflag, size = 0x8, scoped, tag = 'scoped memory for tpu_custom_call.1']
    #allocation5 [shape = 'u8[4096]{0}', space=vmem, size = 0x1000, scoped, tag = 'input window, operand 1, single buffered']
    #allocation6 [shape = 's32[1]{0}', space=sflag, size = 0x4, scoped, tag = 'scoped memory for tpu_custom_call.1']
    #allocation7 [shape = 'u8[512]{0}', space=vmem, size = 0x400, scoped, tag = 'input window, operand 2, single buffered']
    #allocation8 [shape = 'u8[512]{0}', space=vmem, size = 0x400, scoped, tag = 'input window, operand 4, single buffered']
    #allocation9 [shape = 's32[1]{0}', space=sflag, size = 0x4, scoped, tag = 'scoped memory for tpu_custom_call.1']
    #allocation10 [shape = 'u8[4096]{0}', space=vmem, size = 0x1000, scoped, tag = 'input window, operand 5, single buffered']
    #allocation11 [shape = 'u8[512]{0}', space=vmem, size = 0x400, scoped, tag = 'input window, operand 6, single buffered']
    #allocation12 [shape = 's32[1]{0}', space=sflag, size = 0x4, scoped, tag = 'scoped memory for tpu_custom_call.1']
    #allocation13 [shape = 'u8[32768]{0}', space=vmem, size = 0x8000, scoped, tag = 'input window, operand 7, single buffered']
    #allocation14 [shape = 'u8[512]{0}', space=vmem, size = 0x400, scoped, tag = 'input window, operand 8, single buffered']
    #allocation15 [shape = 's32[1]{0}', space=sflag, size = 0x4, scoped, tag = 'scoped memory for tpu_custom_call.1']
    #allocation16 [shape = 'u8[4096]{0}', space=vmem, size = 0x1000, scoped, tag = 'input window, operand 9, single buffered']
    #allocation17 [shape = 'u8[512]{0}', space=vmem, size = 0x400, scoped, tag = 'input window, operand 10, single buffered']
    #allocation18 [shape = 's32[1]{0}', space=sflag, size = 0x4, scoped, tag = 'scoped memory for tpu_custom_call.1']
    #allocation19 [shape = 'u8[32768]{0}', space=vmem, size = 0x8000, scoped, tag = 'input window, operand 11, single buffered']
    #allocation20 [shape = 'u8[512]{0}', space=vmem, size = 0x400, scoped, tag = 'input window, operand 12, single buffered']
    #allocation21 [shape = 's32[1]{0}', space=sflag, size = 0x4, scoped, tag = 'scoped memory for tpu_custom_call.1']
    #allocation22 [shape = 'u8[512]{0}', space=vmem, size = 0x400, scoped, tag = 'input window, operand 14, single buffered']
    #allocation23 [shape = 'u8[4096]{0}', space=vmem, size = 0x1000, scoped, tag = 'input window, operand 15, single buffered']
    #allocation24 [shape = 's32[1]{0}', space=sflag, size = 0x4, scoped, tag = 'scoped memory for tpu_custom_call.1']
    #allocation25 [shape = 'u8[131072]{0}', space=vmem, size = 0x20000, scoped, tag = 'output window, operand 0']
    %24 = vsyncpa [#allocation3], 0
    %s25 = scalar_lea.sflag [#allocation3], 1
    %26 = vsyncpa %s25, 0
    %27 = vsyncpa [#allocation6], 0
    %28 = vsyncpa [#allocation9], 0
    %29 = vsyncpa [#allocation12], 0
    %30 = vsyncpa [#allocation15], 0
    %31 = vsyncpa [#allocation18], 0
    %32 = vsyncpa [#allocation21], 0
    %33 = vsyncpa [#allocation24], 0
    %34 = vsyncpa [#allocation4], 0
    %s35 = scalar_lea.sflag [#allocation4], 1
    %36 = vsyncpa %s35, 0
    loop: start=0, step=1, limit=6
    $region2: #{tpu_custom_call.1} parent=1 // loop_pre_header
      _
    $region3: #{tpu_custom_call.1} parent=1 // loop_header
      %s38 = sphi 0, %s42
      %p39 = scmp.ge.s32.totalorder %s38, 6
      %s48 = sphi 0, %s50
      %s51 = sphi 0, %s48
      %s52 = sphi 0, %s51
      %s68 = sphi 0, %s52
      %s72 = sphi 0, %s72
      %s74 = sphi 0, %s72
      %s75 = sphi 0, %s74
      %s89 = sphi 0, %s75
      %s93 = sphi 0, %s93
      %s95 = sphi 0, %s93
      %s96 = sphi 0, %s95
      %s110 = sphi 0, %s96
      %s114 = sphi 0, %s114
      %s116 = sphi 0, %s114
      %s117 = sphi 0, %s116
      %s131 = sphi 0, %s117
      %s135 = sphi 0, %s135
      %s137 = sphi 0, %s135
      %s138 = sphi 0, %s137
      %s152 = sphi 0, %s138
      %s156 = sphi 0, %s156
      %s158 = sphi 0, %s156
      %s159 = sphi 0, %s158
      %s173 = sphi 0, %s159
      %s177 = sphi 0, %s177
      %s179 = sphi 0, %s177
      %s180 = sphi 0, %s179
      %s194 = sphi 0, %s180
      %s198 = sphi 0, %s198
      %s200 = sphi 0, %s198
      %s201 = sphi 0, %s200
      %s215 = sphi 0, %s201
      %s219 = sphi 0, %s219
      %s221 = sphi 0, %s219
      %s222 = sphi 0, %s221
      %s236 = sphi 0, %s222
      %s240 = sphi 0, %s240
      %s242 = sphi 0, %s240
      %s243 = sphi 0, %s242
      %s257 = sphi 0, %s243
      %s261 = sphi 0, %s261
      %s263 = sphi 0, %s261
      %s264 = sphi 0, %s263
      %s278 = sphi 0, %s264
      %s282 = sphi 0, %s282
      %s284 = sphi 0, %s282
      %s285 = sphi 0, %s284
      %s299 = sphi 0, %s285
      %s303 = sphi 0, %s303
      %s305 = sphi 0, %s303
      %s306 = sphi 0, %s305
      %s320 = sphi 0, %s306
      %s324 = sphi 0, %s324
      %s326 = sphi 0, %s324
      %s327 = sphi 0, %s326
      %s341 = sphi 0, %s327
      %s345 = sphi 0, %s345
      %s347 = sphi 0, %s345
      %s348 = sphi 0, %s347
      %s362 = sphi 0, %s348
      %s366 = sphi 0, %s366
      %s368 = sphi 0, %s366
      %s369 = sphi 0, %s368
      %s383 = sphi 0, %s369
      %s387 = sphi 0, %s387
      %s389 = sphi 0, %s387
      %s390 = sphi 0, %s389
      %s404 = sphi 0, %s390
      %s408 = sphi 0, %s408
      %s410 = sphi 0, %s408
      %s411 = sphi 0, %s410
      %s425 = sphi 0, %s411
      %s429 = sphi 0, %s429
      %s431 = sphi 0, %s429
      %s432 = sphi 0, %s431
      %s446 = sphi 0, %s432
      %s452 = sphi 0, %s454
      %s455 = sphi 0, %s452
      %s456 = sphi 0, %s455
      %s472 = sphi 0, %s456
    $region4: #{tpu_custom_call.1} parent=1 // loop_header_branch
      %41 = sbr.rel (%p39) target = $region8
    $region5: #{tpu_custom_call.1} parent=1 // loop_body
      %s43 = ssub.s32 %s38, 1
      %s44 = ssub.s32 %s38, 2
      %s45 = sadd.s32 %s38, 1
      %s46 = ssub.s32 %s38, %s45
      %p47 = scmp.eq.s32.totalorder %s46, 0
      %s49 = sadd.s32 %s48, 1
      %s50 = scalar_select %p47, %s48, %s49
      %p53 = pneg %p47
      %p54 = scmp.eq.s32.totalorder %s38, 3
      %p55 = por %p53, %p54
      %p56 = scmp.ne.s32.totalorder %s48, %s51
      %p57 = scmp.eq.s32.totalorder %s38, 0
      %p58 = por %p56, %p57
      %p59 = scmp.ne.s32.totalorder %s48, %s51
      %p60 = scmp.eq.s32.totalorder %s43, 3
      %p61 = por %p59, %p60
      %p62 = scmp.ne.s32.totalorder %s51, %s52
      %p63 = scmp.eq.s32.totalorder %s43, 0
      %p64 = por %p62, %p63
      %p65 = scmp.ne.s32.totalorder %s51, %s52
      %p66 = scmp.eq.s32.totalorder %s44, 3
      %p67 = por %p65, %p66
      %p69 = scmp.ne.s32.totalorder %s52, %s68
      %p70 = scmp.eq.s32.totalorder %s44, 0
      %p71 = por %p69, %p70
      %s73 = sadd.s32 %s72, 1
      %p76 = scmp.eq.s32.totalorder %s38, 3
      %p77 = scmp.ne.s32.totalorder %s72, %s74
      %p78 = scmp.eq.s32.totalorder %s38, 0
      %p79 = por %p77, %p78
      %p80 = scmp.ne.s32.totalorder %s72, %s74
      %p81 = scmp.eq.s32.totalorder %s43, 3
      %p82 = por %p80, %p81
      %p83 = scmp.ne.s32.totalorder %s74, %s75
      %p84 = scmp.eq.s32.totalorder %s43, 0
      %p85 = por %p83, %p84
      %p86 = scmp.ne.s32.totalorder %s74, %s75
      %p87 = scmp.eq.s32.totalorder %s44, 3
      %p88 = por %p86, %p87
      %p90 = scmp.ne.s32.totalorder %s75, %s89
      %p91 = scmp.eq.s32.totalorder %s44, 0
      %p92 = por %p90, %p91
      %s94 = sadd.s32 %s93, 1
      %p97 = scmp.eq.s32.totalorder %s38, 3
      %p98 = scmp.ne.s32.totalorder %s93, %s95
      %p99 = scmp.eq.s32.totalorder %s38, 0
      %p100 = por %p98, %p99
      %p101 = scmp.ne.s32.totalorder %s93, %s95
      %p102 = scmp.eq.s32.totalorder %s43, 3
      %p103 = por %p101, %p102
      %p104 = scmp.ne.s32.totalorder %s95, %s96
      %p105 = scmp.eq.s32.totalorder %s43, 0
      %p106 = por %p104, %p105
      %p107 = scmp.ne.s32.totalorder %s95, %s96
      %p108 = scmp.eq.s32.totalorder %s44, 3
      %p109 = por %p107, %p108
      %p111 = scmp.ne.s32.totalorder %s96, %s110
      %p112 = scmp.eq.s32.totalorder %s44, 0
      %p113 = por %p111, %p112
      %s115 = sadd.s32 %s114, 1
      %p118 = scmp.eq.s32.totalorder %s38, 3
      %p119 = scmp.ne.s32.totalorder %s114, %s116
      %p120 = scmp.eq.s32.totalorder %s38, 0
      %p121 = por %p119, %p120
      %p122 = scmp.ne.s32.totalorder %s114, %s116
      %p123 = scmp.eq.s32.totalorder %s43, 3
      %p124 = por %p122, %p123
      %p125 = scmp.ne.s32.totalorder %s116, %s117
      %p126 = scmp.eq.s32.totalorder %s43, 0
      %p127 = por %p125, %p126
      %p128 = scmp.ne.s32.totalorder %s116, %s117
      %p129 = scmp.eq.s32.totalorder %s44, 3
      %p130 = por %p128, %p129
      %p132 = scmp.ne.s32.totalorder %s117, %s131
      %p133 = scmp.eq.s32.totalorder %s44, 0
      %p134 = por %p132, %p133
      %s136 = sadd.s32 %s135, 1
      %p139 = scmp.eq.s32.totalorder %s38, 3
      %p140 = scmp.ne.s32.totalorder %s135, %s137
      %p141 = scmp.eq.s32.totalorder %s38, 0
      %p142 = por %p140, %p141
      %p143 = scmp.ne.s32.totalorder %s135, %s137
      %p144 = scmp.eq.s32.totalorder %s43, 3
      %p145 = por %p143, %p144
      %p146 = scmp.ne.s32.totalorder %s137, %s138
      %p147 = scmp.eq.s32.totalorder %s43, 0
      %p148 = por %p146, %p147
      %p149 = scmp.ne.s32.totalorder %s137, %s138
      %p150 = scmp.eq.s32.totalorder %s44, 3
      %p151 = por %p149, %p150
      %p153 = scmp.ne.s32.totalorder %s138, %s152
      %p154 = scmp.eq.s32.totalorder %s44, 0
      %p155 = por %p153, %p154
      %s157 = sadd.s32 %s156, 1
      %p160 = scmp.eq.s32.totalorder %s38, 3
      %p161 = scmp.ne.s32.totalorder %s156, %s158
      %p162 = scmp.eq.s32.totalorder %s38, 0
      %p163 = por %p161, %p162
      %p164 = scmp.ne.s32.totalorder %s156, %s158
      %p165 = scmp.eq.s32.totalorder %s43, 3
      %p166 = por %p164, %p165
      %p167 = scmp.ne.s32.totalorder %s158, %s159
      %p168 = scmp.eq.s32.totalorder %s43, 0
      %p169 = por %p167, %p168
      %p170 = scmp.ne.s32.totalorder %s158, %s159
      %p171 = scmp.eq.s32.totalorder %s44, 3
      %p172 = por %p170, %p171
      %p174 = scmp.ne.s32.totalorder %s159, %s173
      %p175 = scmp.eq.s32.totalorder %s44, 0
      %p176 = por %p174, %p175
      %s178 = sadd.s32 %s177, 1
      %p181 = scmp.eq.s32.totalorder %s38, 3
      %p182 = scmp.ne.s32.totalorder %s177, %s179
      %p183 = scmp.eq.s32.totalorder %s38, 0
      %p184 = por %p182, %p183
      %p185 = scmp.ne.s32.totalorder %s177, %s179
      %p186 = scmp.eq.s32.totalorder %s43, 3
      %p187 = por %p185, %p186
      %p188 = scmp.ne.s32.totalorder %s179, %s180
      %p189 = scmp.eq.s32.totalorder %s43, 0
      %p190 = por %p188, %p189
      %p191 = scmp.ne.s32.totalorder %s179, %s180
      %p192 = scmp.eq.s32.totalorder %s44, 3
      %p193 = por %p191, %p192
      %p195 = scmp.ne.s32.totalorder %s180, %s194
      %p196 = scmp.eq.s32.totalorder %s44, 0
      %p197 = por %p195, %p196
      %s199 = sadd.s32 %s198, 1
      %p202 = scmp.eq.s32.totalorder %s38, 3
      %p203 = scmp.ne.s32.totalorder %s198, %s200
      %p204 = scmp.eq.s32.totalorder %s38, 0
      %p205 = por %p203, %p204
      %p206 = scmp.ne.s32.totalorder %s198, %s200
      %p207 = scmp.eq.s32.totalorder %s43, 3
      %p208 = por %p206, %p207
      %p209 = scmp.ne.s32.totalorder %s200, %s201
      %p210 = scmp.eq.s32.totalorder %s43, 0
      %p211 = por %p209, %p210
      %p212 = scmp.ne.s32.totalorder %s200, %s201
      %p213 = scmp.eq.s32.totalorder %s44, 3
      %p214 = por %p212, %p213
      %p216 = scmp.ne.s32.totalorder %s201, %s215
      %p217 = scmp.eq.s32.totalorder %s44, 0
      %p218 = por %p216, %p217
      %s220 = sadd.s32 %s219, 1
      %p223 = scmp.eq.s32.totalorder %s38, 3
      %p224 = scmp.ne.s32.totalorder %s219, %s221
      %p225 = scmp.eq.s32.totalorder %s38, 0
      %p226 = por %p224, %p225
      %p227 = scmp.ne.s32.totalorder %s219, %s221
      %p228 = scmp.eq.s32.totalorder %s43, 3
      %p229 = por %p227, %p228
      %p230 = scmp.ne.s32.totalorder %s221, %s222
      %p231 = scmp.eq.s32.totalorder %s43, 0
      %p232 = por %p230, %p231
      %p233 = scmp.ne.s32.totalorder %s221, %s222
      %p234 = scmp.eq.s32.totalorder %s44, 3
      %p235 = por %p233, %p234
      %p237 = scmp.ne.s32.totalorder %s222, %s236
      %p238 = scmp.eq.s32.totalorder %s44, 0
      %p239 = por %p237, %p238
      %s241 = sadd.s32 %s240, 1
      %p244 = scmp.eq.s32.totalorder %s38, 3
      %p245 = scmp.ne.s32.totalorder %s240, %s242
      %p246 = scmp.eq.s32.totalorder %s38, 0
      %p247 = por %p245, %p246
      %p248 = scmp.ne.s32.totalorder %s240, %s242
      %p249 = scmp.eq.s32.totalorder %s43, 3
      %p250 = por %p248, %p249
      %p251 = scmp.ne.s32.totalorder %s242, %s243
      %p252 = scmp.eq.s32.totalorder %s43, 0
      %p253 = por %p251, %p252
      %p254 = scmp.ne.s32.totalorder %s242, %s243
      %p255 = scmp.eq.s32.totalorder %s44, 3
      %p256 = por %p254, %p255
      %p258 = scmp.ne.s32.totalorder %s243, %s257
      %p259 = scmp.eq.s32.totalorder %s44, 0
      %p260 = por %p258, %p259
      %s262 = sadd.s32 %s261, 1
      %p265 = scmp.eq.s32.totalorder %s38, 3
      %p266 = scmp.ne.s32.totalorder %s261, %s263
      %p267 = scmp.eq.s32.totalorder %s38, 0
      %p268 = por %p266, %p267
      %p269 = scmp.ne.s32.totalorder %s261, %s263
      %p270 = scmp.eq.s32.totalorder %s43, 3
      %p271 = por %p269, %p270
      %p272 = scmp.ne.s32.totalorder %s263, %s264
      %p273 = scmp.eq.s32.totalorder %s43, 0
      %p274 = por %p272, %p273
      %p275 = scmp.ne.s32.totalorder %s263, %s264
      %p276 = scmp.eq.s32.totalorder %s44, 3
      %p277 = por %p275, %p276
      %p279 = scmp.ne.s32.totalorder %s264, %s278
      %p280 = scmp.eq.s32.totalorder %s44, 0
      %p281 = por %p279, %p280
      %s283 = sadd.s32 %s282, 1
      %p286 = scmp.eq.s32.totalorder %s38, 3
      %p287 = scmp.ne.s32.totalorder %s282, %s284
      %p288 = scmp.eq.s32.totalorder %s38, 0
      %p289 = por %p287, %p288
      %p290 = scmp.ne.s32.totalorder %s282, %s284
      %p291 = scmp.eq.s32.totalorder %s43, 3
      %p292 = por %p290, %p291
      %p293 = scmp.ne.s32.totalorder %s284, %s285
      %p294 = scmp.eq.s32.totalorder %s43, 0
      %p295 = por %p293, %p294
      %p296 = scmp.ne.s32.totalorder %s284, %s285
      %p297 = scmp.eq.s32.totalorder %s44, 3
      %p298 = por %p296, %p297
      %p300 = scmp.ne.s32.totalorder %s285, %s299
      %p301 = scmp.eq.s32.totalorder %s44, 0
      %p302 = por %p300, %p301
      %s304 = sadd.s32 %s303, 1
      %p307 = scmp.eq.s32.totalorder %s38, 3
      %p308 = scmp.ne.s32.totalorder %s303, %s305
      %p309 = scmp.eq.s32.totalorder %s38, 0
      %p310 = por %p308, %p309
      %p311 = scmp.ne.s32.totalorder %s303, %s305
      %p312 = scmp.eq.s32.totalorder %s43, 3
      %p313 = por %p311, %p312
      %p314 = scmp.ne.s32.totalorder %s305, %s306
      %p315 = scmp.eq.s32.totalorder %s43, 0
      %p316 = por %p314, %p315
      %p317 = scmp.ne.s32.totalorder %s305, %s306
      %p318 = scmp.eq.s32.totalorder %s44, 3
      %p319 = por %p317, %p318
      %p321 = scmp.ne.s32.totalorder %s306, %s320
      %p322 = scmp.eq.s32.totalorder %s44, 0
      %p323 = por %p321, %p322
      %s325 = sadd.s32 %s324, 1
      %p328 = scmp.eq.s32.totalorder %s38, 3
      %p329 = scmp.ne.s32.totalorder %s324, %s326
      %p330 = scmp.eq.s32.totalorder %s38, 0
      %p331 = por %p329, %p330
      %p332 = scmp.ne.s32.totalorder %s324, %s326
      %p333 = scmp.eq.s32.totalorder %s43, 3
      %p334 = por %p332, %p333
      %p335 = scmp.ne.s32.totalorder %s326, %s327
      %p336 = scmp.eq.s32.totalorder %s43, 0
      %p337 = por %p335, %p336
      %p338 = scmp.ne.s32.totalorder %s326, %s327
      %p339 = scmp.eq.s32.totalorder %s44, 3
      %p340 = por %p338, %p339
      %p342 = scmp.ne.s32.totalorder %s327, %s341
      %p343 = scmp.eq.s32.totalorder %s44, 0
      %p344 = por %p342, %p343
      %s346 = sadd.s32 %s345, 1
      %p349 = scmp.eq.s32.totalorder %s38, 3
      %p350 = scmp.ne.s32.totalorder %s345, %s347
      %p351 = scmp.eq.s32.totalorder %s38, 0
      %p352 = por %p350, %p351
      %p353 = scmp.ne.s32.totalorder %s345, %s347
      %p354 = scmp.eq.s32.totalorder %s43, 3
      %p355 = por %p353, %p354
      %p356 = scmp.ne.s32.totalorder %s347, %s348
      %p357 = scmp.eq.s32.totalorder %s43, 0
      %p358 = por %p356, %p357
      %p359 = scmp.ne.s32.totalorder %s347, %s348
      %p360 = scmp.eq.s32.totalorder %s44, 3
      %p361 = por %p359, %p360
      %p363 = scmp.ne.s32.totalorder %s348, %s362
      %p364 = scmp.eq.s32.totalorder %s44, 0
      %p365 = por %p363, %p364
      %s367 = sadd.s32 %s366, 1
      %p370 = scmp.eq.s32.totalorder %s38, 3
      %p371 = scmp.ne.s32.totalorder %s366, %s368
      %p372 = scmp.eq.s32.totalorder %s38, 0
      %p373 = por %p371, %p372
      %p374 = scmp.ne.s32.totalorder %s366, %s368
      %p375 = scmp.eq.s32.totalorder %s43, 3
      %p376 = por %p374, %p375
      %p377 = scmp.ne.s32.totalorder %s368, %s369
      %p378 = scmp.eq.s32.totalorder %s43, 0
      %p379 = por %p377, %p378
      %p380 = scmp.ne.s32.totalorder %s368, %s369
      %p381 = scmp.eq.s32.totalorder %s44, 3
      %p382 = por %p380, %p381
      %p384 = scmp.ne.s32.totalorder %s369, %s383
      %p385 = scmp.eq.s32.totalorder %s44, 0
      %p386 = por %p384, %p385
      %s388 = sadd.s32 %s387, 1
      %p391 = scmp.eq.s32.totalorder %s38, 3
      %p392 = scmp.ne.s32.totalorder %s387, %s389
      %p393 = scmp.eq.s32.totalorder %s38, 0
      %p394 = por %p392, %p393
      %p395 = scmp.ne.s32.totalorder %s387, %s389
      %p396 = scmp.eq.s32.totalorder %s43, 3
      %p397 = por %p395, %p396
      %p398 = scmp.ne.s32.totalorder %s389, %s390
      %p399 = scmp.eq.s32.totalorder %s43, 0
      %p400 = por %p398, %p399
      %p401 = scmp.ne.s32.totalorder %s389, %s390
      %p402 = scmp.eq.s32.totalorder %s44, 3
      %p403 = por %p401, %p402
      %p405 = scmp.ne.s32.totalorder %s390, %s404
      %p406 = scmp.eq.s32.totalorder %s44, 0
      %p407 = por %p405, %p406
      %s409 = sadd.s32 %s408, 1
      %p412 = scmp.eq.s32.totalorder %s38, 3
      %p413 = scmp.ne.s32.totalorder %s408, %s410
      %p414 = scmp.eq.s32.totalorder %s38, 0
      %p415 = por %p413, %p414
      %p416 = scmp.ne.s32.totalorder %s408, %s410
      %p417 = scmp.eq.s32.totalorder %s43, 3
      %p418 = por %p416, %p417
      %p419 = scmp.ne.s32.totalorder %s410, %s411
      %p420 = scmp.eq.s32.totalorder %s43, 0
      %p421 = por %p419, %p420
      %p422 = scmp.ne.s32.totalorder %s410, %s411
      %p423 = scmp.eq.s32.totalorder %s44, 3
      %p424 = por %p422, %p423
      %p426 = scmp.ne.s32.totalorder %s411, %s425
      %p427 = scmp.eq.s32.totalorder %s44, 0
      %p428 = por %p426, %p427
      %s430 = sadd.s32 %s429, 1
      %p433 = scmp.eq.s32.totalorder %s38, 3
      %p434 = scmp.ne.s32.totalorder %s429, %s431
      %p435 = scmp.eq.s32.totalorder %s38, 0
      %p436 = por %p434, %p435
      %p437 = scmp.ne.s32.totalorder %s429, %s431
      %p438 = scmp.eq.s32.totalorder %s43, 3
      %p439 = por %p437, %p438
      %p440 = scmp.ne.s32.totalorder %s431, %s432
      %p441 = scmp.eq.s32.totalorder %s43, 0
      %p442 = por %p440, %p441
      %p443 = scmp.ne.s32.totalorder %s431, %s432
      %p444 = scmp.eq.s32.totalorder %s44, 3
      %p445 = por %p443, %p444
      %p447 = scmp.ne.s32.totalorder %s432, %s446
      %p448 = scmp.eq.s32.totalorder %s44, 0
      %p449 = por %p447, %p448
      %s450 = ssub.s32 %s38, %s45
      %p451 = scmp.eq.s32.totalorder %s450, 0
      %s453 = sadd.s32 %s452, 1
      %s454 = scalar_select %p451, %s452, %s453
      %p457 = pneg %p451
      %p458 = scmp.eq.s32.totalorder %s38, 3
      %p459 = por %p457, %p458
      %p460 = scmp.ne.s32.totalorder %s452, %s455
      %p461 = scmp.eq.s32.totalorder %s38, 0
      %p462 = por %p460, %p461
      %p463 = scmp.ne.s32.totalorder %s452, %s455
      %p464 = scmp.eq.s32.totalorder %s43, 3
      %p465 = por %p463, %p464
      %p466 = scmp.ne.s32.totalorder %s455, %s456
      %p467 = scmp.eq.s32.totalorder %s43, 0
      %p468 = por %p466, %p467
      %p469 = scmp.ne.s32.totalorder %s455, %s456
      %p470 = scmp.eq.s32.totalorder %s44, 3
      %p471 = por %p469, %p470
      %p473 = scmp.ne.s32.totalorder %s456, %s472
      %p474 = scmp.eq.s32.totalorder %s44, 0
      %p475 = por %p473, %p474
      %p476 = scmp.le.s32.totalorder 1, %s38
      %p477 = scmp.lt.s32.totalorder %s38, 5
      %p478 = pnand %p476, %p477
      %p479 = pneg %p478
      // Predicated region
      $region9: #{tpu_custom_call.1} parent=5 // pred_check
        _
      $region10: #{tpu_custom_call.1} parent=5 // pred_check_branch
        %481 = sbr.rel (%p478) target = $region12
      $region11: #{tpu_custom_call.1} parent=5 // pred_region
        %s482 = ssub.s32 %s38, 1
        // Predicated region
        $region13: #{tpu_custom_call.1} parent=11 // pred_check
          %p483 = pneg %p85
        $region14: #{tpu_custom_call.1} parent=11 // pred_check_branch
          %485 = sbr.rel (%p483) target = $region16
        $region15: #{tpu_custom_call.1} parent=11 // pred_region
          %s487 = ssub.s32 128, 128
          %488 = vsyncadd [#allocation6], %s487
          %s490 = sshll.u32 [#allocation5], 4
          %s491 = int_to_ptr.vmem [resolvable:$true] %s490
          %493 = dma.hbm_to_vmem [thread:$0]  %s1, 128, %s491, [#allocation6]
        $region16: #{tpu_custom_call.1} parent=11 // pred_fallthru
          _
        // Predicated region
        $region17: #{tpu_custom_call.1} parent=11 // pred_check
          %p494 = pneg %p106
        $region18: #{tpu_custom_call.1} parent=11 // pred_check_branch
          %496 = sbr.rel (%p494) target = $region20
        $region19: #{tpu_custom_call.1} parent=11 // pred_region
          %s498 = ssub.s32 16, 16
          %499 = vsyncadd [#allocation6], %s498
          %s501 = sshll.u32 [#allocation7], 4
          %s502 = int_to_ptr.vmem [resolvable:$true] %s501
          %504 = dma.hbm_to_vmem [thread:$0]  %s2, 16, %s502, [#allocation6]
        $region20: #{tpu_custom_call.1} parent=11 // pred_fallthru
          _
        // Predicated region
        $region21: #{tpu_custom_call.1} parent=11 // pred_check
          %p505 = pneg %p127
        $region22: #{tpu_custom_call.1} parent=11 // pred_check_branch
          %507 = sbr.rel (%p505) target = $region24
        $region23: #{tpu_custom_call.1} parent=11 // pred_region
          _
        $region24: #{tpu_custom_call.1} parent=11 // pred_fallthru
          _
        // Predicated region
        $region25: #{tpu_custom_call.1} parent=11 // pred_check
          %p508 = pneg %p148
        $region26: #{tpu_custom_call.1} parent=11 // pred_check_branch
          %510 = sbr.rel (%p508) target = $region28
        $region27: #{tpu_custom_call.1} parent=11 // pred_region
          %s512 = ssub.s32 16, 16
          %513 = vsyncadd [#allocation9], %s512
          %s515 = sshll.u32 [#allocation8], 4
          %s516 = int_to_ptr.vmem [resolvable:$true] %s515
          %518 = dma.hbm_to_vmem [thread:$0]  %s4, 16, %s516, [#allocation9]
        $region28: #{tpu_custom_call.1} parent=11 // pred_fallthru
          _
        // Predicated region
        $region29: #{tpu_custom_call.1} parent=11 // pred_check
          %p519 = pneg %p169
        $region30: #{tpu_custom_call.1} parent=11 // pred_check_branch
          %521 = sbr.rel (%p519) target = $region32
        $region31: #{tpu_custom_call.1} parent=11 // pred_region
          %s523 = ssub.s32 128, 128
          %524 = vsyncadd [#allocation9], %s523
          %s526 = sshll.u32 [#allocation10], 4
          %s527 = int_to_ptr.vmem [resolvable:$true] %s526
          %529 = dma.hbm_to_vmem [thread:$0]  %s5, 128, %s527, [#allocation9]
        $region32: #{tpu_custom_call.1} parent=11 // pred_fallthru
          _
        // Predicated region
        $region33: #{tpu_custom_call.1} parent=11 // pred_check
          %p530 = pneg %p190
        $region34: #{tpu_custom_call.1} parent=11 // pred_check_branch
          %532 = sbr.rel (%p530) target = $region36
        $region35: #{tpu_custom_call.1} parent=11 // pred_region
          %s534 = ssub.s32 16, 16
          %535 = vsyncadd [#allocation12], %s534
          %s537 = sshll.u32 [#allocation11], 4
          %s538 = int_to_ptr.vmem [resolvable:$true] %s537
          %540 = dma.hbm_to_vmem [thread:$0]  %s6, 16, %s538, [#allocation12]
        $region36: #{tpu_custom_call.1} parent=11 // pred_fallthru
          _
        // Predicated region
        $region37: #{tpu_custom_call.1} parent=11 // pred_check
          %p541 = pneg %p211
        $region38: #{tpu_custom_call.1} parent=11 // pred_check_branch
          %543 = sbr.rel (%p541) target = $region40
        $region39: #{tpu_custom_call.1} parent=11 // pred_region
          %s545 = ssub.s32 1024, 1024
          %546 = vsyncadd [#allocation12], %s545
          %s547 = sshll.u32 [#allocation13], 4
          %s548 = int_to_ptr.vmem [resolvable:$true] %s547
          %553 = dma.hbm_to_vmem [thread:$0]  %s7, 1024, %s548, [#allocation12], 64, 64, 4
        $region40: #{tpu_custom_call.1} parent=11 // pred_fallthru
          _
        // Predicated region
        $region41: #{tpu_custom_call.1} parent=11 // pred_check
          %p554 = pneg %p232
        $region42: #{tpu_custom_call.1} parent=11 // pred_check_branch
          %556 = sbr.rel (%p554) target = $region44
        $region43: #{tpu_custom_call.1} parent=11 // pred_region
          %s558 = ssub.s32 16, 16
          %559 = vsyncadd [#allocation15], %s558
          %s561 = sshll.u32 [#allocation14], 4
          %s562 = int_to_ptr.vmem [resolvable:$true] %s561
          %564 = dma.hbm_to_vmem [thread:$0]  %s8, 16, %s562, [#allocation15]
        $region44: #{tpu_custom_call.1} parent=11 // pred_fallthru
          _
        // Predicated region
        $region45: #{tpu_custom_call.1} parent=11 // pred_check
          %p565 = pneg %p253
        $region46: #{tpu_custom_call.1} parent=11 // pred_check_branch
          %567 = sbr.rel (%p565) target = $region48
        $region47: #{tpu_custom_call.1} parent=11 // pred_region
          %s569 = ssub.s32 128, 128
          %570 = vsyncadd [#allocation15], %s569
          %s572 = sshll.u32 [#allocation16], 4
          %s573 = int_to_ptr.vmem [resolvable:$true] %s572
          %575 = dma.hbm_to_vmem [thread:$0]  %s9, 128, %s573, [#allocation15]
        $region48: #{tpu_custom_call.1} parent=11 // pred_fallthru
          _
        // Predicated region
        $region49: #{tpu_custom_call.1} parent=11 // pred_check
          %p576 = pneg %p274
        $region50: #{tpu_custom_call.1} parent=11 // pred_check_branch
          %578 = sbr.rel (%p576) target = $region52
        $region51: #{tpu_custom_call.1} parent=11 // pred_region
          %s580 = ssub.s32 16, 16
          %581 = vsyncadd [#allocation18], %s580
          %s583 = sshll.u32 [#allocation17], 4
          %s584 = int_to_ptr.vmem [resolvable:$true] %s583
          %586 = dma.hbm_to_vmem [thread:$0]  %s10, 16, %s584, [#allocation18]
        $region52: #{tpu_custom_call.1} parent=11 // pred_fallthru
          _
        // Predicated region
        $region53: #{tpu_custom_call.1} parent=11 // pred_check
          %p587 = pneg %p295
        $region54: #{tpu_custom_call.1} parent=11 // pred_check_branch
          %589 = sbr.rel (%p587) target = $region56
        $region55: #{tpu_custom_call.1} parent=11 // pred_region
          %s591 = ssub.s32 1024, 1024
          %592 = vsyncadd [#allocation18], %s591
          %s593 = sshll.u32 [#allocation19], 4
          %s594 = int_to_ptr.vmem [resolvable:$true] %s593
          %599 = dma.hbm_to_vmem [thread:$0]  %s11, 1024, %s594, [#allocation18], 64, 64, 4
        $region56: #{tpu_custom_call.1} parent=11 // pred_fallthru
          _
        // Predicated region
        $region57: #{tpu_custom_call.1} parent=11 // pred_check
          %p600 = pneg %p316
        $region58: #{tpu_custom_call.1} parent=11 // pred_check_branch
          %602 = sbr.rel (%p600) target = $region60
        $region59: #{tpu_custom_call.1} parent=11 // pred_region
          %s604 = ssub.s32 16, 16
          %605 = vsyncadd [#allocation21], %s604
          %s607 = sshll.u32 [#allocation20], 4
          %s608 = int_to_ptr.vmem [resolvable:$true] %s607
          %610 = dma.hbm_to_vmem [thread:$0]  %s12, 16, %s608, [#allocation21]
        $region60: #{tpu_custom_call.1} parent=11 // pred_fallthru
          _
        // Predicated region
        $region61: #{tpu_custom_call.1} parent=11 // pred_check
          %p611 = pneg %p337
        $region62: #{tpu_custom_call.1} parent=11 // pred_check_branch
          %613 = sbr.rel (%p611) target = $region64
        $region63: #{tpu_custom_call.1} parent=11 // pred_region
          _
        $region64: #{tpu_custom_call.1} parent=11 // pred_fallthru
          _
        // Predicated region
        $region65: #{tpu_custom_call.1} parent=11 // pred_check
          %p614 = pneg %p358
        $region66: #{tpu_custom_call.1} parent=11 // pred_check_branch
          %616 = sbr.rel (%p614) target = $region68
        $region67: #{tpu_custom_call.1} parent=11 // pred_region
          %s618 = ssub.s32 16, 16
          %619 = vsyncadd [#allocation21], %s618
          %s621 = sshll.u32 [#allocation22], 4
          %s622 = int_to_ptr.vmem [resolvable:$true] %s621
          %624 = dma.hbm_to_vmem [thread:$0]  %s14, 16, %s622, [#allocation21]
        $region68: #{tpu_custom_call.1} parent=11 // pred_fallthru
          _
        // Predicated region
        $region69: #{tpu_custom_call.1} parent=11 // pred_check
          %p625 = pneg %p379
        $region70: #{tpu_custom_call.1} parent=11 // pred_check_branch
          %627 = sbr.rel (%p625) target = $region72
        $region71: #{tpu_custom_call.1} parent=11 // pred_region
          %s629 = ssub.s32 128, 128
          %630 = vsyncadd [#allocation24], %s629
          %s631 = sshll.u32 [#allocation23], 4
          %s632 = int_to_ptr.vmem [resolvable:$true] %s631
          %637 = dma.hbm_to_vmem [thread:$0]  %s15, 128, %s632, [#allocation24], 64, 64, 4
        $region72: #{tpu_custom_call.1} parent=11 // pred_fallthru
          _
        // Predicated region
        $region73: #{tpu_custom_call.1} parent=11 // pred_check
          %p638 = pneg %p400
        $region74: #{tpu_custom_call.1} parent=11 // pred_check_branch
          %640 = sbr.rel (%p638) target = $region76
        $region75: #{tpu_custom_call.1} parent=11 // pred_region
          _
        $region76: #{tpu_custom_call.1} parent=11 // pred_fallthru
          _
        // Predicated region
        $region77: #{tpu_custom_call.1} parent=11 // pred_check
          %p641 = pneg %p421
        $region78: #{tpu_custom_call.1} parent=11 // pred_check_branch
          %643 = sbr.rel (%p641) target = $region80
        $region79: #{tpu_custom_call.1} parent=11 // pred_region
          _
        $region80: #{tpu_custom_call.1} parent=11 // pred_fallthru
          _
        // Predicated region
        $region81: #{tpu_custom_call.1} parent=11 // pred_check
          %p644 = pneg %p442
        $region82: #{tpu_custom_call.1} parent=11 // pred_check_branch
          %646 = sbr.rel (%p644) target = $region84
        $region83: #{tpu_custom_call.1} parent=11 // pred_region
          _
        $region84: #{tpu_custom_call.1} parent=11 // pred_fallthru
          _
      $region12: #{tpu_custom_call.1} parent=5 // pred_fallthru
        _
      %p647 = scmp.lt.s32.totalorder %s38, 4
      // Predicated region
      $region85: #{tpu_custom_call.1} parent=5 // pred_check
        %p648 = pneg %p647
      $region86: #{tpu_custom_call.1} parent=5 // pred_check_branch
        %650 = sbr.rel (%p648) target = $region88
      $region87: #{tpu_custom_call.1} parent=5 // pred_region
        // Predicated region
        $region89: #{tpu_custom_call.1} parent=87 // pred_check
          %p651 = pneg %p58
        $region90: #{tpu_custom_call.1} parent=87 // pred_check_branch
          %653 = sbr.rel (%p651) target = $region92
        $region91: #{tpu_custom_call.1} parent=87 // pred_region
          %s654 = sand.u32 %s48, 1
          %s655 = scalar_lea.sflag [#allocation3], %s654
          %s656 = sand.u32 %s48, 1
          %s657 = smul.addr %s656, 128
          %s658 = scalar_lea.vmem [#allocation2], %s657
          %s660 = ssub.s32 2048, 2048
          %661 = vsyncadd %s655, %s660
          %s662 = smul.addr %s38, 16
          %s663 = smul.addr %s662, 128
          %s664 = scalar_lea.hbm %s0, %s663
          %s665 = sshll.u32 %s658, 4
          %s666 = int_to_ptr.vmem [resolvable:$true] %s665
          %671 = dma.hbm_to_vmem [thread:$0]  %s664, 2048, %s666, %s655, 128, 128, 8
        $region92: #{tpu_custom_call.1} parent=87 // pred_fallthru
          _
      $region88: #{tpu_custom_call.1} parent=5 // pred_fallthru
        _
      %p672 = scmp.le.s32.totalorder 1, %s38
      %p673 = scmp.lt.s32.totalorder %s38, 5
      %p674 = pnand %p672, %p673
      %p675 = pneg %p674
      // Predicated region
      $region93: #{tpu_custom_call.1} parent=5 // pred_check
        _
      $region94: #{tpu_custom_call.1} parent=5 // pred_check_branch
        %677 = sbr.rel (%p674) target = $region96
      $region95: #{tpu_custom_call.1} parent=5 // pred_region
        %s678 = ssub.s32 %s38, 1
        %s679 = sand.u32 %s51, 1
        %s680 = scalar_lea.sflag [#allocation3], %s679
        %s681 = sand.u32 %s51, 1
        %s682 = smul.addr %s681, 128
        %s683 = scalar_lea.vmem [#allocation2], %s682
        // Predicated region
        $region97: #{tpu_custom_call.1} parent=95 // pred_check
          %p684 = pneg %p64
        $region98: #{tpu_custom_call.1} parent=95 // pred_check_branch
          %686 = sbr.rel (%p684) target = $region100
        $region99: #{tpu_custom_call.1} parent=95 // pred_region
          %687 = dma.done %s680, 2048
        $region100: #{tpu_custom_call.1} parent=95 // pred_fallthru
          _
        // Predicated region
        $region101: #{tpu_custom_call.1} parent=95 // pred_check
          %p688 = pneg %p85
        $region102: #{tpu_custom_call.1} parent=95 // pred_check_branch
          %690 = sbr.rel (%p688) target = $region104
        $region103: #{tpu_custom_call.1} parent=95 // pred_region
          %691 = dma.done [#allocation6], 128
        $region104: #{tpu_custom_call.1} parent=95 // pred_fallthru
          _
        // Predicated region
        $region105: #{tpu_custom_call.1} parent=95 // pred_check
          %p692 = pneg %p106
        $region106: #{tpu_custom_call.1} parent=95 // pred_check_branch
          %694 = sbr.rel (%p692) target = $region108
        $region107: #{tpu_custom_call.1} parent=95 // pred_region
          %695 = dma.done [#allocation6], 16
        $region108: #{tpu_custom_call.1} parent=95 // pred_fallthru
          _
        // Predicated region
        $region109: #{tpu_custom_call.1} parent=95 // pred_check
          %p696 = pneg %p148
        $region110: #{tpu_custom_call.1} parent=95 // pred_check_branch
          %698 = sbr.rel (%p696) target = $region112
        $region111: #{tpu_custom_call.1} parent=95 // pred_region
          %699 = dma.done [#allocation9], 16
        $region112: #{tpu_custom_call.1} parent=95 // pred_fallthru
          _
        // Predicated region
        $region113: #{tpu_custom_call.1} parent=95 // pred_check
          %p700 = pneg %p169
        $region114: #{tpu_custom_call.1} parent=95 // pred_check_branch
          %702 = sbr.rel (%p700) target = $region116
        $region115: #{tpu_custom_call.1} parent=95 // pred_region
          %703 = dma.done [#allocation9], 128
        $region116: #{tpu_custom_call.1} parent=95 // pred_fallthru
          _
        // Predicated region
        $region117: #{tpu_custom_call.1} parent=95 // pred_check
          %p704 = pneg %p190
        $region118: #{tpu_custom_call.1} parent=95 // pred_check_branch
          %706 = sbr.rel (%p704) target = $region120
        $region119: #{tpu_custom_call.1} parent=95 // pred_region
          %707 = dma.done [#allocation12], 16
        $region120: #{tpu_custom_call.1} parent=95 // pred_fallthru
          _
        // Predicated region
        $region121: #{tpu_custom_call.1} parent=95 // pred_check
          %p708 = pneg %p211
        $region122: #{tpu_custom_call.1} parent=95 // pred_check_branch
          %710 = sbr.rel (%p708) target = $region124
        $region123: #{tpu_custom_call.1} parent=95 // pred_region
          %711 = dma.done [#allocation12], 1024
        $region124: #{tpu_custom_call.1} parent=95 // pred_fallthru
          _
        // Predicated region
        $region125: #{tpu_custom_call.1} parent=95 // pred_check
          %p712 = pneg %p232
        $region126: #{tpu_custom_call.1} parent=95 // pred_check_branch
          %714 = sbr.rel (%p712) target = $region128
        $region127: #{tpu_custom_call.1} parent=95 // pred_region
          %715 = dma.done [#allocation15], 16
        $region128: #{tpu_custom_call.1} parent=95 // pred_fallthru
          _
        // Predicated region
        $region129: #{tpu_custom_call.1} parent=95 // pred_check
          %p716 = pneg %p253
        $region130: #{tpu_custom_call.1} parent=95 // pred_check_branch
          %718 = sbr.rel (%p716) target = $region132
        $region131: #{tpu_custom_call.1} parent=95 // pred_region
          %719 = dma.done [#allocation15], 128
        $region132: #{tpu_custom_call.1} parent=95 // pred_fallthru
          _
        // Predicated region
        $region133: #{tpu_custom_call.1} parent=95 // pred_check
          %p720 = pneg %p274
        $region134: #{tpu_custom_call.1} parent=95 // pred_check_branch
          %722 = sbr.rel (%p720) target = $region136
        $region135: #{tpu_custom_call.1} parent=95 // pred_region
          %723 = dma.done [#allocation18], 16
        $region136: #{tpu_custom_call.1} parent=95 // pred_fallthru
          _
        // Predicated region
        $region137: #{tpu_custom_call.1} parent=95 // pred_check
          %p724 = pneg %p295
        $region138: #{tpu_custom_call.1} parent=95 // pred_check_branch
          %726 = sbr.rel (%p724) target = $region140
        $region139: #{tpu_custom_call.1} parent=95 // pred_region
          %727 = dma.done [#allocation18], 1024
        $region140: #{tpu_custom_call.1} parent=95 // pred_fallthru
          _
        // Predicated region
        $region141: #{tpu_custom_call.1} parent=95 // pred_check
          %p728 = pneg %p316
        $region142: #{tpu_custom_call.1} parent=95 // pred_check_branch
          %730 = sbr.rel (%p728) target = $region144
        $region143: #{tpu_custom_call.1} parent=95 // pred_region
          %731 = dma.done [#allocation21], 16
        $region144: #{tpu_custom_call.1} parent=95 // pred_fallthru
          _
        // Predicated region
        $region145: #{tpu_custom_call.1} parent=95 // pred_check
          %p732 = pneg %p358
        $region146: #{tpu_custom_call.1} parent=95 // pred_check_branch
          %734 = sbr.rel (%p732) target = $region148
        $region147: #{tpu_custom_call.1} parent=95 // pred_region
          %735 = dma.done [#allocation21], 16
        $region148: #{tpu_custom_call.1} parent=95 // pred_fallthru
          _
        // Predicated region
        $region149: #{tpu_custom_call.1} parent=95 // pred_check
          %p736 = pneg %p379
        $region150: #{tpu_custom_call.1} parent=95 // pred_check_branch
          %738 = sbr.rel (%p736) target = $region152
        $region151: #{tpu_custom_call.1} parent=95 // pred_region
          %739 = dma.done [#allocation24], 128
        $region152: #{tpu_custom_call.1} parent=95 // pred_fallthru
          _
        %s740 = sand.u32 %s51, 1
        %s741 = scalar_lea.sflag [#allocation3], %s740
        %s742 = sand.u32 %s51, 1
        %s743 = smul.addr %s742, 128
        %s744 = scalar_lea.vmem [#allocation2], %s743
        %p745 = pneg %p64
        %p746 = pneg %p61
        %p747 = pneg %p85
        %p748 = pneg %p82
        %p749 = pneg %p106
        %p750 = pneg %p103
        %p751 = pneg %p127
        %p752 = pneg %p124
        %p753 = pneg %p148
        %p754 = pneg %p145
        %p755 = pneg %p169
        %p756 = pneg %p166
        %p757 = pneg %p190
        %p758 = pneg %p187
        %p759 = pneg %p211
        %p760 = pneg %p208
        %p761 = pneg %p232
        %p762 = pneg %p229
        %p763 = pneg %p253
        %p764 = pneg %p250
        %p765 = pneg %p274
        %p766 = pneg %p271
        %p767 = pneg %p295
        %p768 = pneg %p292
        %p769 = pneg %p316
        %p770 = pneg %p313
        %p771 = pneg %p337
        %p772 = pneg %p334
        %p773 = pneg %p358
        %p774 = pneg %p355
        %p775 = pneg %p379
        %p776 = pneg %p376
        %p777 = pneg %p400
        %p778 = pneg %p397
        %p779 = pneg %p421
        %p780 = pneg %p418
        %p781 = pneg %p442
        %p782 = pneg %p439
        %p783 = pneg %p468
        %p784 = pneg %p465
        %s785 = sand.u32 %s455, 1
        %s786 = scalar_lea.sflag [#allocation4], %s785
        %s787 = sand.u32 %s455, 1
        %s788 = smul.addr %s787, 128
        %s789 = scalar_lea.vmem [#allocation25], %s788
        %v791 = vld [vmem:[#allocation5] sm:$0x1f]
        %v792 = vld [vmem:[#allocation7] sm:$0x1]
        %v793 = vld [vmem:[%s3] sm:$0xf]
        %v794 = vld [vmem:[%s3 + $0x4] sm:$0xf]
        %v795 = vld [vmem:[%s3 + $0x8] sm:$0xf]
        %v796 = vld [vmem:[%s3 + $0xc] sm:$0xf]
        %v797 = vld [vmem:[%s3 + $0x10] sm:$0xf]
        %v798 = vld [vmem:[%s3 + $0x14] sm:$0xf]
        %v799 = vld [vmem:[%s3 + $0x18] sm:$0xf]
        %v800 = vld [vmem:[%s3 + $0x1c] sm:$0xf]
        %v801 = vld [vmem:[%s3 + $0x20] sm:$0xf]
        %v802 = vld [vmem:[%s3 + $0x24] sm:$0xf]
        %v803 = vld [vmem:[%s3 + $0x28] sm:$0xf]
        %v804 = vld [vmem:[%s3 + $0x2c] sm:$0xf]
        %v805 = vld [vmem:[%s3 + $0x30] sm:$0xf]
        %v806 = vld [vmem:[%s3 + $0x34] sm:$0xf]
        %v807 = vld [vmem:[%s3 + $0x38] sm:$0xf]
        %v808 = vld [vmem:[%s3 + $0x3c] sm:$0xf]
        %v809 = vld [vmem:[#allocation8] sm:$0x1]
        %v810 = vld [vmem:[#allocation10] sm:$0x1f]
        %v811 = vld [vmem:[#allocation11] sm:$0x1]
        %v812 = vld [vmem:[#allocation13] sm:$0xf]
        %v813 = vld [vmem:[#allocation13 + $0x4] sm:$0xf]
        %v814 = vld [vmem:[#allocation13 + $0x8] sm:$0xf]
        %v815 = vld [vmem:[#allocation13 + $0xc] sm:$0xf]
        %v816 = vld [vmem:[#allocation13 + $0x10] sm:$0xf]
        %v817 = vld [vmem:[#allocation13 + $0x14] sm:$0xf]
        %v818 = vld [vmem:[#allocation13 + $0x18] sm:$0xf]
        %v819 = vld [vmem:[#allocation13 + $0x1c] sm:$0xf]
        %v820 = vld [vmem:[#allocation13 + $0x20] sm:$0xf]
        %v821 = vld [vmem:[#allocation13 + $0x24] sm:$0xf]
        %v822 = vld [vmem:[#allocation13 + $0x28] sm:$0xf]
        %v823 = vld [vmem:[#allocation13 + $0x2c] sm:$0xf]
        %v824 = vld [vmem:[#allocation13 + $0x30] sm:$0xf]
        %v825 = vld [vmem:[#allocation13 + $0x34] sm:$0xf]
        %v826 = vld [vmem:[#allocation13 + $0x38] sm:$0xf]
        %v827 = vld [vmem:[#allocation13 + $0x3c] sm:$0xf]
        %v828 = vld [vmem:[#allocation14] sm:$0x1]
        %v829 = vld [vmem:[#allocation16] sm:$0x1f]
        %v830 = vld [vmem:[#allocation17] sm:$0x1]
        %v831 = vld [vmem:[#allocation19] sm:$0xf]
        %v832 = vld [vmem:[#allocation19 + $0x4] sm:$0xf]
        %v833 = vld [vmem:[#allocation19 + $0x8] sm:$0xf]
        %v834 = vld [vmem:[#allocation19 + $0xc] sm:$0xf]
        %v835 = vld [vmem:[#allocation19 + $0x10] sm:$0xf]
        %v836 = vld [vmem:[#allocation19 + $0x14] sm:$0xf]
        %v837 = vld [vmem:[#allocation19 + $0x18] sm:$0xf]
        %v838 = vld [vmem:[#allocation19 + $0x1c] sm:$0xf]
        %v839 = vld [vmem:[#allocation19 + $0x20] sm:$0xf]
        %v840 = vld [vmem:[#allocation19 + $0x24] sm:$0xf]
        %v841 = vld [vmem:[#allocation19 + $0x28] sm:$0xf]
        %v842 = vld [vmem:[#allocation19 + $0x2c] sm:$0xf]
        %v843 = vld [vmem:[#allocation19 + $0x30] sm:$0xf]
        %v844 = vld [vmem:[#allocation19 + $0x34] sm:$0xf]
        %v845 = vld [vmem:[#allocation19 + $0x38] sm:$0xf]
        %v846 = vld [vmem:[#allocation19 + $0x3c] sm:$0xf]
        %v847 = vld [vmem:[#allocation20] sm:$0x1]
        %v848 = vld [vmem:[%s13] sm:$0xf]
        %v849 = vld [vmem:[%s13 + $0x4] sm:$0xf]
        %v850 = vld [vmem:[%s13 + $0x8] sm:$0xf]
        %v851 = vld [vmem:[%s13 + $0xc] sm:$0xf]
        %v852 = vld [vmem:[%s13 + $0x10] sm:$0xf]
        %v853 = vld [vmem:[%s13 + $0x14] sm:$0xf]
        %v854 = vld [vmem:[%s13 + $0x18] sm:$0xf]
        %v855 = vld [vmem:[%s13 + $0x1c] sm:$0xf]
        %v856 = vld [vmem:[%s13 + $0x20] sm:$0xf]
        %v857 = vld [vmem:[%s13 + $0x24] sm:$0xf]
        %v858 = vld [vmem:[%s13 + $0x28] sm:$0xf]
        %v859 = vld [vmem:[%s13 + $0x2c] sm:$0xf]
        %v860 = vld [vmem:[%s13 + $0x30] sm:$0xf]
        %v861 = vld [vmem:[%s13 + $0x34] sm:$0xf]
        %v862 = vld [vmem:[%s13 + $0x38] sm:$0xf]
        %v863 = vld [vmem:[%s13 + $0x3c] sm:$0xf]
        %v864 = vld [vmem:[#allocation22] sm:$0x1]
        %v865 = vld [vmem:[#allocation23] sm:$0xf]
        %v866 = vld [vmem:[#allocation23 + $0x4] sm:$0xf]
        %v867 = vld [vmem:[%s16] sm:$0x1]
        %v868 = vld [vmem:[%s17] sm:$0xf]
        %v869 = vld [vmem:[%s17 + $0x4] sm:$0xf]
        %v870 = vld [vmem:[%s17 + $0x8] sm:$0xf]
        %v871 = vld [vmem:[%s17 + $0xc] sm:$0xf]
        %v872 = vld [vmem:[%s17 + $0x10] sm:$0xf]
        %v873 = vld [vmem:[%s17 + $0x14] sm:$0xf]
        %v874 = vld [vmem:[%s17 + $0x18] sm:$0xf]
        %v875 = vld [vmem:[%s17 + $0x1c] sm:$0xf]
        %v876 = vld [vmem:[%s17 + $0x20] sm:$0xf]
        %v877 = vld [vmem:[%s17 + $0x24] sm:$0xf]
        %v878 = vld [vmem:[%s17 + $0x28] sm:$0xf]
        %v879 = vld [vmem:[%s17 + $0x2c] sm:$0xf]
        %v880 = vld [vmem:[%s17 + $0x30] sm:$0xf]
        %v881 = vld [vmem:[%s17 + $0x34] sm:$0xf]
        %v882 = vld [vmem:[%s17 + $0x38] sm:$0xf]
        %v883 = vld [vmem:[%s17 + $0x3c] sm:$0xf]
        %v884 = vld [vmem:[%s18] sm:$0x1]
        %v885 = vld [vmem:[%s683] sm:$0xff]
        %v886 = vld [vmem:[%s683 + $0x8] sm:$0xff]
        %v887 = vld [vmem:[%s683 + $0x10] sm:$0xff]
        %v888 = vld [vmem:[%s683 + $0x18] sm:$0xff]
        %v889 = vld [vmem:[%s683 + $0x20] sm:$0xff]
        %v890 = vld [vmem:[%s683 + $0x28] sm:$0xff]
        %v891 = vld [vmem:[%s683 + $0x30] sm:$0xff]
        %v892 = vld [vmem:[%s683 + $0x38] sm:$0xff]
        %v893 = vld [vmem:[%s683 + $0x40] sm:$0xff]
        %v894 = vld [vmem:[%s683 + $0x48] sm:$0xff]
        %v895 = vld [vmem:[%s683 + $0x50] sm:$0xff]
        %v896 = vld [vmem:[%s683 + $0x58] sm:$0xff]
        %v897 = vld [vmem:[%s683 + $0x60] sm:$0xff]
        %v898 = vld [vmem:[%s683 + $0x68] sm:$0xff]
        %v899 = vld [vmem:[%s683 + $0x70] sm:$0xff]
        %v900 = vld [vmem:[%s683 + $0x78] sm:$0xff]
        %v901 = vlaneseq
        %v902 = vshrl.u32 %v901, 7
        %v903 = vadd.s32 %v902, 8
        %v904 = vadd.s32 %v902, 16
        %v905 = vadd.s32 %v902, 24
        %v906 = vadd.s32 %v902, 32
        %v907 = vadd.s32 %v902, 40
        %v908 = vadd.s32 %v902, 48
        %v909 = vadd.s32 %v902, 56
        %v910 = vadd.s32 %v902, 64
        %v911 = vadd.s32 %v902, 72
        %v912 = vadd.s32 %v902, 80
        %v913 = vadd.s32 %v902, 88
        %v914 = vadd.s32 %v902, 96
        %v915 = vadd.s32 %v902, 104
        %v916 = vadd.s32 %v902, 112
        %v917 = vadd.s32 %v902, 120
        %v918 = vlaneseq
        %v919 = vshrl.u32 %v918, 7
        %v920 = vsub.s32 2, %v919
        %v921 = vrot.slane %v791, %v920
        %v922 = vmul.f32 %v885, %v921
        %v923 = vmul.f32 %v886, %v921
        %v924 = vmul.f32 %v887, %v921
        %v925 = vmul.f32 %v888, %v921
        %v926 = vmul.f32 %v889, %v921
        %v927 = vmul.f32 %v890, %v921
        %v928 = vmul.f32 %v891, %v921
        %v929 = vmul.f32 %v892, %v921
        %v930 = vmul.f32 %v893, %v921
        %v931 = vmul.f32 %v894, %v921
        %v932 = vmul.f32 %v895, %v921
        %v933 = vmul.f32 %v896, %v921
        %v934 = vmul.f32 %v897, %v921
        %v935 = vmul.f32 %v898, %v921
        %v936 = vmul.f32 %v899, %v921
        %v937 = vmul.f32 %v900, %v921
        %v938 = vrot.slane %v885, 6
        %v939 = vrot.slane %v886, 6
        %v940 = vrot.slane %v887, 6
        %v941 = vrot.slane %v888, 6
        %v942 = vrot.slane %v889, 6
        %v943 = vrot.slane %v890, 6
        %v944 = vrot.slane %v891, 6
        %v945 = vrot.slane %v892, 6
        %v946 = vrot.slane %v893, 6
        %v947 = vrot.slane %v894, 6
        %v948 = vrot.slane %v895, 6
        %v949 = vrot.slane %v896, 6
        %v950 = vrot.slane %v897, 6
        %v951 = vrot.slane %v898, 6
        %v952 = vrot.slane %v899, 6
        %v953 = vrot.slane %v900, 6
        %vm954 = vcmp.lt.s32.totalorder %v902, 2
        %v955 = vsel %vm954, %v952, %v953
        %v956 = vsel %vm954, %v951, %v952
        %v957 = vsel %vm954, %v950, %v951
        %v958 = vsel %vm954, %v949, %v950
        %v959 = vsel %vm954, %v948, %v949
        %v960 = vsel %vm954, %v947, %v948
        %v961 = vsel %vm954, %v946, %v947
        %v962 = vsel %vm954, %v945, %v946
        %v963 = vsel %vm954, %v944, %v945
        %v964 = vsel %vm954, %v943, %v944
        %v965 = vsel %vm954, %v942, %v943
        %v966 = vsel %vm954, %v941, %v942
        %v967 = vsel %vm954, %v940, %v941
        %v968 = vsel %vm954, %v939, %v940
        %v969 = vsel %vm954, %v938, %v939
        %v970 = vsel %vm954, %v953, %v938
        %vm971 = vcmp.ge.s32.totalorder %v902, 2
        %vm972 = vcmp.ge.s32.totalorder %v903, 2
        %vm973 = vcmp.ge.s32.totalorder %v904, 2
        %vm974 = vcmp.ge.s32.totalorder %v905, 2
        %vm975 = vcmp.ge.s32.totalorder %v906, 2
        %vm976 = vcmp.ge.s32.totalorder %v907, 2
        %vm977 = vcmp.ge.s32.totalorder %v908, 2
        %vm978 = vcmp.ge.s32.totalorder %v909, 2
        %vm979 = vcmp.ge.s32.totalorder %v910, 2
        %vm980 = vcmp.ge.s32.totalorder %v911, 2
        %vm981 = vcmp.ge.s32.totalorder %v912, 2
        %vm982 = vcmp.ge.s32.totalorder %v913, 2
        %vm983 = vcmp.ge.s32.totalorder %v914, 2
        %vm984 = vcmp.ge.s32.totalorder %v915, 2
        %vm985 = vcmp.ge.s32.totalorder %v916, 2
        %vm986 = vcmp.ge.s32.totalorder %v917, 2
        %vm987 = vcmp.lt.s32.totalorder %v902, 128
        %vm988 = vcmp.lt.s32.totalorder %v903, 128
        %vm989 = vcmp.lt.s32.totalorder %v904, 128
        %vm990 = vcmp.lt.s32.totalorder %v905, 128
        %vm991 = vcmp.lt.s32.totalorder %v906, 128
        %vm992 = vcmp.lt.s32.totalorder %v907, 128
        %vm993 = vcmp.lt.s32.totalorder %v908, 128
        %vm994 = vcmp.lt.s32.totalorder %v909, 128
        %vm995 = vcmp.lt.s32.totalorder %v910, 128
        %vm996 = vcmp.lt.s32.totalorder %v911, 128
        %vm997 = vcmp.lt.s32.totalorder %v912, 128
        %vm998 = vcmp.lt.s32.totalorder %v913, 128
        %vm999 = vcmp.lt.s32.totalorder %v914, 128
        %vm1000 = vcmp.lt.s32.totalorder %v915, 128
        %vm1001 = vcmp.lt.s32.totalorder %v916, 128
        %vm1002 = vcmp.lt.s32.totalorder %v917, 128
        %vm1003 = vmand %vm971, %vm987
        %vm1004 = vmand %vm972, %vm988
        %vm1005 = vmand %vm973, %vm989
        %vm1006 = vmand %vm974, %vm990
        %vm1007 = vmand %vm975, %vm991
        %vm1008 = vmand %vm976, %vm992
        %vm1009 = vmand %vm977, %vm993
        %vm1010 = vmand %vm978, %vm994
        %vm1011 = vmand %vm979, %vm995
        %vm1012 = vmand %vm980, %vm996
        %vm1013 = vmand %vm981, %vm997
        %vm1014 = vmand %vm982, %vm998
        %vm1015 = vmand %vm983, %vm999
        %vm1016 = vmand %vm984, %vm1000
        %vm1017 = vmand %vm985, %vm1001
        %vm1018 = vmand %vm986, %vm1002
        %v1019 = vsel %vm1003, %v970, 0.0
        %v1020 = vsel %vm1004, %v969, 0.0
        %v1021 = vsel %vm1005, %v968, 0.0
        %v1022 = vsel %vm1006, %v967, 0.0
        %v1023 = vsel %vm1007, %v966, 0.0
        %v1024 = vsel %vm1008, %v965, 0.0
        %v1025 = vsel %vm1009, %v964, 0.0
        %v1026 = vsel %vm1010, %v963, 0.0
        %v1027 = vsel %vm1011, %v962, 0.0
        %v1028 = vsel %vm1012, %v961, 0.0
        %v1029 = vsel %vm1013, %v960, 0.0
        %v1030 = vsel %vm1014, %v959, 0.0
        %v1031 = vsel %vm1015, %v958, 0.0
        %v1032 = vsel %vm1016, %v957, 0.0
        %v1033 = vsel %vm1017, %v956, 0.0
        %v1034 = vsel %vm1018, %v955, 0.0
        %v1035 = vlaneseq
        %v1036 = vshrl.u32 %v1035, 7
        %v1037 = vsub.s32 0, %v1036
        %v1038 = vrot.slane %v791, %v1037
        %v1039 = vmul.f32 %v1019, %v1038
        %v1040 = vmul.f32 %v1020, %v1038
        %v1041 = vmul.f32 %v1021, %v1038
        %v1042 = vmul.f32 %v1022, %v1038
        %v1043 = vmul.f32 %v1023, %v1038
        %v1044 = vmul.f32 %v1024, %v1038
        %v1045 = vmul.f32 %v1025, %v1038
        %v1046 = vmul.f32 %v1026, %v1038
        %v1047 = vmul.f32 %v1027, %v1038
        %v1048 = vmul.f32 %v1028, %v1038
        %v1049 = vmul.f32 %v1029, %v1038
        %v1050 = vmul.f32 %v1030, %v1038
        %v1051 = vmul.f32 %v1031, %v1038
        %v1052 = vmul.f32 %v1032, %v1038
        %v1053 = vmul.f32 %v1033, %v1038
        %v1054 = vmul.f32 %v1034, %v1038
        %v1055 = vadd.f32 %v922, %v1039
        %v1056 = vadd.f32 %v923, %v1040
        %v1057 = vadd.f32 %v924, %v1041
        %v1058 = vadd.f32 %v925, %v1042
        %v1059 = vadd.f32 %v926, %v1043
        %v1060 = vadd.f32 %v927, %v1044
        %v1061 = vadd.f32 %v928, %v1045
        %v1062 = vadd.f32 %v929, %v1046
        %v1063 = vadd.f32 %v930, %v1047
        %v1064 = vadd.f32 %v931, %v1048
        %v1065 = vadd.f32 %v932, %v1049
        %v1066 = vadd.f32 %v933, %v1050
        %v1067 = vadd.f32 %v934, %v1051
        %v1068 = vadd.f32 %v935, %v1052
        %v1069 = vadd.f32 %v936, %v1053
        %v1070 = vadd.f32 %v937, %v1054
        %v1071 = vrot.slane %v885, 7
        %v1072 = vrot.slane %v886, 7
        %v1073 = vrot.slane %v887, 7
        %v1074 = vrot.slane %v888, 7
        %v1075 = vrot.slane %v889, 7
        %v1076 = vrot.slane %v890, 7
        %v1077 = vrot.slane %v891, 7
        %v1078 = vrot.slane %v892, 7
        %v1079 = vrot.slane %v893, 7
        %v1080 = vrot.slane %v894, 7
        %v1081 = vrot.slane %v895, 7
        %v1082 = vrot.slane %v896, 7
        %v1083 = vrot.slane %v897, 7
        %v1084 = vrot.slane %v898, 7
        %v1085 = vrot.slane %v899, 7
        %v1086 = vrot.slane %v900, 7
        %vm1087 = vcmp.lt.s32.totalorder %v902, 1
        %v1088 = vsel %vm1087, %v1085, %v1086
        %v1089 = vsel %vm1087, %v1084, %v1085
        %v1090 = vsel %vm1087, %v1083, %v1084
        %v1091 = vsel %vm1087, %v1082, %v1083
        %v1092 = vsel %vm1087, %v1081, %v1082
        %v1093 = vsel %vm1087, %v1080, %v1081
        %v1094 = vsel %vm1087, %v1079, %v1080
        %v1095 = vsel %vm1087, %v1078, %v1079
        %v1096 = vsel %vm1087, %v1077, %v1078
        %v1097 = vsel %vm1087, %v1076, %v1077
        %v1098 = vsel %vm1087, %v1075, %v1076
        %v1099 = vsel %vm1087, %v1074, %v1075
        %v1100 = vsel %vm1087, %v1073, %v1074
        %v1101 = vsel %vm1087, %v1072, %v1073
        %v1102 = vsel %vm1087, %v1071, %v1072
        %v1103 = vsel %vm1087, %v1086, %v1071
        %vm1104 = vcmp.ge.s32.totalorder %v902, 1
        %vm1105 = vcmp.ge.s32.totalorder %v903, 1
        %vm1106 = vcmp.ge.s32.totalorder %v904, 1
        %vm1107 = vcmp.ge.s32.totalorder %v905, 1
        %vm1108 = vcmp.ge.s32.totalorder %v906, 1
        %vm1109 = vcmp.ge.s32.totalorder %v907, 1
        %vm1110 = vcmp.ge.s32.totalorder %v908, 1
        %vm1111 = vcmp.ge.s32.totalorder %v909, 1
        %vm1112 = vcmp.ge.s32.totalorder %v910, 1
        %vm1113 = vcmp.ge.s32.totalorder %v911, 1
        %vm1114 = vcmp.ge.s32.totalorder %v912, 1
        %vm1115 = vcmp.ge.s32.totalorder %v913, 1
        %vm1116 = vcmp.ge.s32.totalorder %v914, 1
        %vm1117 = vcmp.ge.s32.totalorder %v915, 1
        %vm1118 = vcmp.ge.s32.totalorder %v916, 1
        %vm1119 = vcmp.ge.s32.totalorder %v917, 1
        %vm1120 = vmand %vm1104, %vm987
        %vm1121 = vmand %vm1105, %vm988
        %vm1122 = vmand %vm1106, %vm989
        %vm1123 = vmand %vm1107, %vm990
        %vm1124 = vmand %vm1108, %vm991
        %vm1125 = vmand %vm1109, %vm992
        %vm1126 = vmand %vm1110, %vm993
        %vm1127 = vmand %vm1111, %vm994
        %vm1128 = vmand %vm1112, %vm995
        %vm1129 = vmand %vm1113, %vm996
        %vm1130 = vmand %vm1114, %vm997
        %vm1131 = vmand %vm1115, %vm998
        %vm1132 = vmand %vm1116, %vm999
        %vm1133 = vmand %vm1117, %vm1000
        %vm1134 = vmand %vm1118, %vm1001
        %vm1135 = vmand %vm1119, %vm1002
        %v1136 = vsel %vm1120, %v1103, 0.0
        %v1137 = vsel %vm1121, %v1102, 0.0
        %v1138 = vsel %vm1122, %v1101, 0.0
        %v1139 = vsel %vm1123, %v1100, 0.0
        %v1140 = vsel %vm1124, %v1099, 0.0
        %v1141 = vsel %vm1125, %v1098, 0.0
        %v1142 = vsel %vm1126, %v1097, 0.0
        %v1143 = vsel %vm1127, %v1096, 0.0
        %v1144 = vsel %vm1128, %v1095, 0.0
        %v1145 = vsel %vm1129, %v1094, 0.0
        %v1146 = vsel %vm1130, %v1093, 0.0
        %v1147 = vsel %vm1131, %v1092, 0.0
        %v1148 = vsel %vm1132, %v1091, 0.0
        %v1149 = vsel %vm1133, %v1090, 0.0
        %v1150 = vsel %vm1134, %v1089, 0.0
        %v1151 = vsel %vm1135, %v1088, 0.0
        %v1152 = vlaneseq
        %v1153 = vshrl.u32 %v1152, 7
        %v1154 = vsub.s32 1, %v1153
        %v1155 = vrot.slane %v791, %v1154
        %v1156 = vmul.f32 %v1136, %v1155
        %v1157 = vmul.f32 %v1137, %v1155
        %v1158 = vmul.f32 %v1138, %v1155
        %v1159 = vmul.f32 %v1139, %v1155
        %v1160 = vmul.f32 %v1140, %v1155
        %v1161 = vmul.f32 %v1141, %v1155
        %v1162 = vmul.f32 %v1142, %v1155
        %v1163 = vmul.f32 %v1143, %v1155
        %v1164 = vmul.f32 %v1144, %v1155
        %v1165 = vmul.f32 %v1145, %v1155
        %v1166 = vmul.f32 %v1146, %v1155
        %v1167 = vmul.f32 %v1147, %v1155
        %v1168 = vmul.f32 %v1148, %v1155
        %v1169 = vmul.f32 %v1149, %v1155
        %v1170 = vmul.f32 %v1150, %v1155
        %v1171 = vmul.f32 %v1151, %v1155
        %v1172 = vadd.f32 %v1055, %v1156
        %v1173 = vadd.f32 %v1056, %v1157
        %v1174 = vadd.f32 %v1057, %v1158
        %v1175 = vadd.f32 %v1058, %v1159
        %v1176 = vadd.f32 %v1059, %v1160
        %v1177 = vadd.f32 %v1060, %v1161
        %v1178 = vadd.f32 %v1061, %v1162
        %v1179 = vadd.f32 %v1062, %v1163
        %v1180 = vadd.f32 %v1063, %v1164
        %v1181 = vadd.f32 %v1064, %v1165
        %v1182 = vadd.f32 %v1065, %v1166
        %v1183 = vadd.f32 %v1066, %v1167
        %v1184 = vadd.f32 %v1067, %v1168
        %v1185 = vadd.f32 %v1068, %v1169
        %v1186 = vadd.f32 %v1069, %v1170
        %v1187 = vadd.f32 %v1070, %v1171
        %v1188 = vrot.slane %v885, 1
        %v1189 = vrot.slane %v886, 1
        %v1190 = vrot.slane %v887, 1
        %v1191 = vrot.slane %v888, 1
        %v1192 = vrot.slane %v889, 1
        %v1193 = vrot.slane %v890, 1
        %v1194 = vrot.slane %v891, 1
        %v1195 = vrot.slane %v892, 1
        %v1196 = vrot.slane %v893, 1
        %v1197 = vrot.slane %v894, 1
        %v1198 = vrot.slane %v895, 1
        %v1199 = vrot.slane %v896, 1
        %v1200 = vrot.slane %v897, 1
        %v1201 = vrot.slane %v898, 1
        %v1202 = vrot.slane %v899, 1
        %v1203 = vrot.slane %v900, 1
        %vm1204 = vcmp.lt.s32.totalorder %v902, 7
        %v1205 = vsel %vm1204, %v1202, %v1203
        %v1206 = vsel %vm1204, %v1201, %v1202
        %v1207 = vsel %vm1204, %v1200, %v1201
        %v1208 = vsel %vm1204, %v1199, %v1200
        %v1209 = vsel %vm1204, %v1198, %v1199
        %v1210 = vsel %vm1204, %v1197, %v1198
        %v1211 = vsel %vm1204, %v1196, %v1197
        %v1212 = vsel %vm1204, %v1195, %v1196
        %v1213 = vsel %vm1204, %v1194, %v1195
        %v1214 = vsel %vm1204, %v1193, %v1194
        %v1215 = vsel %vm1204, %v1192, %v1193
        %v1216 = vsel %vm1204, %v1191, %v1192
        %v1217 = vsel %vm1204, %v1190, %v1191
        %v1218 = vsel %vm1204, %v1189, %v1190
        %v1219 = vsel %vm1204, %v1188, %v1189
        %v1220 = vsel %vm1204, %v1203, %v1188
        %vm1221 = vcmp.ge.s32.totalorder %v902, 0
        %vm1222 = vcmp.ge.s32.totalorder %v903, 0
        %vm1223 = vcmp.ge.s32.totalorder %v904, 0
        %vm1224 = vcmp.ge.s32.totalorder %v905, 0
        %vm1225 = vcmp.ge.s32.totalorder %v906, 0
        %vm1226 = vcmp.ge.s32.totalorder %v907, 0
        %vm1227 = vcmp.ge.s32.totalorder %v908, 0
        %vm1228 = vcmp.ge.s32.totalorder %v909, 0
        %vm1229 = vcmp.ge.s32.totalorder %v910, 0
        %vm1230 = vcmp.ge.s32.totalorder %v911, 0
        %vm1231 = vcmp.ge.s32.totalorder %v912, 0
        %vm1232 = vcmp.ge.s32.totalorder %v913, 0
        %vm1233 = vcmp.ge.s32.totalorder %v914, 0
        %vm1234 = vcmp.ge.s32.totalorder %v915, 0
        %vm1235 = vcmp.ge.s32.totalorder %v916, 0
        %vm1236 = vcmp.ge.s32.totalorder %v917, 0
        %vm1237 = vcmp.lt.s32.totalorder %v902, 127
        %vm1238 = vcmp.lt.s32.totalorder %v903, 127
        %vm1239 = vcmp.lt.s32.totalorder %v904, 127
        %vm1240 = vcmp.lt.s32.totalorder %v905, 127
        %vm1241 = vcmp.lt.s32.totalorder %v906, 127
        %vm1242 = vcmp.lt.s32.totalorder %v907, 127
        %vm1243 = vcmp.lt.s32.totalorder %v908, 127
        %vm1244 = vcmp.lt.s32.totalorder %v909, 127
        %vm1245 = vcmp.lt.s32.totalorder %v910, 127
        %vm1246 = vcmp.lt.s32.totalorder %v911, 127
        %vm1247 = vcmp.lt.s32.totalorder %v912, 127
        %vm1248 = vcmp.lt.s32.totalorder %v913, 127
        %vm1249 = vcmp.lt.s32.totalorder %v914, 127
        %vm1250 = vcmp.lt.s32.totalorder %v915, 127
        %vm1251 = vcmp.lt.s32.totalorder %v916, 127
        %vm1252 = vcmp.lt.s32.totalorder %v917, 127
        %vm1253 = vmand %vm1221, %vm1237
        %vm1254 = vmand %vm1222, %vm1238
        %vm1255 = vmand %vm1223, %vm1239
        %vm1256 = vmand %vm1224, %vm1240
        %vm1257 = vmand %vm1225, %vm1241
        %vm1258 = vmand %vm1226, %vm1242
        %vm1259 = vmand %vm1227, %vm1243
        %vm1260 = vmand %vm1228, %vm1244
        %vm1261 = vmand %vm1229, %vm1245
        %vm1262 = vmand %vm1230, %vm1246
        %vm1263 = vmand %vm1231, %vm1247
        %vm1264 = vmand %vm1232, %vm1248
        %vm1265 = vmand %vm1233, %vm1249
        %vm1266 = vmand %vm1234, %vm1250
        %vm1267 = vmand %vm1235, %vm1251
        %vm1268 = vmand %vm1236, %vm1252
        %v1269 = vsel %vm1253, %v1219, 0.0
        %v1270 = vsel %vm1254, %v1218, 0.0
        %v1271 = vsel %vm1255, %v1217, 0.0
        %v1272 = vsel %vm1256, %v1216, 0.0
        %v1273 = vsel %vm1257, %v1215, 0.0
        %v1274 = vsel %vm1258, %v1214, 0.0
        %v1275 = vsel %vm1259, %v1213, 0.0
        %v1276 = vsel %vm1260, %v1212, 0.0
        %v1277 = vsel %vm1261, %v1211, 0.0
        %v1278 = vsel %vm1262, %v1210, 0.0
        %v1279 = vsel %vm1263, %v1209, 0.0
        %v1280 = vsel %vm1264, %v1208, 0.0
        %v1281 = vsel %vm1265, %v1207, 0.0
        %v1282 = vsel %vm1266, %v1206, 0.0
        %v1283 = vsel %vm1267, %v1205, 0.0
        %v1284 = vsel %vm1268, %v1220, 0.0
        %v1285 = vlaneseq
        %v1286 = vshrl.u32 %v1285, 7
        %v1287 = vsub.s32 3, %v1286
        %v1288 = vrot.slane %v791, %v1287
        %v1289 = vmul.f32 %v1269, %v1288
        %v1290 = vmul.f32 %v1270, %v1288
        %v1291 = vmul.f32 %v1271, %v1288
        %v1292 = vmul.f32 %v1272, %v1288
        %v1293 = vmul.f32 %v1273, %v1288
        %v1294 = vmul.f32 %v1274, %v1288
        %v1295 = vmul.f32 %v1275, %v1288
        %v1296 = vmul.f32 %v1276, %v1288
        %v1297 = vmul.f32 %v1277, %v1288
        %v1298 = vmul.f32 %v1278, %v1288
        %v1299 = vmul.f32 %v1279, %v1288
        %v1300 = vmul.f32 %v1280, %v1288
        %v1301 = vmul.f32 %v1281, %v1288
        %v1302 = vmul.f32 %v1282, %v1288
        %v1303 = vmul.f32 %v1283, %v1288
        %v1304 = vmul.f32 %v1284, %v1288
        %v1305 = vadd.f32 %v1172, %v1289
        %v1306 = vadd.f32 %v1173, %v1290
        %v1307 = vadd.f32 %v1174, %v1291
        %v1308 = vadd.f32 %v1175, %v1292
        %v1309 = vadd.f32 %v1176, %v1293
        %v1310 = vadd.f32 %v1177, %v1294
        %v1311 = vadd.f32 %v1178, %v1295
        %v1312 = vadd.f32 %v1179, %v1296
        %v1313 = vadd.f32 %v1180, %v1297
        %v1314 = vadd.f32 %v1181, %v1298
        %v1315 = vadd.f32 %v1182, %v1299
        %v1316 = vadd.f32 %v1183, %v1300
        %v1317 = vadd.f32 %v1184, %v1301
        %v1318 = vadd.f32 %v1185, %v1302
        %v1319 = vadd.f32 %v1186, %v1303
        %v1320 = vadd.f32 %v1187, %v1304
        %v1321 = vrot.slane %v885, 2
        %v1322 = vrot.slane %v886, 2
        %v1323 = vrot.slane %v887, 2
        %v1324 = vrot.slane %v888, 2
        %v1325 = vrot.slane %v889, 2
        %v1326 = vrot.slane %v890, 2
        %v1327 = vrot.slane %v891, 2
        %v1328 = vrot.slane %v892, 2
        %v1329 = vrot.slane %v893, 2
        %v1330 = vrot.slane %v894, 2
        %v1331 = vrot.slane %v895, 2
        %v1332 = vrot.slane %v896, 2
        %v1333 = vrot.slane %v897, 2
        %v1334 = vrot.slane %v898, 2
        %v1335 = vrot.slane %v899, 2
        %v1336 = vrot.slane %v900, 2
        %vm1337 = vcmp.lt.s32.totalorder %v902, 6
        %v1338 = vsel %vm1337, %v1335, %v1336
        %v1339 = vsel %vm1337, %v1334, %v1335
        %v1340 = vsel %vm1337, %v1333, %v1334
        %v1341 = vsel %vm1337, %v1332, %v1333
        %v1342 = vsel %vm1337, %v1331, %v1332
        %v1343 = vsel %vm1337, %v1330, %v1331
        %v1344 = vsel %vm1337, %v1329, %v1330
        %v1345 = vsel %vm1337, %v1328, %v1329
        %v1346 = vsel %vm1337, %v1327, %v1328
        %v1347 = vsel %vm1337, %v1326, %v1327
        %v1348 = vsel %vm1337, %v1325, %v1326
        %v1349 = vsel %vm1337, %v1324, %v1325
        %v1350 = vsel %vm1337, %v1323, %v1324
        %v1351 = vsel %vm1337, %v1322, %v1323
        %v1352 = vsel %vm1337, %v1321, %v1322
        %v1353 = vsel %vm1337, %v1336, %v1321
        %vm1354 = vcmp.lt.s32.totalorder %v902, 126
        %vm1355 = vcmp.lt.s32.totalorder %v903, 126
        %vm1356 = vcmp.lt.s32.totalorder %v904, 126
        %vm1357 = vcmp.lt.s32.totalorder %v905, 126
        %vm1358 = vcmp.lt.s32.totalorder %v906, 126
        %vm1359 = vcmp.lt.s32.totalorder %v907, 126
        %vm1360 = vcmp.lt.s32.totalorder %v908, 126
        %vm1361 = vcmp.lt.s32.totalorder %v909, 126
        %vm1362 = vcmp.lt.s32.totalorder %v910, 126
        %vm1363 = vcmp.lt.s32.totalorder %v911, 126
        %vm1364 = vcmp.lt.s32.totalorder %v912, 126
        %vm1365 = vcmp.lt.s32.totalorder %v913, 126
        %vm1366 = vcmp.lt.s32.totalorder %v914, 126
        %vm1367 = vcmp.lt.s32.totalorder %v915, 126
        %vm1368 = vcmp.lt.s32.totalorder %v916, 126
        %vm1369 = vcmp.lt.s32.totalorder %v917, 126
        %vm1370 = vmand %vm1221, %vm1354
        %vm1371 = vmand %vm1222, %vm1355
        %vm1372 = vmand %vm1223, %vm1356
        %vm1373 = vmand %vm1224, %vm1357
        %vm1374 = vmand %vm1225, %vm1358
        %vm1375 = vmand %vm1226, %vm1359
        %vm1376 = vmand %vm1227, %vm1360
        %vm1377 = vmand %vm1228, %vm1361
        %vm1378 = vmand %vm1229, %vm1362
        %vm1379 = vmand %vm1230, %vm1363
        %vm1380 = vmand %vm1231, %vm1364
        %vm1381 = vmand %vm1232, %vm1365
        %vm1382 = vmand %vm1233, %vm1366
        %vm1383 = vmand %vm1234, %vm1367
        %vm1384 = vmand %vm1235, %vm1368
        %vm1385 = vmand %vm1236, %vm1369
        %v1386 = vsel %vm1370, %v1352, 0.0
        %v1387 = vsel %vm1371, %v1351, 0.0
        %v1388 = vsel %vm1372, %v1350, 0.0
        %v1389 = vsel %vm1373, %v1349, 0.0
        %v1390 = vsel %vm1374, %v1348, 0.0
        %v1391 = vsel %vm1375, %v1347, 0.0
        %v1392 = vsel %vm1376, %v1346, 0.0
        %v1393 = vsel %vm1377, %v1345, 0.0
        %v1394 = vsel %vm1378, %v1344, 0.0
        %v1395 = vsel %vm1379, %v1343, 0.0
        %v1396 = vsel %vm1380, %v1342, 0.0
        %v1397 = vsel %vm1381, %v1341, 0.0
        %v1398 = vsel %vm1382, %v1340, 0.0
        %v1399 = vsel %vm1383, %v1339, 0.0
        %v1400 = vsel %vm1384, %v1338, 0.0
        %v1401 = vsel %vm1385, %v1353, 0.0
        %v1402 = vlaneseq
        %v1403 = vshrl.u32 %v1402, 7
        %v1404 = vsub.s32 4, %v1403
        %v1405 = vrot.slane %v791, %v1404
        %v1406 = vmul.f32 %v1386, %v1405
        %v1407 = vmul.f32 %v1387, %v1405
        %v1408 = vmul.f32 %v1388, %v1405
        %v1409 = vmul.f32 %v1389, %v1405
        %v1410 = vmul.f32 %v1390, %v1405
        %v1411 = vmul.f32 %v1391, %v1405
        %v1412 = vmul.f32 %v1392, %v1405
        %v1413 = vmul.f32 %v1393, %v1405
        %v1414 = vmul.f32 %v1394, %v1405
        %v1415 = vmul.f32 %v1395, %v1405
        %v1416 = vmul.f32 %v1396, %v1405
        %v1417 = vmul.f32 %v1397, %v1405
        %v1418 = vmul.f32 %v1398, %v1405
        %v1419 = vmul.f32 %v1399, %v1405
        %v1420 = vmul.f32 %v1400, %v1405
        %v1421 = vmul.f32 %v1401, %v1405
        %v1422 = vadd.f32 %v1305, %v1406
        %v1423 = vadd.f32 %v1306, %v1407
        %v1424 = vadd.f32 %v1307, %v1408
        %v1425 = vadd.f32 %v1308, %v1409
        %v1426 = vadd.f32 %v1309, %v1410
        %v1427 = vadd.f32 %v1310, %v1411
        %v1428 = vadd.f32 %v1311, %v1412
        %v1429 = vadd.f32 %v1312, %v1413
        %v1430 = vadd.f32 %v1313, %v1414
        %v1431 = vadd.f32 %v1314, %v1415
        %v1432 = vadd.f32 %v1315, %v1416
        %v1433 = vadd.f32 %v1316, %v1417
        %v1434 = vadd.f32 %v1317, %v1418
        %v1435 = vadd.f32 %v1318, %v1419
        %v1436 = vadd.f32 %v1319, %v1420
        %v1437 = vadd.f32 %v1320, %v1421
        %v1439 = vlaneseq
        %v1440 = vshrl.u32 %v1439, 7
        %v1441 = vsub.s32 0, %v1440
        %v1442 = vrot.slane %v792, %v1441
        %v1444 = vadd.f32 %v1422, %v1442
        %v1445 = vadd.f32 %v1423, %v1442
        %v1446 = vadd.f32 %v1424, %v1442
        %v1447 = vadd.f32 %v1425, %v1442
        %v1448 = vadd.f32 %v1426, %v1442
        %v1449 = vadd.f32 %v1427, %v1442
        %v1450 = vadd.f32 %v1428, %v1442
        %v1451 = vadd.f32 %v1429, %v1442
        %v1452 = vadd.f32 %v1430, %v1442
        %v1453 = vadd.f32 %v1431, %v1442
        %v1454 = vadd.f32 %v1432, %v1442
        %v1455 = vadd.f32 %v1433, %v1442
        %v1456 = vadd.f32 %v1434, %v1442
        %v1457 = vadd.f32 %v1435, %v1442
        %v1458 = vadd.f32 %v1436, %v1442
        %v1459 = vadd.f32 %v1437, %v1442
        %v1460 = vpack.c.bf16 %v1445, %v1444
        %v1461 = vpack.c.bf16 %v1447, %v1446
        %v1462 = vpack.c.bf16 %v1449, %v1448
        %v1463 = vpack.c.bf16 %v1451, %v1450
        %v1464 = vpack.c.bf16 %v1453, %v1452
        %v1465 = vpack.c.bf16 %v1455, %v1454
        %v1466 = vpack.c.bf16 %v1457, %v1456
        %v1467 = vpack.c.bf16 %v1459, %v1458
        %v1469 = vlaneseq
        %v1470 = vshrl.u32 %v1469, 7
        %v1471 = vsub.s32 0, %v1470
        %v1472 = vrot.slane %v809, %v1471
        %v1490 = vunpack.c.l.b16 %v793
        %v1491 = vunpack.c.l.b16 %v794
        %v1492 = vunpack.c.l.b16 %v795
        %v1493 = vunpack.c.l.b16 %v796
        %v1494 = vunpack.c.l.b16 %v797
        %v1495 = vunpack.c.l.b16 %v798
        %v1496 = vunpack.c.l.b16 %v799
        %v1497 = vunpack.c.l.b16 %v800
        %v1498 = vunpack.c.l.b16 %v801
        %v1499 = vunpack.c.l.b16 %v802
        %v1500 = vunpack.c.l.b16 %v803
        %v1501 = vunpack.c.l.b16 %v804
        %v1502 = vunpack.c.l.b16 %v805
        %v1503 = vunpack.c.l.b16 %v806
        %v1504 = vunpack.c.l.b16 %v807
        %v1505 = vunpack.c.l.b16 %v808
        %v1506 = vpack.c.b16 %v1491, %v1490
        %v1507 = vpack.c.b16 %v1493, %v1492
        %v1508 = vpack.c.b16 %v1495, %v1494
        %v1509 = vpack.c.b16 %v1497, %v1496
        %v1510 = vpack.c.b16 %v1499, %v1498
        %v1511 = vpack.c.b16 %v1501, %v1500
        %v1512 = vpack.c.b16 %v1503, %v1502
        %v1513 = vpack.c.b16 %v1505, %v1504
        %1522 = vmatprep.subr.bf16.mxu0 0
        %1523 = vmatpush1.bf16.msra.mxu0 %v1506
        %1524 = vmatprep.subr.bf16.mxu0 0
        %1525 = vmatpush1.bf16.msra.mxu0 %v1507
        %1526 = vmatprep.subr.bf16.mxu0 0
        %1527 = vmatpush1.bf16.msra.mxu0 %v1508
        %1528 = vmatprep.subr.bf16.mxu0 0
        %1529 = vmatpush1.bf16.msra.mxu0 %v1509
        %1530 = vmatprep.subr.bf16.mxu0 0
        %1531 = vmatpush1.bf16.msra.mxu0 %v1510
        %1532 = vmatprep.subr.bf16.mxu0 0
        %1533 = vmatpush1.bf16.msra.mxu0 %v1511
        %1534 = vmatprep.subr.bf16.mxu0 0
        %1535 = vmatpush1.bf16.msra.mxu0 %v1512
        %1536 = vmatprep.subr.bf16.mxu0 0
        %1537 = vmatpush1.bf16.msra.mxu0 %v1513
        %1538 = vmatprep.subr.bf16.mxu0 0
        %1539 = vmatpush1.bf16.msra.mxu0 0
        %1540 = vmatprep.subr.bf16.mxu0 0
        %1541 = vmatpush1.bf16.msra.mxu0 0
        %1542 = vmatprep.subr.bf16.mxu0 0
        %1543 = vmatpush1.bf16.msra.mxu0 0
        %1544 = vmatprep.subr.bf16.mxu0 0
        %1545 = vmatpush1.bf16.msra.mxu0 0
        %1546 = vmatprep.subr.bf16.mxu0 0
        %1547 = vmatpush1.bf16.msra.mxu0 0
        %1548 = vmatprep.subr.bf16.mxu0 0
        %1549 = vmatpush1.bf16.msra.mxu0 0
        %1550 = vmatprep.subr.bf16.mxu0 0
        %1551 = vmatpush1.bf16.msra.mxu0 0
        %1552 = vmatprep.subr.bf16.mxu0 0
        %1553 = vmatpush1.bf16.msra.mxu0 0
        %1554 = vmatprep.mubr.bf16.mxu0 0
        %1555 = vmatmul.mubr.bf16.gmra.mrb[0].mxu0 %v1460
        %v1556 = vpop.f32.mrb[0].mxu0
        %v1557 = vadd.f32 %v1472, %v1556
        %v1558 = vpop.f32.mrb[0].mxu0
        %v1559 = vpop.f32.mrb[0].mxu0
        %v1560 = vadd.f32 %v1472, %v1559
        %v1561 = vpop.f32.mrb[0].mxu0
        %1562 = vmatprep.mubr.bf16.mxu0 0
        %1563 = vmatmul.mubr.bf16.gmra.mrb[0].mxu0 %v1461
        %v1564 = vpop.f32.mrb[0].mxu0
        %v1565 = vadd.f32 %v1472, %v1564
        %v1566 = vpop.f32.mrb[0].mxu0
        %v1567 = vpop.f32.mrb[0].mxu0
        %v1568 = vadd.f32 %v1472, %v1567
        %v1569 = vpop.f32.mrb[0].mxu0
        %1570 = vmatprep.mubr.bf16.mxu0 0
        %1571 = vmatmul.mubr.bf16.gmra.mrb[0].mxu0 %v1462
        %v1572 = vpop.f32.mrb[0].mxu0
        %v1573 = vadd.f32 %v1472, %v1572
        %v1574 = vpop.f32.mrb[0].mxu0
        %v1575 = vpop.f32.mrb[0].mxu0
        %v1576 = vadd.f32 %v1472, %v1575
        %v1577 = vpop.f32.mrb[0].mxu0
        %1578 = vmatprep.mubr.bf16.mxu0 0
        %1579 = vmatmul.mubr.bf16.gmra.mrb[0].mxu0 %v1463
        %v1580 = vpop.f32.mrb[0].mxu0
        %v1581 = vadd.f32 %v1472, %v1580
        %v1582 = vpop.f32.mrb[0].mxu0
        %v1583 = vpop.f32.mrb[0].mxu0
        %v1584 = vadd.f32 %v1472, %v1583
        %v1585 = vpop.f32.mrb[0].mxu0
        %1586 = vmatprep.mubr.bf16.mxu0 0
        %1587 = vmatmul.mubr.bf16.gmra.mrb[0].mxu0 %v1464
        %v1588 = vpop.f32.mrb[0].mxu0
        %v1589 = vadd.f32 %v1472, %v1588
        %v1590 = vpop.f32.mrb[0].mxu0
        %v1591 = vpop.f32.mrb[0].mxu0
        %v1592 = vadd.f32 %v1472, %v1591
        %v1593 = vpop.f32.mrb[0].mxu0
        %1594 = vmatprep.mubr.bf16.mxu0 0
        %1595 = vmatmul.mubr.bf16.gmra.mrb[0].mxu0 %v1465
        %v1596 = vpop.f32.mrb[0].mxu0
        %v1597 = vadd.f32 %v1472, %v1596
        %v1598 = vpop.f32.mrb[0].mxu0
        %v1599 = vpop.f32.mrb[0].mxu0
        %v1600 = vadd.f32 %v1472, %v1599
        %v1601 = vpop.f32.mrb[0].mxu0
        %1602 = vmatprep.mubr.bf16.mxu0 0
        %1603 = vmatmul.mubr.bf16.gmra.mrb[0].mxu0 %v1466
        %v1604 = vpop.f32.mrb[0].mxu0
        %v1605 = vadd.f32 %v1472, %v1604
        %v1606 = vpop.f32.mrb[0].mxu0
        %v1607 = vpop.f32.mrb[0].mxu0
        %v1608 = vadd.f32 %v1472, %v1607
        %v1609 = vpop.f32.mrb[0].mxu0
        %1610 = vmatprep.mubr.bf16.mxu0 0
        %1611 = vmatmul.mubr.bf16.gmra.mrb[0].mxu0 %v1467
        %v1612 = vpop.f32.mrb[0].mxu0
        %v1613 = vadd.f32 %v1472, %v1612
        %v1614 = vpop.f32.mrb[0].mxu0
        %v1615 = vpop.f32.mrb[0].mxu0
        %v1616 = vadd.f32 %v1472, %v1615
        %v1617 = vpop.f32.mrb[0].mxu0
        %1618 = vdwg.mxu0
        %v1619 = vmax.f32 %v1557, 0.0
        %v1620 = vmax.f32 %v1560, 0.0
        %v1621 = vmax.f32 %v1565, 0.0
        %v1622 = vmax.f32 %v1568, 0.0
        %v1623 = vmax.f32 %v1573, 0.0
        %v1624 = vmax.f32 %v1576, 0.0
        %v1625 = vmax.f32 %v1581, 0.0
        %v1626 = vmax.f32 %v1584, 0.0
        %v1627 = vmax.f32 %v1589, 0.0
        %v1628 = vmax.f32 %v1592, 0.0
        %v1629 = vmax.f32 %v1597, 0.0
        %v1630 = vmax.f32 %v1600, 0.0
        %v1631 = vmax.f32 %v1605, 0.0
        %v1632 = vmax.f32 %v1608, 0.0
        %v1633 = vmax.f32 %v1613, 0.0
        %v1634 = vmax.f32 %v1616, 0.0
        %v1635 = vlaneseq
        %v1636 = vshrl.u32 %v1635, 7
        %v1637 = vsub.s32 2, %v1636
        %v1638 = vrot.slane %v810, %v1637
        %v1639 = vmul.f32 %v1619, %v1638
        %v1640 = vmul.f32 %v1620, %v1638
        %v1641 = vmul.f32 %v1621, %v1638
        %v1642 = vmul.f32 %v1622, %v1638
        %v1643 = vmul.f32 %v1623, %v1638
        %v1644 = vmul.f32 %v1624, %v1638
        %v1645 = vmul.f32 %v1625, %v1638
        %v1646 = vmul.f32 %v1626, %v1638
        %v1647 = vmul.f32 %v1627, %v1638
        %v1648 = vmul.f32 %v1628, %v1638
        %v1649 = vmul.f32 %v1629, %v1638
        %v1650 = vmul.f32 %v1630, %v1638
        %v1651 = vmul.f32 %v1631, %v1638
        %v1652 = vmul.f32 %v1632, %v1638
        %v1653 = vmul.f32 %v1633, %v1638
        %v1654 = vmul.f32 %v1634, %v1638
        %v1655 = vrot.slane %v1619, 6
        %v1656 = vrot.slane %v1620, 6
        %v1657 = vrot.slane %v1621, 6
        %v1658 = vrot.slane %v1622, 6
        %v1659 = vrot.slane %v1623, 6
        %v1660 = vrot.slane %v1624, 6
        %v1661 = vrot.slane %v1625, 6
        %v1662 = vrot.slane %v1626, 6
        %v1663 = vrot.slane %v1627, 6
        %v1664 = vrot.slane %v1628, 6
        %v1665 = vrot.slane %v1629, 6
        %v1666 = vrot.slane %v1630, 6
        %v1667 = vrot.slane %v1631, 6
        %v1668 = vrot.slane %v1632, 6
        %v1669 = vrot.slane %v1633, 6
        %v1670 = vrot.slane %v1634, 6
        %v1671 = vsel %vm954, %v1669, %v1670
        %v1672 = vsel %vm954, %v1668, %v1669
        %v1673 = vsel %vm954, %v1667, %v1668
        %v1674 = vsel %vm954, %v1666, %v1667
        %v1675 = vsel %vm954, %v1665, %v1666
        %v1676 = vsel %vm954, %v1664, %v1665
        %v1677 = vsel %vm954, %v1663, %v1664
        %v1678 = vsel %vm954, %v1662, %v1663
        %v1679 = vsel %vm954, %v1661, %v1662
        %v1680 = vsel %vm954, %v1660, %v1661
        %v1681 = vsel %vm954, %v1659, %v1660
        %v1682 = vsel %vm954, %v1658, %v1659
        %v1683 = vsel %vm954, %v1657, %v1658
        %v1684 = vsel %vm954, %v1656, %v1657
        %v1685 = vsel %vm954, %v1655, %v1656
        %v1686 = vsel %vm954, %v1670, %v1655
        %v1687 = vsel %vm1003, %v1686, 0.0
        %v1688 = vsel %vm1004, %v1685, 0.0
        %v1689 = vsel %vm1005, %v1684, 0.0
        %v1690 = vsel %vm1006, %v1683, 0.0
        %v1691 = vsel %vm1007, %v1682, 0.0
        %v1692 = vsel %vm1008, %v1681, 0.0
        %v1693 = vsel %vm1009, %v1680, 0.0
        %v1694 = vsel %vm1010, %v1679, 0.0
        %v1695 = vsel %vm1011, %v1678, 0.0
        %v1696 = vsel %vm1012, %v1677, 0.0
        %v1697 = vsel %vm1013, %v1676, 0.0
        %v1698 = vsel %vm1014, %v1675, 0.0
        %v1699 = vsel %vm1015, %v1674, 0.0
        %v1700 = vsel %vm1016, %v1673, 0.0
        %v1701 = vsel %vm1017, %v1672, 0.0
        %v1702 = vsel %vm1018, %v1671, 0.0
        %v1703 = vlaneseq
        %v1704 = vshrl.u32 %v1703, 7
        %v1705 = vsub.s32 0, %v1704
        %v1706 = vrot.slane %v810, %v1705
        %v1707 = vmul.f32 %v1687, %v1706
        %v1708 = vmul.f32 %v1688, %v1706
        %v1709 = vmul.f32 %v1689, %v1706
        %v1710 = vmul.f32 %v1690, %v1706
        %v1711 = vmul.f32 %v1691, %v1706
        %v1712 = vmul.f32 %v1692, %v1706
        %v1713 = vmul.f32 %v1693, %v1706
        %v1714 = vmul.f32 %v1694, %v1706
        %v1715 = vmul.f32 %v1695, %v1706
        %v1716 = vmul.f32 %v1696, %v1706
        %v1717 = vmul.f32 %v1697, %v1706
        %v1718 = vmul.f32 %v1698, %v1706
        %v1719 = vmul.f32 %v1699, %v1706
        %v1720 = vmul.f32 %v1700, %v1706
        %v1721 = vmul.f32 %v1701, %v1706
        %v1722 = vmul.f32 %v1702, %v1706
        %v1723 = vadd.f32 %v1639, %v1707
        %v1724 = vadd.f32 %v1640, %v1708
        %v1725 = vadd.f32 %v1641, %v1709
        %v1726 = vadd.f32 %v1642, %v1710
        %v1727 = vadd.f32 %v1643, %v1711
        %v1728 = vadd.f32 %v1644, %v1712
        %v1729 = vadd.f32 %v1645, %v1713
        %v1730 = vadd.f32 %v1646, %v1714
        %v1731 = vadd.f32 %v1647, %v1715
        %v1732 = vadd.f32 %v1648, %v1716
        %v1733 = vadd.f32 %v1649, %v1717
        %v1734 = vadd.f32 %v1650, %v1718
        %v1735 = vadd.f32 %v1651, %v1719
        %v1736 = vadd.f32 %v1652, %v1720
        %v1737 = vadd.f32 %v1653, %v1721
        %v1738 = vadd.f32 %v1654, %v1722
        %v1739 = vrot.slane %v1619, 7
        %v1740 = vrot.slane %v1620, 7
        %v1741 = vrot.slane %v1621, 7
        %v1742 = vrot.slane %v1622, 7
        %v1743 = vrot.slane %v1623, 7
        %v1744 = vrot.slane %v1624, 7
        %v1745 = vrot.slane %v1625, 7
        %v1746 = vrot.slane %v1626, 7
        %v1747 = vrot.slane %v1627, 7
        %v1748 = vrot.slane %v1628, 7
        %v1749 = vrot.slane %v1629, 7
        %v1750 = vrot.slane %v1630, 7
        %v1751 = vrot.slane %v1631, 7
        %v1752 = vrot.slane %v1632, 7
        %v1753 = vrot.slane %v1633, 7
        %v1754 = vrot.slane %v1634, 7
        %v1755 = vsel %vm1087, %v1753, %v1754
        %v1756 = vsel %vm1087, %v1752, %v1753
        %v1757 = vsel %vm1087, %v1751, %v1752
        %v1758 = vsel %vm1087, %v1750, %v1751
        %v1759 = vsel %vm1087, %v1749, %v1750
        %v1760 = vsel %vm1087, %v1748, %v1749
        %v1761 = vsel %vm1087, %v1747, %v1748
        %v1762 = vsel %vm1087, %v1746, %v1747
        %v1763 = vsel %vm1087, %v1745, %v1746
        %v1764 = vsel %vm1087, %v1744, %v1745
        %v1765 = vsel %vm1087, %v1743, %v1744
        %v1766 = vsel %vm1087, %v1742, %v1743
        %v1767 = vsel %vm1087, %v1741, %v1742
        %v1768 = vsel %vm1087, %v1740, %v1741
        %v1769 = vsel %vm1087, %v1739, %v1740
        %v1770 = vsel %vm1087, %v1754, %v1739
        %v1771 = vsel %vm1120, %v1770, 0.0
        %v1772 = vsel %vm1121, %v1769, 0.0
        %v1773 = vsel %vm1122, %v1768, 0.0
        %v1774 = vsel %vm1123, %v1767, 0.0
        %v1775 = vsel %vm1124, %v1766, 0.0
        %v1776 = vsel %vm1125, %v1765, 0.0
        %v1777 = vsel %vm1126, %v1764, 0.0
        %v1778 = vsel %vm1127, %v1763, 0.0
        %v1779 = vsel %vm1128, %v1762, 0.0
        %v1780 = vsel %vm1129, %v1761, 0.0
        %v1781 = vsel %vm1130, %v1760, 0.0
        %v1782 = vsel %vm1131, %v1759, 0.0
        %v1783 = vsel %vm1132, %v1758, 0.0
        %v1784 = vsel %vm1133, %v1757, 0.0
        %v1785 = vsel %vm1134, %v1756, 0.0
        %v1786 = vsel %vm1135, %v1755, 0.0
        %v1787 = vlaneseq
        %v1788 = vshrl.u32 %v1787, 7
        %v1789 = vsub.s32 1, %v1788
        %v1790 = vrot.slane %v810, %v1789
        %v1791 = vmul.f32 %v1771, %v1790
        %v1792 = vmul.f32 %v1772, %v1790
        %v1793 = vmul.f32 %v1773, %v1790
        %v1794 = vmul.f32 %v1774, %v1790
        %v1795 = vmul.f32 %v1775, %v1790
        %v1796 = vmul.f32 %v1776, %v1790
        %v1797 = vmul.f32 %v1777, %v1790
        %v1798 = vmul.f32 %v1778, %v1790
        %v1799 = vmul.f32 %v1779, %v1790
        %v1800 = vmul.f32 %v1780, %v1790
        %v1801 = vmul.f32 %v1781, %v1790
        %v1802 = vmul.f32 %v1782, %v1790
        %v1803 = vmul.f32 %v1783, %v1790
        %v1804 = vmul.f32 %v1784, %v1790
        %v1805 = vmul.f32 %v1785, %v1790
        %v1806 = vmul.f32 %v1786, %v1790
        %v1807 = vadd.f32 %v1723, %v1791
        %v1808 = vadd.f32 %v1724, %v1792
        %v1809 = vadd.f32 %v1725, %v1793
        %v1810 = vadd.f32 %v1726, %v1794
        %v1811 = vadd.f32 %v1727, %v1795
        %v1812 = vadd.f32 %v1728, %v1796
        %v1813 = vadd.f32 %v1729, %v1797
        %v1814 = vadd.f32 %v1730, %v1798
        %v1815 = vadd.f32 %v1731, %v1799
        %v1816 = vadd.f32 %v1732, %v1800
        %v1817 = vadd.f32 %v1733, %v1801
        %v1818 = vadd.f32 %v1734, %v1802
        %v1819 = vadd.f32 %v1735, %v1803
        %v1820 = vadd.f32 %v1736, %v1804
        %v1821 = vadd.f32 %v1737, %v1805
        %v1822 = vadd.f32 %v1738, %v1806
        %v1823 = vrot.slane %v1619, 1
        %v1824 = vrot.slane %v1620, 1
        %v1825 = vrot.slane %v1621, 1
        %v1826 = vrot.slane %v1622, 1
        %v1827 = vrot.slane %v1623, 1
        %v1828 = vrot.slane %v1624, 1
        %v1829 = vrot.slane %v1625, 1
        %v1830 = vrot.slane %v1626, 1
        %v1831 = vrot.slane %v1627, 1
        %v1832 = vrot.slane %v1628, 1
        %v1833 = vrot.slane %v1629, 1
        %v1834 = vrot.slane %v1630, 1
        %v1835 = vrot.slane %v1631, 1
        %v1836 = vrot.slane %v1632, 1
        %v1837 = vrot.slane %v1633, 1
        %v1838 = vrot.slane %v1634, 1
        %v1839 = vsel %vm1204, %v1837, %v1838
        %v1840 = vsel %vm1204, %v1836, %v1837
        %v1841 = vsel %vm1204, %v1835, %v1836
        %v1842 = vsel %vm1204, %v1834, %v1835
        %v1843 = vsel %vm1204, %v1833, %v1834
        %v1844 = vsel %vm1204, %v1832, %v1833
        %v1845 = vsel %vm1204, %v1831, %v1832
        %v1846 = vsel %vm1204, %v1830, %v1831
        %v1847 = vsel %vm1204, %v1829, %v1830
        %v1848 = vsel %vm1204, %v1828, %v1829
        %v1849 = vsel %vm1204, %v1827, %v1828
        %v1850 = vsel %vm1204, %v1826, %v1827
        %v1851 = vsel %vm1204, %v1825, %v1826
        %v1852 = vsel %vm1204, %v1824, %v1825
        %v1853 = vsel %vm1204, %v1823, %v1824
        %v1854 = vsel %vm1204, %v1838, %v1823
        %v1855 = vsel %vm1253, %v1853, 0.0
        %v1856 = vsel %vm1254, %v1852, 0.0
        %v1857 = vsel %vm1255, %v1851, 0.0
        %v1858 = vsel %vm1256, %v1850, 0.0
        %v1859 = vsel %vm1257, %v1849, 0.0
        %v1860 = vsel %vm1258, %v1848, 0.0
        %v1861 = vsel %vm1259, %v1847, 0.0
        %v1862 = vsel %vm1260, %v1846, 0.0
        %v1863 = vsel %vm1261, %v1845, 0.0
        %v1864 = vsel %vm1262, %v1844, 0.0
        %v1865 = vsel %vm1263, %v1843, 0.0
        %v1866 = vsel %vm1264, %v1842, 0.0
        %v1867 = vsel %vm1265, %v1841, 0.0
        %v1868 = vsel %vm1266, %v1840, 0.0
        %v1869 = vsel %vm1267, %v1839, 0.0
        %v1870 = vsel %vm1268, %v1854, 0.0
        %v1871 = vlaneseq
        %v1872 = vshrl.u32 %v1871, 7
        %v1873 = vsub.s32 3, %v1872
        %v1874 = vrot.slane %v810, %v1873
        %v1875 = vmul.f32 %v1855, %v1874
        %v1876 = vmul.f32 %v1856, %v1874
        %v1877 = vmul.f32 %v1857, %v1874
        %v1878 = vmul.f32 %v1858, %v1874
        %v1879 = vmul.f32 %v1859, %v1874
        %v1880 = vmul.f32 %v1860, %v1874
        %v1881 = vmul.f32 %v1861, %v1874
        %v1882 = vmul.f32 %v1862, %v1874
        %v1883 = vmul.f32 %v1863, %v1874
        %v1884 = vmul.f32 %v1864, %v1874
        %v1885 = vmul.f32 %v1865, %v1874
        %v1886 = vmul.f32 %v1866, %v1874
        %v1887 = vmul.f32 %v1867, %v1874
        %v1888 = vmul.f32 %v1868, %v1874
        %v1889 = vmul.f32 %v1869, %v1874
        %v1890 = vmul.f32 %v1870, %v1874
        %v1891 = vadd.f32 %v1807, %v1875
        %v1892 = vadd.f32 %v1808, %v1876
        %v1893 = vadd.f32 %v1809, %v1877
        %v1894 = vadd.f32 %v1810, %v1878
        %v1895 = vadd.f32 %v1811, %v1879
        %v1896 = vadd.f32 %v1812, %v1880
        %v1897 = vadd.f32 %v1813, %v1881
        %v1898 = vadd.f32 %v1814, %v1882
        %v1899 = vadd.f32 %v1815, %v1883
        %v1900 = vadd.f32 %v1816, %v1884
        %v1901 = vadd.f32 %v1817, %v1885
        %v1902 = vadd.f32 %v1818, %v1886
        %v1903 = vadd.f32 %v1819, %v1887
        %v1904 = vadd.f32 %v1820, %v1888
        %v1905 = vadd.f32 %v1821, %v1889
        %v1906 = vadd.f32 %v1822, %v1890
        %v1907 = vrot.slane %v1619, 2
        %v1908 = vrot.slane %v1620, 2
        %v1909 = vrot.slane %v1621, 2
        %v1910 = vrot.slane %v1622, 2
        %v1911 = vrot.slane %v1623, 2
        %v1912 = vrot.slane %v1624, 2
        %v1913 = vrot.slane %v1625, 2
        %v1914 = vrot.slane %v1626, 2
        %v1915 = vrot.slane %v1627, 2
        %v1916 = vrot.slane %v1628, 2
        %v1917 = vrot.slane %v1629, 2
        %v1918 = vrot.slane %v1630, 2
        %v1919 = vrot.slane %v1631, 2
        %v1920 = vrot.slane %v1632, 2
        %v1921 = vrot.slane %v1633, 2
        %v1922 = vrot.slane %v1634, 2
        %v1923 = vsel %vm1337, %v1921, %v1922
        %v1924 = vsel %vm1337, %v1920, %v1921
        %v1925 = vsel %vm1337, %v1919, %v1920
        %v1926 = vsel %vm1337, %v1918, %v1919
        %v1927 = vsel %vm1337, %v1917, %v1918
        %v1928 = vsel %vm1337, %v1916, %v1917
        %v1929 = vsel %vm1337, %v1915, %v1916
        %v1930 = vsel %vm1337, %v1914, %v1915
        %v1931 = vsel %vm1337, %v1913, %v1914
        %v1932 = vsel %vm1337, %v1912, %v1913
        %v1933 = vsel %vm1337, %v1911, %v1912
        %v1934 = vsel %vm1337, %v1910, %v1911
        %v1935 = vsel %vm1337, %v1909, %v1910
        %v1936 = vsel %vm1337, %v1908, %v1909
        %v1937 = vsel %vm1337, %v1907, %v1908
        %v1938 = vsel %vm1337, %v1922, %v1907
        %v1939 = vsel %vm1370, %v1937, 0.0
        %v1940 = vsel %vm1371, %v1936, 0.0
        %v1941 = vsel %vm1372, %v1935, 0.0
        %v1942 = vsel %vm1373, %v1934, 0.0
        %v1943 = vsel %vm1374, %v1933, 0.0
        %v1944 = vsel %vm1375, %v1932, 0.0
        %v1945 = vsel %vm1376, %v1931, 0.0
        %v1946 = vsel %vm1377, %v1930, 0.0
        %v1947 = vsel %vm1378, %v1929, 0.0
        %v1948 = vsel %vm1379, %v1928, 0.0
        %v1949 = vsel %vm1380, %v1927, 0.0
        %v1950 = vsel %vm1381, %v1926, 0.0
        %v1951 = vsel %vm1382, %v1925, 0.0
        %v1952 = vsel %vm1383, %v1924, 0.0
        %v1953 = vsel %vm1384, %v1923, 0.0
        %v1954 = vsel %vm1385, %v1938, 0.0
        %v1955 = vlaneseq
        %v1956 = vshrl.u32 %v1955, 7
        %v1957 = vsub.s32 4, %v1956
        %v1958 = vrot.slane %v810, %v1957
        %v1959 = vmul.f32 %v1939, %v1958
        %v1960 = vmul.f32 %v1940, %v1958
        %v1961 = vmul.f32 %v1941, %v1958
        %v1962 = vmul.f32 %v1942, %v1958
        %v1963 = vmul.f32 %v1943, %v1958
        %v1964 = vmul.f32 %v1944, %v1958
        %v1965 = vmul.f32 %v1945, %v1958
        %v1966 = vmul.f32 %v1946, %v1958
        %v1967 = vmul.f32 %v1947, %v1958
        %v1968 = vmul.f32 %v1948, %v1958
        %v1969 = vmul.f32 %v1949, %v1958
        %v1970 = vmul.f32 %v1950, %v1958
        %v1971 = vmul.f32 %v1951, %v1958
        %v1972 = vmul.f32 %v1952, %v1958
        %v1973 = vmul.f32 %v1953, %v1958
        %v1974 = vmul.f32 %v1954, %v1958
        %v1975 = vadd.f32 %v1891, %v1959
        %v1976 = vadd.f32 %v1892, %v1960
        %v1977 = vadd.f32 %v1893, %v1961
        %v1978 = vadd.f32 %v1894, %v1962
        %v1979 = vadd.f32 %v1895, %v1963
        %v1980 = vadd.f32 %v1896, %v1964
        %v1981 = vadd.f32 %v1897, %v1965
        %v1982 = vadd.f32 %v1898, %v1966
        %v1983 = vadd.f32 %v1899, %v1967
        %v1984 = vadd.f32 %v1900, %v1968
        %v1985 = vadd.f32 %v1901, %v1969
        %v1986 = vadd.f32 %v1902, %v1970
        %v1987 = vadd.f32 %v1903, %v1971
        %v1988 = vadd.f32 %v1904, %v1972
        %v1989 = vadd.f32 %v1905, %v1973
        %v1990 = vadd.f32 %v1906, %v1974
        %v1992 = vlaneseq
        %v1993 = vshrl.u32 %v1992, 7
        %v1994 = vsub.s32 0, %v1993
        %v1995 = vrot.slane %v811, %v1994
        %v1997 = vadd.f32 %v1975, %v1995
        %v1998 = vadd.f32 %v1976, %v1995
        %v1999 = vadd.f32 %v1977, %v1995
        %v2000 = vadd.f32 %v1978, %v1995
        %v2001 = vadd.f32 %v1979, %v1995
        %v2002 = vadd.f32 %v1980, %v1995
        %v2003 = vadd.f32 %v1981, %v1995
        %v2004 = vadd.f32 %v1982, %v1995
        %v2005 = vadd.f32 %v1983, %v1995
        %v2006 = vadd.f32 %v1984, %v1995
        %v2007 = vadd.f32 %v1985, %v1995
        %v2008 = vadd.f32 %v1986, %v1995
        %v2009 = vadd.f32 %v1987, %v1995
        %v2010 = vadd.f32 %v1988, %v1995
        %v2011 = vadd.f32 %v1989, %v1995
        %v2012 = vadd.f32 %v1990, %v1995
        %v2013 = vpack.c.bf16 %v1998, %v1997
        %v2014 = vpack.c.bf16 %v2000, %v1999
        %v2015 = vpack.c.bf16 %v2002, %v2001
        %v2016 = vpack.c.bf16 %v2004, %v2003
        %v2017 = vpack.c.bf16 %v2006, %v2005
        %v2018 = vpack.c.bf16 %v2008, %v2007
        %v2019 = vpack.c.bf16 %v2010, %v2009
        %v2020 = vpack.c.bf16 %v2012, %v2011
        %v2022 = vlaneseq
        %v2023 = vshrl.u32 %v2022, 7
        %v2024 = vsub.s32 0, %v2023
        %v2025 = vrot.slane %v828, %v2024
        %v2043 = vunpack.c.l.b16 %v812
        %v2044 = vunpack.c.l.b16 %v813
        %v2045 = vunpack.c.l.b16 %v814
        %v2046 = vunpack.c.l.b16 %v815
        %v2047 = vunpack.c.l.b16 %v816
        %v2048 = vunpack.c.l.b16 %v817
        %v2049 = vunpack.c.l.b16 %v818
        %v2050 = vunpack.c.l.b16 %v819
        %v2051 = vunpack.c.l.b16 %v820
        %v2052 = vunpack.c.l.b16 %v821
        %v2053 = vunpack.c.l.b16 %v822
        %v2054 = vunpack.c.l.b16 %v823
        %v2055 = vunpack.c.l.b16 %v824
        %v2056 = vunpack.c.l.b16 %v825
        %v2057 = vunpack.c.l.b16 %v826
        %v2058 = vunpack.c.l.b16 %v827
        %v2059 = vpack.c.b16 %v2044, %v2043
        %v2060 = vpack.c.b16 %v2046, %v2045
        %v2061 = vpack.c.b16 %v2048, %v2047
        %v2062 = vpack.c.b16 %v2050, %v2049
        %v2063 = vpack.c.b16 %v2052, %v2051
        %v2064 = vpack.c.b16 %v2054, %v2053
        %v2065 = vpack.c.b16 %v2056, %v2055
        %v2066 = vpack.c.b16 %v2058, %v2057
        %2075 = vmatprep.subr.bf16.mxu0 0
        %2076 = vmatpush1.bf16.msra.mxu0 %v2059
        %2077 = vmatprep.subr.bf16.mxu0 0
        %2078 = vmatpush1.bf16.msra.mxu0 %v2060
        %2079 = vmatprep.subr.bf16.mxu0 0
        %2080 = vmatpush1.bf16.msra.mxu0 %v2061
        %2081 = vmatprep.subr.bf16.mxu0 0
        %2082 = vmatpush1.bf16.msra.mxu0 %v2062
        %2083 = vmatprep.subr.bf16.mxu0 0
        %2084 = vmatpush1.bf16.msra.mxu0 %v2063
        %2085 = vmatprep.subr.bf16.mxu0 0
        %2086 = vmatpush1.bf16.msra.mxu0 %v2064
        %2087 = vmatprep.subr.bf16.mxu0 0
        %2088 = vmatpush1.bf16.msra.mxu0 %v2065
        %2089 = vmatprep.subr.bf16.mxu0 0
        %2090 = vmatpush1.bf16.msra.mxu0 %v2066
        %2091 = vmatprep.subr.bf16.mxu0 0
        %2092 = vmatpush1.bf16.msra.mxu0 0
        %2093 = vmatprep.subr.bf16.mxu0 0
        %2094 = vmatpush1.bf16.msra.mxu0 0
        %2095 = vmatprep.subr.bf16.mxu0 0
        %2096 = vmatpush1.bf16.msra.mxu0 0
        %2097 = vmatprep.subr.bf16.mxu0 0
        %2098 = vmatpush1.bf16.msra.mxu0 0
        %2099 = vmatprep.subr.bf16.mxu0 0
        %2100 = vmatpush1.bf16.msra.mxu0 0
        %2101 = vmatprep.subr.bf16.mxu0 0
        %2102 = vmatpush1.bf16.msra.mxu0 0
        %2103 = vmatprep.subr.bf16.mxu0 0
        %2104 = vmatpush1.bf16.msra.mxu0 0
        %2105 = vmatprep.subr.bf16.mxu0 0
        %2106 = vmatpush1.bf16.msra.mxu0 0
        %2107 = vmatprep.mubr.bf16.mxu0 0
        %2108 = vmatmul.mubr.bf16.gmra.mrb[0].mxu0 %v2013
        %v2109 = vpop.f32.mrb[0].mxu0
        %v2110 = vadd.f32 %v2025, %v2109
        %v2111 = vpop.f32.mrb[0].mxu0
        %v2112 = vpop.f32.mrb[0].mxu0
        %v2113 = vadd.f32 %v2025, %v2112
        %v2114 = vpop.f32.mrb[0].mxu0
        %2115 = vmatprep.mubr.bf16.mxu0 0
        %2116 = vmatmul.mubr.bf16.gmra.mrb[0].mxu0 %v2014
        %v2117 = vpop.f32.mrb[0].mxu0
        %v2118 = vadd.f32 %v2025, %v2117
        %v2119 = vpop.f32.mrb[0].mxu0
        %v2120 = vpop.f32.mrb[0].mxu0
        %v2121 = vadd.f32 %v2025, %v2120
        %v2122 = vpop.f32.mrb[0].mxu0
        %2123 = vmatprep.mubr.bf16.mxu0 0
        %2124 = vmatmul.mubr.bf16.gmra.mrb[0].mxu0 %v2015
        %v2125 = vpop.f32.mrb[0].mxu0
        %v2126 = vadd.f32 %v2025, %v2125
        %v2127 = vpop.f32.mrb[0].mxu0
        %v2128 = vpop.f32.mrb[0].mxu0
        %v2129 = vadd.f32 %v2025, %v2128
        %v2130 = vpop.f32.mrb[0].mxu0
        %2131 = vmatprep.mubr.bf16.mxu0 0
        %2132 = vmatmul.mubr.bf16.gmra.mrb[0].mxu0 %v2016
        %v2133 = vpop.f32.mrb[0].mxu0
        %v2134 = vadd.f32 %v2025, %v2133
        %v2135 = vpop.f32.mrb[0].mxu0
        %v2136 = vpop.f32.mrb[0].mxu0
        %v2137 = vadd.f32 %v2025, %v2136
        %v2138 = vpop.f32.mrb[0].mxu0
        %2139 = vmatprep.mubr.bf16.mxu0 0
        %2140 = vmatmul.mubr.bf16.gmra.mrb[0].mxu0 %v2017
        %v2141 = vpop.f32.mrb[0].mxu0
        %v2142 = vadd.f32 %v2025, %v2141
        %v2143 = vpop.f32.mrb[0].mxu0
        %v2144 = vpop.f32.mrb[0].mxu0
        %v2145 = vadd.f32 %v2025, %v2144
        %v2146 = vpop.f32.mrb[0].mxu0
        %2147 = vmatprep.mubr.bf16.mxu0 0
        %2148 = vmatmul.mubr.bf16.gmra.mrb[0].mxu0 %v2018
        %v2149 = vpop.f32.mrb[0].mxu0
        %v2150 = vadd.f32 %v2025, %v2149
        %v2151 = vpop.f32.mrb[0].mxu0
        %v2152 = vpop.f32.mrb[0].mxu0
        %v2153 = vadd.f32 %v2025, %v2152
        %v2154 = vpop.f32.mrb[0].mxu0
        %2155 = vmatprep.mubr.bf16.mxu0 0
        %2156 = vmatmul.mubr.bf16.gmra.mrb[0].mxu0 %v2019
        %v2157 = vpop.f32.mrb[0].mxu0
        %v2158 = vadd.f32 %v2025, %v2157
        %v2159 = vpop.f32.mrb[0].mxu0
        %v2160 = vpop.f32.mrb[0].mxu0
        %v2161 = vadd.f32 %v2025, %v2160
        %v2162 = vpop.f32.mrb[0].mxu0
        %2163 = vmatprep.mubr.bf16.mxu0 0
        %2164 = vmatmul.mubr.bf16.gmra.mrb[0].mxu0 %v2020
        %v2165 = vpop.f32.mrb[0].mxu0
        %v2166 = vadd.f32 %v2025, %v2165
        %v2167 = vpop.f32.mrb[0].mxu0
        %v2168 = vpop.f32.mrb[0].mxu0
        %v2169 = vadd.f32 %v2025, %v2168
        %v2170 = vpop.f32.mrb[0].mxu0
        %2171 = vdwg.mxu0
        %v2172 = vmax.f32 %v2110, 0.0
        %v2173 = vmax.f32 %v2113, 0.0
        %v2174 = vmax.f32 %v2118, 0.0
        %v2175 = vmax.f32 %v2121, 0.0
        %v2176 = vmax.f32 %v2126, 0.0
        %v2177 = vmax.f32 %v2129, 0.0
        %v2178 = vmax.f32 %v2134, 0.0
        %v2179 = vmax.f32 %v2137, 0.0
        %v2180 = vmax.f32 %v2142, 0.0
        %v2181 = vmax.f32 %v2145, 0.0
        %v2182 = vmax.f32 %v2150, 0.0
        %v2183 = vmax.f32 %v2153, 0.0
        %v2184 = vmax.f32 %v2158, 0.0
        %v2185 = vmax.f32 %v2161, 0.0
        %v2186 = vmax.f32 %v2166, 0.0
        %v2187 = vmax.f32 %v2169, 0.0
        %v2188 = vlaneseq
        %v2189 = vshrl.u32 %v2188, 7
        %v2190 = vsub.s32 2, %v2189
        %v2191 = vrot.slane %v829, %v2190
        %v2192 = vmul.f32 %v2172, %v2191
        %v2193 = vmul.f32 %v2173, %v2191
        %v2194 = vmul.f32 %v2174, %v2191
        %v2195 = vmul.f32 %v2175, %v2191
        %v2196 = vmul.f32 %v2176, %v2191
        %v2197 = vmul.f32 %v2177, %v2191
        %v2198 = vmul.f32 %v2178, %v2191
        %v2199 = vmul.f32 %v2179, %v2191
        %v2200 = vmul.f32 %v2180, %v2191
        %v2201 = vmul.f32 %v2181, %v2191
        %v2202 = vmul.f32 %v2182, %v2191
        %v2203 = vmul.f32 %v2183, %v2191
        %v2204 = vmul.f32 %v2184, %v2191
        %v2205 = vmul.f32 %v2185, %v2191
        %v2206 = vmul.f32 %v2186, %v2191
        %v2207 = vmul.f32 %v2187, %v2191
        %v2208 = vrot.slane %v2172, 6
        %v2209 = vrot.slane %v2173, 6
        %v2210 = vrot.slane %v2174, 6
        %v2211 = vrot.slane %v2175, 6
        %v2212 = vrot.slane %v2176, 6
        %v2213 = vrot.slane %v2177, 6
        %v2214 = vrot.slane %v2178, 6
        %v2215 = vrot.slane %v2179, 6
        %v2216 = vrot.slane %v2180, 6
        %v2217 = vrot.slane %v2181, 6
        %v2218 = vrot.slane %v2182, 6
        %v2219 = vrot.slane %v2183, 6
        %v2220 = vrot.slane %v2184, 6
        %v2221 = vrot.slane %v2185, 6
        %v2222 = vrot.slane %v2186, 6
        %v2223 = vrot.slane %v2187, 6
        %v2224 = vsel %vm954, %v2222, %v2223
        %v2225 = vsel %vm954, %v2221, %v2222
        %v2226 = vsel %vm954, %v2220, %v2221
        %v2227 = vsel %vm954, %v2219, %v2220
        %v2228 = vsel %vm954, %v2218, %v2219
        %v2229 = vsel %vm954, %v2217, %v2218
        %v2230 = vsel %vm954, %v2216, %v2217
        %v2231 = vsel %vm954, %v2215, %v2216
        %v2232 = vsel %vm954, %v2214, %v2215
        %v2233 = vsel %vm954, %v2213, %v2214
        %v2234 = vsel %vm954, %v2212, %v2213
        %v2235 = vsel %vm954, %v2211, %v2212
        %v2236 = vsel %vm954, %v2210, %v2211
        %v2237 = vsel %vm954, %v2209, %v2210
        %v2238 = vsel %vm954, %v2208, %v2209
        %v2239 = vsel %vm954, %v2223, %v2208
        %v2240 = vsel %vm1003, %v2239, 0.0
        %v2241 = vsel %vm1004, %v2238, 0.0
        %v2242 = vsel %vm1005, %v2237, 0.0
        %v2243 = vsel %vm1006, %v2236, 0.0
        %v2244 = vsel %vm1007, %v2235, 0.0
        %v2245 = vsel %vm1008, %v2234, 0.0
        %v2246 = vsel %vm1009, %v2233, 0.0
        %v2247 = vsel %vm1010, %v2232, 0.0
        %v2248 = vsel %vm1011, %v2231, 0.0
        %v2249 = vsel %vm1012, %v2230, 0.0
        %v2250 = vsel %vm1013, %v2229, 0.0
        %v2251 = vsel %vm1014, %v2228, 0.0
        %v2252 = vsel %vm1015, %v2227, 0.0
        %v2253 = vsel %vm1016, %v2226, 0.0
        %v2254 = vsel %vm1017, %v2225, 0.0
        %v2255 = vsel %vm1018, %v2224, 0.0
        %v2256 = vlaneseq
        %v2257 = vshrl.u32 %v2256, 7
        %v2258 = vsub.s32 0, %v2257
        %v2259 = vrot.slane %v829, %v2258
        %v2260 = vmul.f32 %v2240, %v2259
        %v2261 = vmul.f32 %v2241, %v2259
        %v2262 = vmul.f32 %v2242, %v2259
        %v2263 = vmul.f32 %v2243, %v2259
        %v2264 = vmul.f32 %v2244, %v2259
        %v2265 = vmul.f32 %v2245, %v2259
        %v2266 = vmul.f32 %v2246, %v2259
        %v2267 = vmul.f32 %v2247, %v2259
        %v2268 = vmul.f32 %v2248, %v2259
        %v2269 = vmul.f32 %v2249, %v2259
        %v2270 = vmul.f32 %v2250, %v2259
        %v2271 = vmul.f32 %v2251, %v2259
        %v2272 = vmul.f32 %v2252, %v2259
        %v2273 = vmul.f32 %v2253, %v2259
        %v2274 = vmul.f32 %v2254, %v2259
        %v2275 = vmul.f32 %v2255, %v2259
        %v2276 = vadd.f32 %v2192, %v2260
        %v2277 = vadd.f32 %v2193, %v2261
        %v2278 = vadd.f32 %v2194, %v2262
        %v2279 = vadd.f32 %v2195, %v2263
        %v2280 = vadd.f32 %v2196, %v2264
        %v2281 = vadd.f32 %v2197, %v2265
        %v2282 = vadd.f32 %v2198, %v2266
        %v2283 = vadd.f32 %v2199, %v2267
        %v2284 = vadd.f32 %v2200, %v2268
        %v2285 = vadd.f32 %v2201, %v2269
        %v2286 = vadd.f32 %v2202, %v2270
        %v2287 = vadd.f32 %v2203, %v2271
        %v2288 = vadd.f32 %v2204, %v2272
        %v2289 = vadd.f32 %v2205, %v2273
        %v2290 = vadd.f32 %v2206, %v2274
        %v2291 = vadd.f32 %v2207, %v2275
        %v2292 = vrot.slane %v2172, 7
        %v2293 = vrot.slane %v2173, 7
        %v2294 = vrot.slane %v2174, 7
        %v2295 = vrot.slane %v2175, 7
        %v2296 = vrot.slane %v2176, 7
        %v2297 = vrot.slane %v2177, 7
        %v2298 = vrot.slane %v2178, 7
        %v2299 = vrot.slane %v2179, 7
        %v2300 = vrot.slane %v2180, 7
        %v2301 = vrot.slane %v2181, 7
        %v2302 = vrot.slane %v2182, 7
        %v2303 = vrot.slane %v2183, 7
        %v2304 = vrot.slane %v2184, 7
        %v2305 = vrot.slane %v2185, 7
        %v2306 = vrot.slane %v2186, 7
        %v2307 = vrot.slane %v2187, 7
        %v2308 = vsel %vm1087, %v2306, %v2307
        %v2309 = vsel %vm1087, %v2305, %v2306
        %v2310 = vsel %vm1087, %v2304, %v2305
        %v2311 = vsel %vm1087, %v2303, %v2304
        %v2312 = vsel %vm1087, %v2302, %v2303
        %v2313 = vsel %vm1087, %v2301, %v2302
        %v2314 = vsel %vm1087, %v2300, %v2301
        %v2315 = vsel %vm1087, %v2299, %v2300
        %v2316 = vsel %vm1087, %v2298, %v2299
        %v2317 = vsel %vm1087, %v2297, %v2298
        %v2318 = vsel %vm1087, %v2296, %v2297
        %v2319 = vsel %vm1087, %v2295, %v2296
        %v2320 = vsel %vm1087, %v2294, %v2295
        %v2321 = vsel %vm1087, %v2293, %v2294
        %v2322 = vsel %vm1087, %v2292, %v2293
        %v2323 = vsel %vm1087, %v2307, %v2292
        %v2324 = vsel %vm1120, %v2323, 0.0
        %v2325 = vsel %vm1121, %v2322, 0.0
        %v2326 = vsel %vm1122, %v2321, 0.0
        %v2327 = vsel %vm1123, %v2320, 0.0
        %v2328 = vsel %vm1124, %v2319, 0.0
        %v2329 = vsel %vm1125, %v2318, 0.0
        %v2330 = vsel %vm1126, %v2317, 0.0
        %v2331 = vsel %vm1127, %v2316, 0.0
        %v2332 = vsel %vm1128, %v2315, 0.0
        %v2333 = vsel %vm1129, %v2314, 0.0
        %v2334 = vsel %vm1130, %v2313, 0.0
        %v2335 = vsel %vm1131, %v2312, 0.0
        %v2336 = vsel %vm1132, %v2311, 0.0
        %v2337 = vsel %vm1133, %v2310, 0.0
        %v2338 = vsel %vm1134, %v2309, 0.0
        %v2339 = vsel %vm1135, %v2308, 0.0
        %v2340 = vlaneseq
        %v2341 = vshrl.u32 %v2340, 7
        %v2342 = vsub.s32 1, %v2341
        %v2343 = vrot.slane %v829, %v2342
        %v2344 = vmul.f32 %v2324, %v2343
        %v2345 = vmul.f32 %v2325, %v2343
        %v2346 = vmul.f32 %v2326, %v2343
        %v2347 = vmul.f32 %v2327, %v2343
        %v2348 = vmul.f32 %v2328, %v2343
        %v2349 = vmul.f32 %v2329, %v2343
        %v2350 = vmul.f32 %v2330, %v2343
        %v2351 = vmul.f32 %v2331, %v2343
        %v2352 = vmul.f32 %v2332, %v2343
        %v2353 = vmul.f32 %v2333, %v2343
        %v2354 = vmul.f32 %v2334, %v2343
        %v2355 = vmul.f32 %v2335, %v2343
        %v2356 = vmul.f32 %v2336, %v2343
        %v2357 = vmul.f32 %v2337, %v2343
        %v2358 = vmul.f32 %v2338, %v2343
        %v2359 = vmul.f32 %v2339, %v2343
        %v2360 = vadd.f32 %v2276, %v2344
        %v2361 = vadd.f32 %v2277, %v2345
        %v2362 = vadd.f32 %v2278, %v2346
        %v2363 = vadd.f32 %v2279, %v2347
        %v2364 = vadd.f32 %v2280, %v2348
        %v2365 = vadd.f32 %v2281, %v2349
        %v2366 = vadd.f32 %v2282, %v2350
        %v2367 = vadd.f32 %v2283, %v2351
        %v2368 = vadd.f32 %v2284, %v2352
        %v2369 = vadd.f32 %v2285, %v2353
        %v2370 = vadd.f32 %v2286, %v2354
        %v2371 = vadd.f32 %v2287, %v2355
        %v2372 = vadd.f32 %v2288, %v2356
        %v2373 = vadd.f32 %v2289, %v2357
        %v2374 = vadd.f32 %v2290, %v2358
        %v2375 = vadd.f32 %v2291, %v2359
        %v2376 = vrot.slane %v2172, 1
        %v2377 = vrot.slane %v2173, 1
        %v2378 = vrot.slane %v2174, 1
        %v2379 = vrot.slane %v2175, 1
        %v2380 = vrot.slane %v2176, 1
        %v2381 = vrot.slane %v2177, 1
        %v2382 = vrot.slane %v2178, 1
        %v2383 = vrot.slane %v2179, 1
        %v2384 = vrot.slane %v2180, 1
        %v2385 = vrot.slane %v2181, 1
        %v2386 = vrot.slane %v2182, 1
        %v2387 = vrot.slane %v2183, 1
        %v2388 = vrot.slane %v2184, 1
        %v2389 = vrot.slane %v2185, 1
        %v2390 = vrot.slane %v2186, 1
        %v2391 = vrot.slane %v2187, 1
        %v2392 = vsel %vm1204, %v2390, %v2391
        %v2393 = vsel %vm1204, %v2389, %v2390
        %v2394 = vsel %vm1204, %v2388, %v2389
        %v2395 = vsel %vm1204, %v2387, %v2388
        %v2396 = vsel %vm1204, %v2386, %v2387
        %v2397 = vsel %vm1204, %v2385, %v2386
        %v2398 = vsel %vm1204, %v2384, %v2385
        %v2399 = vsel %vm1204, %v2383, %v2384
        %v2400 = vsel %vm1204, %v2382, %v2383
        %v2401 = vsel %vm1204, %v2381, %v2382
        %v2402 = vsel %vm1204, %v2380, %v2381
        %v2403 = vsel %vm1204, %v2379, %v2380
        %v2404 = vsel %vm1204, %v2378, %v2379
        %v2405 = vsel %vm1204, %v2377, %v2378
        %v2406 = vsel %vm1204, %v2376, %v2377
        %v2407 = vsel %vm1204, %v2391, %v2376
        %v2408 = vsel %vm1253, %v2406, 0.0
        %v2409 = vsel %vm1254, %v2405, 0.0
        %v2410 = vsel %vm1255, %v2404, 0.0
        %v2411 = vsel %vm1256, %v2403, 0.0
        %v2412 = vsel %vm1257, %v2402, 0.0
        %v2413 = vsel %vm1258, %v2401, 0.0
        %v2414 = vsel %vm1259, %v2400, 0.0
        %v2415 = vsel %vm1260, %v2399, 0.0
        %v2416 = vsel %vm1261, %v2398, 0.0
        %v2417 = vsel %vm1262, %v2397, 0.0
        %v2418 = vsel %vm1263, %v2396, 0.0
        %v2419 = vsel %vm1264, %v2395, 0.0
        %v2420 = vsel %vm1265, %v2394, 0.0
        %v2421 = vsel %vm1266, %v2393, 0.0
        %v2422 = vsel %vm1267, %v2392, 0.0
        %v2423 = vsel %vm1268, %v2407, 0.0
        %v2424 = vlaneseq
        %v2425 = vshrl.u32 %v2424, 7
        %v2426 = vsub.s32 3, %v2425
        %v2427 = vrot.slane %v829, %v2426
        %v2428 = vmul.f32 %v2408, %v2427
        %v2429 = vmul.f32 %v2409, %v2427
        %v2430 = vmul.f32 %v2410, %v2427
        %v2431 = vmul.f32 %v2411, %v2427
        %v2432 = vmul.f32 %v2412, %v2427
        %v2433 = vmul.f32 %v2413, %v2427
        %v2434 = vmul.f32 %v2414, %v2427
        %v2435 = vmul.f32 %v2415, %v2427
        %v2436 = vmul.f32 %v2416, %v2427
        %v2437 = vmul.f32 %v2417, %v2427
        %v2438 = vmul.f32 %v2418, %v2427
        %v2439 = vmul.f32 %v2419, %v2427
        %v2440 = vmul.f32 %v2420, %v2427
        %v2441 = vmul.f32 %v2421, %v2427
        %v2442 = vmul.f32 %v2422, %v2427
        %v2443 = vmul.f32 %v2423, %v2427
        %v2444 = vadd.f32 %v2360, %v2428
        %v2445 = vadd.f32 %v2361, %v2429
        %v2446 = vadd.f32 %v2362, %v2430
        %v2447 = vadd.f32 %v2363, %v2431
        %v2448 = vadd.f32 %v2364, %v2432
        %v2449 = vadd.f32 %v2365, %v2433
        %v2450 = vadd.f32 %v2366, %v2434
        %v2451 = vadd.f32 %v2367, %v2435
        %v2452 = vadd.f32 %v2368, %v2436
        %v2453 = vadd.f32 %v2369, %v2437
        %v2454 = vadd.f32 %v2370, %v2438
        %v2455 = vadd.f32 %v2371, %v2439
        %v2456 = vadd.f32 %v2372, %v2440
        %v2457 = vadd.f32 %v2373, %v2441
        %v2458 = vadd.f32 %v2374, %v2442
        %v2459 = vadd.f32 %v2375, %v2443
        %v2460 = vrot.slane %v2172, 2
        %v2461 = vrot.slane %v2173, 2
        %v2462 = vrot.slane %v2174, 2
        %v2463 = vrot.slane %v2175, 2
        %v2464 = vrot.slane %v2176, 2
        %v2465 = vrot.slane %v2177, 2
        %v2466 = vrot.slane %v2178, 2
        %v2467 = vrot.slane %v2179, 2
        %v2468 = vrot.slane %v2180, 2
        %v2469 = vrot.slane %v2181, 2
        %v2470 = vrot.slane %v2182, 2
        %v2471 = vrot.slane %v2183, 2
        %v2472 = vrot.slane %v2184, 2
        %v2473 = vrot.slane %v2185, 2
        %v2474 = vrot.slane %v2186, 2
        %v2475 = vrot.slane %v2187, 2
        %v2476 = vsel %vm1337, %v2474, %v2475
        %v2477 = vsel %vm1337, %v2473, %v2474
        %v2478 = vsel %vm1337, %v2472, %v2473
        %v2479 = vsel %vm1337, %v2471, %v2472
        %v2480 = vsel %vm1337, %v2470, %v2471
        %v2481 = vsel %vm1337, %v2469, %v2470
        %v2482 = vsel %vm1337, %v2468, %v2469
        %v2483 = vsel %vm1337, %v2467, %v2468
        %v2484 = vsel %vm1337, %v2466, %v2467
        %v2485 = vsel %vm1337, %v2465, %v2466
        %v2486 = vsel %vm1337, %v2464, %v2465
        %v2487 = vsel %vm1337, %v2463, %v2464
        %v2488 = vsel %vm1337, %v2462, %v2463
        %v2489 = vsel %vm1337, %v2461, %v2462
        %v2490 = vsel %vm1337, %v2460, %v2461
        %v2491 = vsel %vm1337, %v2475, %v2460
        %v2492 = vsel %vm1370, %v2490, 0.0
        %v2493 = vsel %vm1371, %v2489, 0.0
        %v2494 = vsel %vm1372, %v2488, 0.0
        %v2495 = vsel %vm1373, %v2487, 0.0
        %v2496 = vsel %vm1374, %v2486, 0.0
        %v2497 = vsel %vm1375, %v2485, 0.0
        %v2498 = vsel %vm1376, %v2484, 0.0
        %v2499 = vsel %vm1377, %v2483, 0.0
        %v2500 = vsel %vm1378, %v2482, 0.0
        %v2501 = vsel %vm1379, %v2481, 0.0
        %v2502 = vsel %vm1380, %v2480, 0.0
        %v2503 = vsel %vm1381, %v2479, 0.0
        %v2504 = vsel %vm1382, %v2478, 0.0
        %v2505 = vsel %vm1383, %v2477, 0.0
        %v2506 = vsel %vm1384, %v2476, 0.0
        %v2507 = vsel %vm1385, %v2491, 0.0
        %v2508 = vlaneseq
        %v2509 = vshrl.u32 %v2508, 7
        %v2510 = vsub.s32 4, %v2509
        %v2511 = vrot.slane %v829, %v2510
        %v2512 = vmul.f32 %v2492, %v2511
        %v2513 = vmul.f32 %v2493, %v2511
        %v2514 = vmul.f32 %v2494, %v2511
        %v2515 = vmul.f32 %v2495, %v2511
        %v2516 = vmul.f32 %v2496, %v2511
        %v2517 = vmul.f32 %v2497, %v2511
        %v2518 = vmul.f32 %v2498, %v2511
        %v2519 = vmul.f32 %v2499, %v2511
        %v2520 = vmul.f32 %v2500, %v2511
        %v2521 = vmul.f32 %v2501, %v2511
        %v2522 = vmul.f32 %v2502, %v2511
        %v2523 = vmul.f32 %v2503, %v2511
        %v2524 = vmul.f32 %v2504, %v2511
        %v2525 = vmul.f32 %v2505, %v2511
        %v2526 = vmul.f32 %v2506, %v2511
        %v2527 = vmul.f32 %v2507, %v2511
        %v2528 = vadd.f32 %v2444, %v2512
        %v2529 = vadd.f32 %v2445, %v2513
        %v2530 = vadd.f32 %v2446, %v2514
        %v2531 = vadd.f32 %v2447, %v2515
        %v2532 = vadd.f32 %v2448, %v2516
        %v2533 = vadd.f32 %v2449, %v2517
        %v2534 = vadd.f32 %v2450, %v2518
        %v2535 = vadd.f32 %v2451, %v2519
        %v2536 = vadd.f32 %v2452, %v2520
        %v2537 = vadd.f32 %v2453, %v2521
        %v2538 = vadd.f32 %v2454, %v2522
        %v2539 = vadd.f32 %v2455, %v2523
        %v2540 = vadd.f32 %v2456, %v2524
        %v2541 = vadd.f32 %v2457, %v2525
        %v2542 = vadd.f32 %v2458, %v2526
        %v2543 = vadd.f32 %v2459, %v2527
        %v2545 = vlaneseq
        %v2546 = vshrl.u32 %v2545, 7
        %v2547 = vsub.s32 0, %v2546
        %v2548 = vrot.slane %v830, %v2547
        %v2550 = vadd.f32 %v2528, %v2548
        %v2551 = vadd.f32 %v2529, %v2548
        %v2552 = vadd.f32 %v2530, %v2548
        %v2553 = vadd.f32 %v2531, %v2548
        %v2554 = vadd.f32 %v2532, %v2548
        %v2555 = vadd.f32 %v2533, %v2548
        %v2556 = vadd.f32 %v2534, %v2548
        %v2557 = vadd.f32 %v2535, %v2548
        %v2558 = vadd.f32 %v2536, %v2548
        %v2559 = vadd.f32 %v2537, %v2548
        %v2560 = vadd.f32 %v2538, %v2548
        %v2561 = vadd.f32 %v2539, %v2548
        %v2562 = vadd.f32 %v2540, %v2548
        %v2563 = vadd.f32 %v2541, %v2548
        %v2564 = vadd.f32 %v2542, %v2548
        %v2565 = vadd.f32 %v2543, %v2548
        %v2566 = vpack.c.bf16 %v2551, %v2550
        %v2567 = vpack.c.bf16 %v2553, %v2552
        %v2568 = vpack.c.bf16 %v2555, %v2554
        %v2569 = vpack.c.bf16 %v2557, %v2556
        %v2570 = vpack.c.bf16 %v2559, %v2558
        %v2571 = vpack.c.bf16 %v2561, %v2560
        %v2572 = vpack.c.bf16 %v2563, %v2562
        %v2573 = vpack.c.bf16 %v2565, %v2564
        %v2575 = vlaneseq
        %v2576 = vshrl.u32 %v2575, 7
        %v2577 = vsub.s32 0, %v2576
        %v2578 = vrot.slane %v847, %v2577
        %v2596 = vunpack.c.l.b16 %v831
        %v2597 = vunpack.c.l.b16 %v832
        %v2598 = vunpack.c.l.b16 %v833
        %v2599 = vunpack.c.l.b16 %v834
        %v2600 = vunpack.c.l.b16 %v835
        %v2601 = vunpack.c.l.b16 %v836
        %v2602 = vunpack.c.l.b16 %v837
        %v2603 = vunpack.c.l.b16 %v838
        %v2604 = vunpack.c.l.b16 %v839
        %v2605 = vunpack.c.l.b16 %v840
        %v2606 = vunpack.c.l.b16 %v841
        %v2607 = vunpack.c.l.b16 %v842
        %v2608 = vunpack.c.l.b16 %v843
        %v2609 = vunpack.c.l.b16 %v844
        %v2610 = vunpack.c.l.b16 %v845
        %v2611 = vunpack.c.l.b16 %v846
        %v2612 = vpack.c.b16 %v2597, %v2596
        %v2613 = vpack.c.b16 %v2599, %v2598
        %v2614 = vpack.c.b16 %v2601, %v2600
        %v2615 = vpack.c.b16 %v2603, %v2602
        %v2616 = vpack.c.b16 %v2605, %v2604
        %v2617 = vpack.c.b16 %v2607, %v2606
        %v2618 = vpack.c.b16 %v2609, %v2608
        %v2619 = vpack.c.b16 %v2611, %v2610
        %2628 = vmatprep.subr.bf16.mxu0 0
        %2629 = vmatpush1.bf16.msra.mxu0 %v2612
        %2630 = vmatprep.subr.bf16.mxu0 0
        %2631 = vmatpush1.bf16.msra.mxu0 %v2613
        %2632 = vmatprep.subr.bf16.mxu0 0
        %2633 = vmatpush1.bf16.msra.mxu0 %v2614
        %2634 = vmatprep.subr.bf16.mxu0 0
        %2635 = vmatpush1.bf16.msra.mxu0 %v2615
        %2636 = vmatprep.subr.bf16.mxu0 0
        %2637 = vmatpush1.bf16.msra.mxu0 %v2616
        %2638 = vmatprep.subr.bf16.mxu0 0
        %2639 = vmatpush1.bf16.msra.mxu0 %v2617
        %2640 = vmatprep.subr.bf16.mxu0 0
        %2641 = vmatpush1.bf16.msra.mxu0 %v2618
        %2642 = vmatprep.subr.bf16.mxu0 0
        %2643 = vmatpush1.bf16.msra.mxu0 %v2619
        %2644 = vmatprep.subr.bf16.mxu0 0
        %2645 = vmatpush1.bf16.msra.mxu0 0
        %2646 = vmatprep.subr.bf16.mxu0 0
        %2647 = vmatpush1.bf16.msra.mxu0 0
        %2648 = vmatprep.subr.bf16.mxu0 0
        %2649 = vmatpush1.bf16.msra.mxu0 0
        %2650 = vmatprep.subr.bf16.mxu0 0
        %2651 = vmatpush1.bf16.msra.mxu0 0
        %2652 = vmatprep.subr.bf16.mxu0 0
        %2653 = vmatpush1.bf16.msra.mxu0 0
        %2654 = vmatprep.subr.bf16.mxu0 0
        %2655 = vmatpush1.bf16.msra.mxu0 0
        %2656 = vmatprep.subr.bf16.mxu0 0
        %2657 = vmatpush1.bf16.msra.mxu0 0
        %2658 = vmatprep.subr.bf16.mxu0 0
        %2659 = vmatpush1.bf16.msra.mxu0 0
        %2660 = vmatprep.mubr.bf16.mxu0 0
        %2661 = vmatmul.mubr.bf16.gmra.mrb[0].mxu0 %v2566
        %v2662 = vpop.f32.mrb[0].mxu0
        %v2663 = vadd.f32 %v2578, %v2662
        %v2664 = vpop.f32.mrb[0].mxu0
        %v2665 = vpop.f32.mrb[0].mxu0
        %v2666 = vadd.f32 %v2578, %v2665
        %v2667 = vpop.f32.mrb[0].mxu0
        %2668 = vmatprep.mubr.bf16.mxu0 0
        %2669 = vmatmul.mubr.bf16.gmra.mrb[0].mxu0 %v2567
        %v2670 = vpop.f32.mrb[0].mxu0
        %v2671 = vadd.f32 %v2578, %v2670
        %v2672 = vpop.f32.mrb[0].mxu0
        %v2673 = vpop.f32.mrb[0].mxu0
        %v2674 = vadd.f32 %v2578, %v2673
        %v2675 = vpop.f32.mrb[0].mxu0
        %2676 = vmatprep.mubr.bf16.mxu0 0
        %2677 = vmatmul.mubr.bf16.gmra.mrb[0].mxu0 %v2568
        %v2678 = vpop.f32.mrb[0].mxu0
        %v2679 = vadd.f32 %v2578, %v2678
        %v2680 = vpop.f32.mrb[0].mxu0
        %v2681 = vpop.f32.mrb[0].mxu0
        %v2682 = vadd.f32 %v2578, %v2681
        %v2683 = vpop.f32.mrb[0].mxu0
        %2684 = vmatprep.mubr.bf16.mxu0 0
        %2685 = vmatmul.mubr.bf16.gmra.mrb[0].mxu0 %v2569
        %v2686 = vpop.f32.mrb[0].mxu0
        %v2687 = vadd.f32 %v2578, %v2686
        %v2688 = vpop.f32.mrb[0].mxu0
        %v2689 = vpop.f32.mrb[0].mxu0
        %v2690 = vadd.f32 %v2578, %v2689
        %v2691 = vpop.f32.mrb[0].mxu0
        %2692 = vmatprep.mubr.bf16.mxu0 0
        %2693 = vmatmul.mubr.bf16.gmra.mrb[0].mxu0 %v2570
        %v2694 = vpop.f32.mrb[0].mxu0
        %v2695 = vadd.f32 %v2578, %v2694
        %v2696 = vpop.f32.mrb[0].mxu0
        %v2697 = vpop.f32.mrb[0].mxu0
        %v2698 = vadd.f32 %v2578, %v2697
        %v2699 = vpop.f32.mrb[0].mxu0
        %2700 = vmatprep.mubr.bf16.mxu0 0
        %2701 = vmatmul.mubr.bf16.gmra.mrb[0].mxu0 %v2571
        %v2702 = vpop.f32.mrb[0].mxu0
        %v2703 = vadd.f32 %v2578, %v2702
        %v2704 = vpop.f32.mrb[0].mxu0
        %v2705 = vpop.f32.mrb[0].mxu0
        %v2706 = vadd.f32 %v2578, %v2705
        %v2707 = vpop.f32.mrb[0].mxu0
        %2708 = vmatprep.mubr.bf16.mxu0 0
        %2709 = vmatmul.mubr.bf16.gmra.mrb[0].mxu0 %v2572
        %v2710 = vpop.f32.mrb[0].mxu0
        %v2711 = vadd.f32 %v2578, %v2710
        %v2712 = vpop.f32.mrb[0].mxu0
        %v2713 = vpop.f32.mrb[0].mxu0
        %v2714 = vadd.f32 %v2578, %v2713
        %v2715 = vpop.f32.mrb[0].mxu0
        %2716 = vmatprep.mubr.bf16.mxu0 0
        %2717 = vmatmul.mubr.bf16.gmra.mrb[0].mxu0 %v2573
        %v2718 = vpop.f32.mrb[0].mxu0
        %v2719 = vadd.f32 %v2578, %v2718
        %v2720 = vpop.f32.mrb[0].mxu0
        %v2721 = vpop.f32.mrb[0].mxu0
        %v2722 = vadd.f32 %v2578, %v2721
        %v2723 = vpop.f32.mrb[0].mxu0
        %2724 = vdwg.mxu0
        %v2725 = vadd.f32 %v2663, %v2666
        %v2726 = vadd.f32 %v2725, %v2671
        %v2727 = vadd.f32 %v2726, %v2674
        %v2728 = vadd.f32 %v2727, %v2679
        %v2729 = vadd.f32 %v2728, %v2682
        %v2730 = vadd.f32 %v2729, %v2687
        %v2731 = vadd.f32 %v2730, %v2690
        %v2732 = vadd.f32 %v2731, %v2695
        %v2733 = vadd.f32 %v2732, %v2698
        %v2734 = vadd.f32 %v2733, %v2703
        %v2735 = vadd.f32 %v2734, %v2706
        %v2736 = vadd.f32 %v2735, %v2711
        %v2737 = vadd.f32 %v2736, %v2714
        %v2738 = vadd.f32 %v2737, %v2719
        %v2739 = vadd.f32 %v2738, %v2722
        %v2740 = vrot.slane %v2739, 4
        %v2741 = vadd.f32 %v2739, %v2740
        %v2742 = vrot.slane %v2741, 2
        %v2743 = vadd.f32 %v2741, %v2742
        %v2744 = vrot.slane %v2743, 1
        %v2745 = vadd.f32 %v2743, %v2744
        %v2746 = vrcp.pop 128.0
        %v2747 = vmul.f32 %v2745, %v2746
        %v2748 = vpack.c.bf16 %v2747, %v2747
        %v2765 = vunpack.c.l.b16 %v848
        %v2766 = vunpack.c.l.b16 %v849
        %v2767 = vunpack.c.l.b16 %v850
        %v2768 = vunpack.c.l.b16 %v851
        %v2769 = vunpack.c.l.b16 %v852
        %v2770 = vunpack.c.l.b16 %v853
        %v2771 = vunpack.c.l.b16 %v854
        %v2772 = vunpack.c.l.b16 %v855
        %v2773 = vunpack.c.l.b16 %v856
        %v2774 = vunpack.c.l.b16 %v857
        %v2775 = vunpack.c.l.b16 %v858
        %v2776 = vunpack.c.l.b16 %v859
        %v2777 = vunpack.c.l.b16 %v860
        %v2778 = vunpack.c.l.b16 %v861
        %v2779 = vunpack.c.l.b16 %v862
        %v2780 = vunpack.c.l.b16 %v863
        %v2781 = vpack.c.b16 %v2766, %v2765
        %v2782 = vpack.c.b16 %v2768, %v2767
        %v2783 = vpack.c.b16 %v2770, %v2769
        %v2784 = vpack.c.b16 %v2772, %v2771
        %v2785 = vpack.c.b16 %v2774, %v2773
        %v2786 = vpack.c.b16 %v2776, %v2775
        %v2787 = vpack.c.b16 %v2778, %v2777
        %v2788 = vpack.c.b16 %v2780, %v2779
        %2797 = vmatprep.subr.bf16.mxu0 0
        %2798 = vmatpush1.bf16.msra.mxu0 %v2781
        %2799 = vmatprep.subr.bf16.mxu0 0
        %2800 = vmatpush1.bf16.msra.mxu0 %v2782
        %2801 = vmatprep.subr.bf16.mxu0 0
        %2802 = vmatpush1.bf16.msra.mxu0 %v2783
        %2803 = vmatprep.subr.bf16.mxu0 0
        %2804 = vmatpush1.bf16.msra.mxu0 %v2784
        %2805 = vmatprep.subr.bf16.mxu0 0
        %2806 = vmatpush1.bf16.msra.mxu0 %v2785
        %2807 = vmatprep.subr.bf16.mxu0 0
        %2808 = vmatpush1.bf16.msra.mxu0 %v2786
        %2809 = vmatprep.subr.bf16.mxu0 0
        %2810 = vmatpush1.bf16.msra.mxu0 %v2787
        %2811 = vmatprep.subr.bf16.mxu0 0
        %2812 = vmatpush1.bf16.msra.mxu0 %v2788
        %2813 = vmatprep.subr.bf16.mxu0 0
        %2814 = vmatpush1.bf16.msra.mxu0 0
        %2815 = vmatprep.subr.bf16.mxu0 0
        %2816 = vmatpush1.bf16.msra.mxu0 0
        %2817 = vmatprep.subr.bf16.mxu0 0
        %2818 = vmatpush1.bf16.msra.mxu0 0
        %2819 = vmatprep.subr.bf16.mxu0 0
        %2820 = vmatpush1.bf16.msra.mxu0 0
        %2821 = vmatprep.subr.bf16.mxu0 0
        %2822 = vmatpush1.bf16.msra.mxu0 0
        %2823 = vmatprep.subr.bf16.mxu0 0
        %2824 = vmatpush1.bf16.msra.mxu0 0
        %2825 = vmatprep.subr.bf16.mxu0 0
        %2826 = vmatpush1.bf16.msra.mxu0 0
        %2827 = vmatprep.subr.bf16.mxu0 0
        %2828 = vmatpush1.bf16.msra.mxu0 0
        %2829 = vmatprep.mubr.bf16.mxu0 0
        %2830 = vmatmul.mubr.bf16.gmra.mrb[0].mxu0 %v2748
        %v2831 = vpop.f32.mrb[0].mxu0
        %v2832 = vadd.f32 %v864, %v2831
        %v2833 = vpop.f32.mrb[0].mxu0
        %v2834 = vpop.f32.mrb[0].mxu0
        %v2835 = vpop.f32.mrb[0].mxu0
        %2836 = vdwg.mxu0
        %v2837 = vmax.f32 %v2832, 0.0
        %v2838 = vpack.c.bf16 %v2837, %v2837
        %v2841 = vunpack.c.l.b16 %v865
        %v2842 = vunpack.c.l.b16 %v866
        %v2843 = vpack.c.b16 %v2842, %v2841
        %vm2845 = vcmask 130048
        %v2847 = vsel %vm2845, %v2838, 0
        %2849 = vmatprep.subr.bf16.mxu0 0
        %2850 = vmatpush1.bf16.msra.mxu0 %v2843
        %2851 = vmatprep.subr.bf16.mxu0 0
        %2852 = vmatpush1.bf16.msra.mxu0 0
        %2853 = vmatprep.subr.bf16.mxu0 0
        %2854 = vmatpush1.bf16.msra.mxu0 0
        %2855 = vmatprep.subr.bf16.mxu0 0
        %2856 = vmatpush1.bf16.msra.mxu0 0
        %2857 = vmatprep.subr.bf16.mxu0 0
        %2858 = vmatpush1.bf16.msra.mxu0 0
        %2859 = vmatprep.subr.bf16.mxu0 0
        %2860 = vmatpush1.bf16.msra.mxu0 0
        %2861 = vmatprep.subr.bf16.mxu0 0
        %2862 = vmatpush1.bf16.msra.mxu0 0
        %2863 = vmatprep.subr.bf16.mxu0 0
        %2864 = vmatpush1.bf16.msra.mxu0 0
        %2865 = vmatprep.subr.bf16.mxu0 0
        %2866 = vmatpush1.bf16.msra.mxu0 0
        %2867 = vmatprep.subr.bf16.mxu0 0
        %2868 = vmatpush1.bf16.msra.mxu0 0
        %2869 = vmatprep.subr.bf16.mxu0 0
        %2870 = vmatpush1.bf16.msra.mxu0 0
        %2871 = vmatprep.subr.bf16.mxu0 0
        %2872 = vmatpush1.bf16.msra.mxu0 0
        %2873 = vmatprep.subr.bf16.mxu0 0
        %2874 = vmatpush1.bf16.msra.mxu0 0
        %2875 = vmatprep.subr.bf16.mxu0 0
        %2876 = vmatpush1.bf16.msra.mxu0 0
        %2877 = vmatprep.subr.bf16.mxu0 0
        %2878 = vmatpush1.bf16.msra.mxu0 0
        %2879 = vmatprep.subr.bf16.mxu0 0
        %2880 = vmatpush1.bf16.msra.mxu0 0
        %2881 = vmatprep.mubr.bf16.mxu0 0
        %2882 = vmatmul.mubr.bf16.gmra.mrb[0].mxu0 %v2847
        %v2883 = vpop.f32.mrb[0].mxu0
        %v2884 = vadd.f32 %v867, %v2883
        %v2885 = vpop.f32.mrb[0].mxu0
        %v2886 = vpop.f32.mrb[0].mxu0
        %v2887 = vpop.f32.mrb[0].mxu0
        %2888 = vdwg.mxu0
        %v2889 = vxor.u32 %v2884, 2147483648
        %v2890 = vmul.f32 %v2889, 1.442695
        %v2891 = vpow.pop %v2890
        %v2892 = vadd.f32 %v2891, 1.0
        %v2893 = vrcp.pop %v2892
        %v2894 = vmul.f32 1.0, %v2893
        %v2895 = vlaneseq
        %v2896 = vshrl.u32 %v2895, 7
        %v2897 = vsub.s32 0, %v2896
        %v2898 = vrot.slane %v2894, %v2897
        %v2899 = vmul.f32 %v2663, %v2898
        %v2900 = vmul.f32 %v2666, %v2898
        %v2901 = vmul.f32 %v2671, %v2898
        %v2902 = vmul.f32 %v2674, %v2898
        %v2903 = vmul.f32 %v2679, %v2898
        %v2904 = vmul.f32 %v2682, %v2898
        %v2905 = vmul.f32 %v2687, %v2898
        %v2906 = vmul.f32 %v2690, %v2898
        %v2907 = vmul.f32 %v2695, %v2898
        %v2908 = vmul.f32 %v2698, %v2898
        %v2909 = vmul.f32 %v2703, %v2898
        %v2910 = vmul.f32 %v2706, %v2898
        %v2911 = vmul.f32 %v2711, %v2898
        %v2912 = vmul.f32 %v2714, %v2898
        %v2913 = vmul.f32 %v2719, %v2898
        %v2914 = vmul.f32 %v2722, %v2898
        %v2915 = vpack.c.bf16 %v886, %v885
        %v2916 = vpack.c.bf16 %v888, %v887
        %v2917 = vpack.c.bf16 %v890, %v889
        %v2918 = vpack.c.bf16 %v892, %v891
        %v2919 = vpack.c.bf16 %v894, %v893
        %v2920 = vpack.c.bf16 %v896, %v895
        %v2921 = vpack.c.bf16 %v898, %v897
        %v2922 = vpack.c.bf16 %v900, %v899
        %v2924 = vlaneseq
        %v2925 = vshrl.u32 %v2924, 7
        %v2926 = vsub.s32 0, %v2925
        %v2927 = vrot.slane %v884, %v2926
        %v2945 = vunpack.c.l.b16 %v868
        %v2946 = vunpack.c.l.b16 %v869
        %v2947 = vunpack.c.l.b16 %v870
        %v2948 = vunpack.c.l.b16 %v871
        %v2949 = vunpack.c.l.b16 %v872
        %v2950 = vunpack.c.l.b16 %v873
        %v2951 = vunpack.c.l.b16 %v874
        %v2952 = vunpack.c.l.b16 %v875
        %v2953 = vunpack.c.l.b16 %v876
        %v2954 = vunpack.c.l.b16 %v877
        %v2955 = vunpack.c.l.b16 %v878
        %v2956 = vunpack.c.l.b16 %v879
        %v2957 = vunpack.c.l.b16 %v880
        %v2958 = vunpack.c.l.b16 %v881
        %v2959 = vunpack.c.l.b16 %v882
        %v2960 = vunpack.c.l.b16 %v883
        %v2961 = vpack.c.b16 %v2946, %v2945
        %v2962 = vpack.c.b16 %v2948, %v2947
        %v2963 = vpack.c.b16 %v2950, %v2949
        %v2964 = vpack.c.b16 %v2952, %v2951
        %v2965 = vpack.c.b16 %v2954, %v2953
        %v2966 = vpack.c.b16 %v2956, %v2955
        %v2967 = vpack.c.b16 %v2958, %v2957
        %v2968 = vpack.c.b16 %v2960, %v2959
        %2977 = vmatprep.subr.bf16.mxu0 0
        %2978 = vmatpush1.bf16.msra.mxu0 %v2961
        %2979 = vmatprep.subr.bf16.mxu0 0
        %2980 = vmatpush1.bf16.msra.mxu0 %v2962
        %2981 = vmatprep.subr.bf16.mxu0 0
        %2982 = vmatpush1.bf16.msra.mxu0 %v2963
        %2983 = vmatprep.subr.bf16.mxu0 0
        %2984 = vmatpush1.bf16.msra.mxu0 %v2964
        %2985 = vmatprep.subr.bf16.mxu0 0
        %2986 = vmatpush1.bf16.msra.mxu0 %v2965
        %2987 = vmatprep.subr.bf16.mxu0 0
        %2988 = vmatpush1.bf16.msra.mxu0 %v2966
        %2989 = vmatprep.subr.bf16.mxu0 0
        %2990 = vmatpush1.bf16.msra.mxu0 %v2967
        %2991 = vmatprep.subr.bf16.mxu0 0
        %2992 = vmatpush1.bf16.msra.mxu0 %v2968
        %2993 = vmatprep.subr.bf16.mxu0 0
        %2994 = vmatpush1.bf16.msra.mxu0 0
        %2995 = vmatprep.subr.bf16.mxu0 0
        %2996 = vmatpush1.bf16.msra.mxu0 0
        %2997 = vmatprep.subr.bf16.mxu0 0
        %2998 = vmatpush1.bf16.msra.mxu0 0
        %2999 = vmatprep.subr.bf16.mxu0 0
        %3000 = vmatpush1.bf16.msra.mxu0 0
        %3001 = vmatprep.subr.bf16.mxu0 0
        %3002 = vmatpush1.bf16.msra.mxu0 0
        %3003 = vmatprep.subr.bf16.mxu0 0
        %3004 = vmatpush1.bf16.msra.mxu0 0
        %3005 = vmatprep.subr.bf16.mxu0 0
        %3006 = vmatpush1.bf16.msra.mxu0 0
        %3007 = vmatprep.subr.bf16.mxu0 0
        %3008 = vmatpush1.bf16.msra.mxu0 0
        %3009 = vmatprep.mubr.bf16.mxu0 0
        %3010 = vmatmul.mubr.bf16.gmra.mrb[0].mxu0 %v2915
        %v3011 = vpop.f32.mrb[0].mxu0
        %v3012 = vadd.f32 %v2927, %v3011
        %v3013 = vpop.f32.mrb[0].mxu0
        %v3014 = vpop.f32.mrb[0].mxu0
        %v3015 = vadd.f32 %v2927, %v3014
        %v3016 = vpop.f32.mrb[0].mxu0
        %3017 = vmatprep.mubr.bf16.mxu0 0
        %3018 = vmatmul.mubr.bf16.gmra.mrb[0].mxu0 %v2916
        %v3019 = vpop.f32.mrb[0].mxu0
        %v3020 = vadd.f32 %v2927, %v3019
        %v3021 = vpop.f32.mrb[0].mxu0
        %v3022 = vpop.f32.mrb[0].mxu0
        %v3023 = vadd.f32 %v2927, %v3022
        %v3024 = vpop.f32.mrb[0].mxu0
        %3025 = vmatprep.mubr.bf16.mxu0 0
        %3026 = vmatmul.mubr.bf16.gmra.mrb[0].mxu0 %v2917
        %v3027 = vpop.f32.mrb[0].mxu0
        %v3028 = vadd.f32 %v2927, %v3027
        %v3029 = vpop.f32.mrb[0].mxu0
        %v3030 = vpop.f32.mrb[0].mxu0
        %v3031 = vadd.f32 %v2927, %v3030
        %v3032 = vpop.f32.mrb[0].mxu0
        %3033 = vmatprep.mubr.bf16.mxu0 0
        %3034 = vmatmul.mubr.bf16.gmra.mrb[0].mxu0 %v2918
        %v3035 = vpop.f32.mrb[0].mxu0
        %v3036 = vadd.f32 %v2927, %v3035
        %v3037 = vpop.f32.mrb[0].mxu0
        %v3038 = vpop.f32.mrb[0].mxu0
        %v3039 = vadd.f32 %v2927, %v3038
        %v3040 = vpop.f32.mrb[0].mxu0
        %3041 = vmatprep.mubr.bf16.mxu0 0
        %3042 = vmatmul.mubr.bf16.gmra.mrb[0].mxu0 %v2919
        %v3043 = vpop.f32.mrb[0].mxu0
        %v3044 = vadd.f32 %v2927, %v3043
        %v3045 = vpop.f32.mrb[0].mxu0
        %v3046 = vpop.f32.mrb[0].mxu0
        %v3047 = vadd.f32 %v2927, %v3046
        %v3048 = vpop.f32.mrb[0].mxu0
        %3049 = vmatprep.mubr.bf16.mxu0 0
        %3050 = vmatmul.mubr.bf16.gmra.mrb[0].mxu0 %v2920
        %v3051 = vpop.f32.mrb[0].mxu0
        %v3052 = vadd.f32 %v2927, %v3051
        %v3053 = vpop.f32.mrb[0].mxu0
        %v3054 = vpop.f32.mrb[0].mxu0
        %v3055 = vadd.f32 %v2927, %v3054
        %v3056 = vpop.f32.mrb[0].mxu0
        %3057 = vmatprep.mubr.bf16.mxu0 0
        %3058 = vmatmul.mubr.bf16.gmra.mrb[0].mxu0 %v2921
        %v3059 = vpop.f32.mrb[0].mxu0
        %v3060 = vadd.f32 %v2927, %v3059
        %v3061 = vpop.f32.mrb[0].mxu0
        %v3062 = vpop.f32.mrb[0].mxu0
        %v3063 = vadd.f32 %v2927, %v3062
        %v3064 = vpop.f32.mrb[0].mxu0
        %3065 = vmatprep.mubr.bf16.mxu0 0
        %3066 = vmatmul.mubr.bf16.gmra.mrb[0].mxu0 %v2922
        %v3067 = vpop.f32.mrb[0].mxu0
        %v3068 = vadd.f32 %v2927, %v3067
        %v3069 = vpop.f32.mrb[0].mxu0
        %v3070 = vpop.f32.mrb[0].mxu0
        %v3071 = vadd.f32 %v2927, %v3070
        %v3072 = vpop.f32.mrb[0].mxu0
        %3073 = vdwg.mxu0
        %v3074 = vadd.f32 %v3012, %v2899
        %v3075 = vadd.f32 %v3015, %v2900
        %v3076 = vadd.f32 %v3020, %v2901
        %v3077 = vadd.f32 %v3023, %v2902
        %v3078 = vadd.f32 %v3028, %v2903
        %v3079 = vadd.f32 %v3031, %v2904
        %v3080 = vadd.f32 %v3036, %v2905
        %v3081 = vadd.f32 %v3039, %v2906
        %v3082 = vadd.f32 %v3044, %v2907
        %v3083 = vadd.f32 %v3047, %v2908
        %v3084 = vadd.f32 %v3052, %v2909
        %v3085 = vadd.f32 %v3055, %v2910
        %v3086 = vadd.f32 %v3060, %v2911
        %v3087 = vadd.f32 %v3063, %v2912
        %v3088 = vadd.f32 %v3068, %v2913
        %v3089 = vadd.f32 %v3071, %v2914
        %v3090 = vmax.f32 %v3074, 0.0
        %v3091 = vmax.f32 %v3075, 0.0
        %v3092 = vmax.f32 %v3076, 0.0
        %v3093 = vmax.f32 %v3077, 0.0
        %v3094 = vmax.f32 %v3078, 0.0
        %v3095 = vmax.f32 %v3079, 0.0
        %v3096 = vmax.f32 %v3080, 0.0
        %v3097 = vmax.f32 %v3081, 0.0
        %v3098 = vmax.f32 %v3082, 0.0
        %v3099 = vmax.f32 %v3083, 0.0
        %v3100 = vmax.f32 %v3084, 0.0
        %v3101 = vmax.f32 %v3085, 0.0
        %v3102 = vmax.f32 %v3086, 0.0
        %v3103 = vmax.f32 %v3087, 0.0
        %v3104 = vmax.f32 %v3088, 0.0
        %v3105 = vmax.f32 %v3089, 0.0
        %3106 = vst [vmem:[%s789] sm:$0xff] %v3090
        %3107 = vst [vmem:[%s789 + $0x8] sm:$0xff] %v3091
        %3108 = vst [vmem:[%s789 + $0x10] sm:$0xff] %v3092
        %3109 = vst [vmem:[%s789 + $0x18] sm:$0xff] %v3093
        %3110 = vst [vmem:[%s789 + $0x20] sm:$0xff] %v3094
        %3111 = vst [vmem:[%s789 + $0x28] sm:$0xff] %v3095
        %3112 = vst [vmem:[%s789 + $0x30] sm:$0xff] %v3096
        %3113 = vst [vmem:[%s789 + $0x38] sm:$0xff] %v3097
        %3114 = vst [vmem:[%s789 + $0x40] sm:$0xff] %v3098
        %3115 = vst [vmem:[%s789 + $0x48] sm:$0xff] %v3099
        %3116 = vst [vmem:[%s789 + $0x50] sm:$0xff] %v3100
        %3117 = vst [vmem:[%s789 + $0x58] sm:$0xff] %v3101
        %3118 = vst [vmem:[%s789 + $0x60] sm:$0xff] %v3102
        %3119 = vst [vmem:[%s789 + $0x68] sm:$0xff] %v3103
        %3120 = vst [vmem:[%s789 + $0x70] sm:$0xff] %v3104
        %3121 = vst [vmem:[%s789 + $0x78] sm:$0xff] %v3105
        %s3122 = sand.u32 %s455, 1
        %s3123 = scalar_lea.sflag [#allocation4], %s3122
        %s3124 = sand.u32 %s455, 1
        %s3125 = smul.addr %s3124, 128
        %s3126 = scalar_lea.vmem [#allocation25], %s3125
        // Predicated region
        $region153: #{tpu_custom_call.1} parent=95 // pred_check
          %p3127 = pneg %p465
        $region154: #{tpu_custom_call.1} parent=95 // pred_check_branch
          %3129 = sbr.rel (%p3127) target = $region156
        $region155: #{tpu_custom_call.1} parent=95 // pred_region
          %s3131 = ssub.s32 2048, 2048
          %3132 = vsyncadd %s3123, %s3131
          %s3133 = smul.addr %s43, 16
          %s3134 = smul.addr %s3133, 128
          %s3135 = scalar_lea.hbm %s19, %s3134
          %s3136 = sshll.u32 %s3126, 4
          %s3137 = int_to_ptr.vmem [resolvable:$true] %s3136
          %3142 = dma.vmem_to_hbm [thread:$0]  %s3137, 2048, %s3135, %s3123, 128, 128, 8
        $region156: #{tpu_custom_call.1} parent=95 // pred_fallthru
          _
      $region96: #{tpu_custom_call.1} parent=5 // pred_fallthru
        _
      %p3143 = scmp.le.s32.totalorder 2, %s38
      // Predicated region
      $region157: #{tpu_custom_call.1} parent=5 // pred_check
        %p3144 = pneg %p3143
      $region158: #{tpu_custom_call.1} parent=5 // pred_check_branch
        %3146 = sbr.rel (%p3144) target = $region160
      $region159: #{tpu_custom_call.1} parent=5 // pred_region
        %s3147 = ssub.s32 %s38, 2
        // Predicated region
        $region161: #{tpu_custom_call.1} parent=159 // pred_check
          %p3148 = pneg %p471
        $region162: #{tpu_custom_call.1} parent=159 // pred_check_branch
          %3150 = sbr.rel (%p3148) target = $region164
        $region163: #{tpu_custom_call.1} parent=159 // pred_region
          %s3151 = sand.u32 %s456, 1
          %s3152 = scalar_lea.sflag [#allocation4], %s3151
          %s3153 = sand.u32 %s456, 1
          %s3154 = smul.addr %s3153, 128
          %s3155 = scalar_lea.vmem [#allocation25], %s3154
          %3156 = dma.done %s3152, 2048
        $region164: #{tpu_custom_call.1} parent=159 // pred_fallthru
          _
      $region160: #{tpu_custom_call.1} parent=5 // pred_fallthru
        _
    $region6: #{tpu_custom_call.1} parent=1 // loop_footer
      %s42 = sadd.s32 1, %s38
    $region7: #{tpu_custom_call.1} parent=1 // loop_footer_branch
      %37 = sbr.rel target = $region3
    $region8: #{tpu_custom_call.1} parent=1 // loop_exit
      _
    %3157 = vsyncpa [#allocation3], 1
    %s3158 = scalar_lea.sflag [#allocation3], 1
    %3159 = vsyncpa %s3158, 1
    %3160 = vsyncpa [#allocation6], 1
    %3161 = vsyncpa [#allocation9], 1
    %3162 = vsyncpa [#allocation12], 1
    %3163 = vsyncpa [#allocation15], 1
    %3164 = vsyncpa [#allocation18], 1
    %3165 = vsyncpa [#allocation21], 1
    %3166 = vsyncpa [#allocation24], 1
    %3167 = vsyncpa [#allocation4], 1
    %s3168 = scalar_lea.sflag [#allocation4], 1
    %3169 = vsyncpa %s3168, 1

</llo_original>
